<compile_context>
chip_gen: v7x
topology: tpu7x:2x2x1
jax: 0.10.0
libtpu: 0.0.40
codegen_flags: <defaults>
</compile_context>

<pallas_src>
import functools

import jax
import jax.numpy as jnp
from jax.experimental import pallas as pl
from jax.experimental.pallas import tpu as pltpu


# ---------------------------------------------------------------------------
# Fused kernel: [conv-folded] LSTM layer 0 -> LSTM layer 1 -> fc1 -> fc2
# ---------------------------------------------------------------------------
def _fused_bilstm_mlp_kernel(*refs, T, B, H, num_layers):
    # ---- unpack refs: inputs..., output, scratch... ------------------------
    x_ref = refs[0]
    layer_refs = refs[1:1 + 3 * num_layers]            # (wih, whh, b) per layer
    idx = 1 + 3 * num_layers
    fc1b_ref = refs[idx]
    fc2b_ref = refs[idx + 1]
    fc1w_hbm = refs[idx + 2]                            # memory_space=ANY (HBM)
    fc2w_hbm = refs[idx + 3]                            # memory_space=ANY (HBM)
    o_ref = refs[idx + 4]
    fc1w_sc, fc2w_sc, dma_sem = refs[idx + 5], refs[idx + 6], refs[idx + 7]

    # ---- start fc weight DMAs; hidden behind the LSTM recurrences ----------
    cp1 = pltpu.make_async_copy(fc1w_hbm, fc1w_sc, dma_sem.at[0])
    cp2 = pltpu.make_async_copy(fc2w_hbm, fc2w_sc, dma_sem.at[1])
    cp1.start()
    cp2.start()

    # Column layout of every (., 8H) gate tile (H-wide blocks):
    #   [i_f i_b | f_f f_b | o_f o_b | g_f g_b]
    # so each gate slice is a (B, 2H) tile aligned with the [h_f | h_b] state.
    col = jax.lax.broadcasted_iota(jnp.int32, (B, 8 * H), 1)
    if (H & (H - 1)) == 0:                              # H power of two
        fwd_gate_mask = (col & H) == 0                  # even H-block -> fwd
    else:
        fwd_gate_mask = (col % (2 * H)) < H
    out_lane_fwd = jax.lax.broadcasted_iota(jnp.int32, (B, 2 * H), 1) < H

    def bilstm_layer(x2d, wih, whh, bias):
        # x2d: (T*B, Din) time-major.  wih: (Din, 8H).  whh: (2H, 8H) block-
        # diagonal (fwd rows -> fwd cols, bwd rows -> bwd cols).  bias: (1, 8H).
        # Hoisted input projection: ONE matmul for all steps & both directions.
        xw = jnp.dot(x2d, wih, preferred_element_type=jnp.float32) + bias

        # Per-step gate inputs (independent of h/c -> off the serial path):
        # fwd columns from time s, bwd columns from time T-1-s.
        xg = []
        for s in range(T):
            xf = xw[s * B:(s + 1) * B, :]
            xb = xw[(T - 1 - s) * B:(T - s) * B, :]
            xg.append(jnp.where(fwd_gate_mask, xf, xb))          # (B, 8H)

        # Serial recurrence; both directions lane-concatenated in h/c=(B, 2H).
        h = jnp.zeros((B, 2 * H), jnp.float32)
        c = jnp.zeros((B, 2 * H), jnp.float32)
        hs = []
        for s in range(T):
            gates = xg[s] + jnp.dot(h, whh,
                                    preferred_element_type=jnp.float32)
            sig = jax.nn.sigmoid(gates[:, 0:6 * H])              # i, f, o
            g_g = jnp.tanh(gates[:, 6 * H:8 * H])                # g
            i_g = sig[:, 0:2 * H]
            f_g = sig[:, 2 * H:4 * H]
            o_g = sig[:, 4 * H:6 * H]
            c = f_g * c + i_g * g_g
            h = o_g * jnp.tanh(c)
            hs.append(h)

        # Time-major layer output (T*B, 2H): fwd half from step t, bwd half
        # (which processed input time T-1-s) from step T-1-t.
        rows = [jnp.where(out_lane_fwd, hs[t], hs[T - 1 - t]) for t in range(T)]
        return jnp.concatenate(rows, axis=0)

    act = x_ref[...]                                    # (T*B, Din0)
    for l in range(num_layers):
        wih_ref, whh_ref, b_ref = layer_refs[3 * l:3 * l + 3]
        act = bilstm_layer(act, wih_ref[...], whh_ref[...], b_ref[...])

    # ---- MLP epilogue (fc1 -> fc2), lane-dense 128-wide output -------------
    cp1.wait()
    cp2.wait()
    hdn = (jnp.dot(act, fc1w_sc[...], preferred_element_type=jnp.float32)
           + fc1b_ref[...])
    o_ref[...] = (jnp.dot(hdn, fc2w_sc[...], preferred_element_type=jnp.float32)
                  + fc2b_ref[...])


# ---------------------------------------------------------------------------
# Forward wrapper (layout plumbing only; weight prep already hoisted)
# ---------------------------------------------------------------------------
def bi_lstm_c_forward(x, prepped, out_size):
    B, T, cin = x.shape
    layers = prepped["layers"]
    num_layers = len(layers)
    H = layers[0]["whh"].shape[0] // 2

    # Time-major, sublane-dense (T*B, Cin) once for the whole fused kernel.
    x_tm = jnp.transpose(x, (1, 0, 2)).reshape(T * B, cin)

    args = [x_tm]
    for lp in layers:
        args += [lp["wih"], lp["whh"], lp["b"]]
    args += [prepped["fc1_b"], prepped["fc2_b_pad"],
             prepped["fc1_w_t"], prepped["fc2_w_pad"]]
    n_vmem_in = len(args) - 2                           # last two stay in HBM

    dout_pad = prepped["fc2_w_pad"].shape[1]
    kern = functools.partial(_fused_bilstm_mlp_kernel,
                             T=T, B=B, H=H, num_layers=num_layers)
    y = pl.pallas_call(
        kern,
        out_shape=jax.ShapeDtypeStruct((T * B, dout_pad), jnp.float32),
        in_specs=(
            [pl.BlockSpec(memory_space=pltpu.MemorySpace.VMEM)] * n_vmem_in
            + [pl.BlockSpec(memory_space=pl.ANY)] * 2
        ),
        out_specs=pl.BlockSpec(memory_space=pltpu.MemorySpace.VMEM),
        scratch_shapes=[
            pltpu.VMEM(prepped["fc1_w_t"].shape, jnp.float32),
            pltpu.VMEM(prepped["fc2_w_pad"].shape, jnp.float32),
            pltpu.SemaphoreType.DMA((2,)),
        ],
    )(*args)

    y = y[:, :out_size].reshape(T, B, out_size)
    return jnp.transpose(y, (1, 0, 2))                  # (B, T, out)


# ---------------------------------------------------------------------------
# One-time weight prep (outside the jitted forward).
# PyTorch gate row order is (i, f, g, o); target column layout is H-wide
# blocks [i_f i_b f_f f_b o_f o_b g_f g_b].
# ---------------------------------------------------------------------------
def _prep_layer(pf, pb, H):
    src = {"i": 0, "f": 1, "g": 2, "o": 3}

    def gate(w, name):
        lo = src[name] * H
        return w[lo:lo + H]

    zeros = jnp.zeros((H, H), jnp.float32)
    wih_cols, whh_top, whh_bot, bias_parts = [], [], [], []
    for name in ("i", "f", "o", "g"):
        wih_cols += [gate(pf["w_ih"], name).T, gate(pb["w_ih"], name).T]
        whh_top += [gate(pf["w_hh"], name).T, zeros]
        whh_bot += [zeros, gate(pb["w_hh"], name).T]
        bias_parts += [gate(pf["b_ih"], name) + gate(pf["b_hh"], name),
                       gate(pb["b_ih"], name) + gate(pb["b_hh"], name)]
    wih = jnp.concatenate(wih_cols, axis=1)                       # (Din, 8H)
    whh = jnp.concatenate([jnp.concatenate(whh_top, axis=1),
                           jnp.concatenate(whh_bot, axis=1)], axis=0)  # (2H,8H)
    b = jnp.concatenate(bias_parts).reshape(1, -1)                # (1, 8H)
    return wih, whh, b


def prep_params(params, out_size):
    H = params["lstm"][0]["fwd"]["w_hh"].shape[1]
    layers = []
    for li, lp in enumerate(params["lstm"]):
        wih, whh, b = _prep_layer(lp["fwd"], lp["bwd"], H)
        if li == 0:
            # Fold the 1x1 conv (pointwise 80->40 linear) into layer 0's
            # input projection: x @ (conv_w.T @ wih) + (conv_b @ wih + b).
            b = b + params["conv_b"][None, :] @ wih
            wih = params["conv_w"].T @ wih
        layers.append({"wih": wih, "whh": whh, "b": b})
    pad = (-out_size) % 128
    return {
        "layers": layers,
        "fc1_w_t": params["fc1_w"].T,                             # (2H, 1024)
        "fc1_b": params["fc1_b"].reshape(1, -1),
        "fc2_w_pad": jnp.pad(params["fc2_w"].T, ((0, 0), (0, pad))),
        "fc2_b_pad": jnp.pad(params["fc2_b"], (0, pad)).reshape(1, -1),
    }


# ---------------------------------------------------------------------------
# Pure-JAX reference (correctness self-check)
# ---------------------------------------------------------------------------
def _ref_lstm_dir(x, w_ih, w_hh, bias):
    B, T, _ = x.shape
    H = w_hh.shape[1]
    h = jnp.zeros((B, H), jnp.float32)
    c = jnp.zeros((B, H), jnp.float32)
    hs = []
    for t in range(T):
        gates = x[:, t] @ w_ih.T + h @ w_hh.T + bias
        i_g = jax.nn.sigmoid(gates[:, :H])
        f_g = jax.nn.sigmoid(gates[:, H:2 * H])
        g_g = jnp.tanh(gates[:, 2 * H:3 * H])
        o_g = jax.nn.sigmoid(gates[:, 3 * H:])
        c = f_g * c + i_g * g_g
        h = o_g * jnp.tanh(c)
        hs.append(h)
    return jnp.stack(hs, axis=1)                                  # (B, T, H)


def ref_forward(x, params, num_layers):
    out = x @ params["conv_w"].T + params["conv_b"]
    for layer in range(num_layers):
        pf = params["lstm"][layer]["fwd"]
        pb = params["lstm"][layer]["bwd"]
        hf = _ref_lstm_dir(out, pf["w_ih"], pf["w_hh"], pf["b_ih"] + pf["b_hh"])
        hb = _ref_lstm_dir(
            out[:, ::-1], pb["w_ih"], pb["w_hh"], pb["b_ih"] + pb["b_hh"]
        )[:, ::-1]
        out = jnp.concatenate([hf, hb], axis=-1)
    out = out @ params["fc1_w"].T + params["fc1_b"]
    out = out @ params["fc2_w"].T + params["fc2_b"]
    return out


# ---------------------------------------------------------------------------
# Deterministic parameter init (PyTorch-style uniform bounds, fixed seed)
# ---------------------------------------------------------------------------
def init_params(key, input_size, hidden_size, num_layers, out_size):
    def uniform(k, shape, bound):
        return jax.random.uniform(k, shape, jnp.float32, -bound, bound)

    keys = iter(jax.random.split(key, 8 + 8 * num_layers * 2))
    H = hidden_size
    params = {}
    kb = (1.0 / 80.0) ** 0.5
    params["conv_w"] = uniform(next(keys), (40, 80), kb)    # Conv1d k=1 weight
    params["conv_b"] = uniform(next(keys), (40,), kb)
    params["lstm"] = []
    lb = (1.0 / H) ** 0.5
    for layer in range(num_layers):
        d_in = input_size if layer == 0 else 2 * H
        layer_p = {}
        for direction in ("fwd", "bwd"):
            layer_p[direction] = {
                "w_ih": uniform(next(keys), (4 * H, d_in), lb),
                "w_hh": uniform(next(keys), (4 * H, H), lb),
                "b_ih": uniform(next(keys), (4 * H,), lb),
                "b_hh": uniform(next(keys), (4 * H,), lb),
            }
        params["lstm"].append(layer_p)
    f1b = (1.0 / (2 * H)) ** 0.5
    params["fc1_w"] = uniform(next(keys), (1024, 2 * H), f1b)
    params["fc1_b"] = uniform(next(keys), (1024,), f1b)
    f2b = (1.0 / 1024.0) ** 0.5
    params["fc2_w"] = uniform(next(keys), (out_size, 1024), f2b)
    params["fc2_b"] = uniform(next(keys), (out_size,), f2b)
    return params


if __name__ == "__main__":
    B, T = 2, 8
    INPUT_SIZE = 40       # LSTM input size (conv1 output channels)
    HIDDEN_SIZE = 32
    NUM_LAYERS = 2
    OUT_SIZE = 10
    IN_CHANNELS = 80      # conv1 in_channels -> x last dim

    root = jax.random.PRNGKey(0)
    kx, kp = jax.random.split(root)
    x = jax.random.normal(kx, (B, T, IN_CHANNELS), jnp.float32)
    params = init_params(kp, INPUT_SIZE, HIDDEN_SIZE, NUM_LAYERS, OUT_SIZE)

    # Weight prep hoisted out of the per-call forward (runs once, eagerly).
    prepped = prep_params(params, OUT_SIZE)

    fwd = jax.jit(functools.partial(bi_lstm_c_forward, out_size=OUT_SIZE))
    out = jax.block_until_ready(fwd(x, prepped))

    ref = ref_forward(x, params, NUM_LAYERS)
    assert out.shape == (B, T, OUT_SIZE), out.shape
    max_err = float(jnp.max(jnp.abs(out - ref)))
    assert jnp.allclose(out, ref, atol=3e-4, rtol=3e-4), max_err
    print("KERNEL_OK")
</pallas_src>

<mosaic_0001>
module attributes {stable_mosaic.version = 11 : i64} {
  func.func @_fused_bilstm_mlp_kernel(%arg0: memref<16x80xf32, #tpu.memory_space<vmem>>, %arg1: memref<80x256xf32, #tpu.memory_space<vmem>>, %arg2: memref<64x256xf32, #tpu.memory_space<vmem>>, %arg3: memref<1x256xf32, #tpu.memory_space<vmem>>, %arg4: memref<64x256xf32, #tpu.memory_space<vmem>>, %arg5: memref<64x256xf32, #tpu.memory_space<vmem>>, %arg6: memref<1x256xf32, #tpu.memory_space<vmem>>, %arg7: memref<1x1024xf32, #tpu.memory_space<vmem>>, %arg8: memref<1x128xf32, #tpu.memory_space<vmem>>, %arg9: memref<64x1024xf32, #tpu.memory_space<any>>, %arg10: memref<1024x128xf32, #tpu.memory_space<any>>, %arg11: memref<16x128xf32, #tpu.memory_space<vmem>>, %arg12: memref<64x1024xf32, #tpu.memory_space<vmem>>, %arg13: memref<1024x128xf32, #tpu.memory_space<vmem>>, %arg14: memref<2x!tpu.dma_semaphore, #tpu.memory_space<semaphore_mem>>) attributes {dimension_semantics = [], scalar_prefetch = 0 : i64, scratch_operands = 3 : i64, tpu.core_type = #tpu.core_type<tc>} {
    %c0_i32 = arith.constant 0 : i32
    %0 = tpu.memref_slice %arg14[%c0_i32] : memref<2x!tpu.dma_semaphore, #tpu.memory_space<semaphore_mem>> -> memref<1x!tpu.dma_semaphore, #tpu.memory_space<semaphore_mem>>
    %1 = tpu.memref_squeeze %0 : memref<1x!tpu.dma_semaphore, #tpu.memory_space<semaphore_mem>> -> memref<!tpu.dma_semaphore, #tpu.memory_space<semaphore_mem>>
    tpu.enqueue_dma source(%arg9 : memref<64x1024xf32, #tpu.memory_space<any>>) target(%arg12 : memref<64x1024xf32, #tpu.memory_space<vmem>>) target_semaphore(%1 : memref<!tpu.dma_semaphore, #tpu.memory_space<semaphore_mem>>)
    %c1_i32 = arith.constant 1 : i32
    %2 = tpu.memref_slice %arg14[%c1_i32] : memref<2x!tpu.dma_semaphore, #tpu.memory_space<semaphore_mem>> -> memref<1x!tpu.dma_semaphore, #tpu.memory_space<semaphore_mem>>
    %3 = tpu.memref_squeeze %2 : memref<1x!tpu.dma_semaphore, #tpu.memory_space<semaphore_mem>> -> memref<!tpu.dma_semaphore, #tpu.memory_space<semaphore_mem>>
    tpu.enqueue_dma source(%arg10 : memref<1024x128xf32, #tpu.memory_space<any>>) target(%arg13 : memref<1024x128xf32, #tpu.memory_space<vmem>>) target_semaphore(%3 : memref<!tpu.dma_semaphore, #tpu.memory_space<semaphore_mem>>)
    %4 = tpu.iota {dimensions = array<i32: 1>} : vector<2x256xi32>
    %c32_i32 = arith.constant 32 : i32
    %5 = vector.broadcast %c32_i32 : i32 to vector<2x256xi32>
    %6 = arith.andi %4, %5 : vector<2x256xi32>
    %c0_i32_0 = arith.constant 0 : i32
    %7 = vector.broadcast %c0_i32_0 : i32 to vector<2x256xi32>
    %8 = arith.cmpi eq, %6, %7 : vector<2x256xi32>
    %9 = tpu.iota {dimensions = array<i32: 1>} : vector<2x64xi32>
    %c32_i32_1 = arith.constant 32 : i32
    %10 = vector.broadcast %c32_i32_1 : i32 to vector<2x64xi32>
    %11 = arith.cmpi slt, %9, %10 : vector<2x64xi32>
    %c0 = arith.constant 0 : index
    %c0_2 = arith.constant 0 : index
    %12 = vector.load %arg0[%c0, %c0_2] : memref<16x80xf32, #tpu.memory_space<vmem>>, vector<16x80xf32>
    %c0_3 = arith.constant 0 : index
    %c0_4 = arith.constant 0 : index
    %13 = vector.load %arg1[%c0_3, %c0_4] : memref<80x256xf32, #tpu.memory_space<vmem>>, vector<80x256xf32>
    %c0_5 = arith.constant 0 : index
    %c0_6 = arith.constant 0 : index
    %14 = vector.load %arg2[%c0_5, %c0_6] : memref<64x256xf32, #tpu.memory_space<vmem>>, vector<64x256xf32>
    %c0_7 = arith.constant 0 : index
    %c0_8 = arith.constant 0 : index
    %15 = vector.load %arg3[%c0_7, %c0_8] : memref<1x256xf32, #tpu.memory_space<vmem>>, vector<1x256xf32>
    %cst = arith.constant dense<0.000000e+00> : vector<16x256xf32>
    %16 = tpu.matmul %12, %13, %cst {dimension_numbers = #tpu.dot_dimension_numbers<[1], [0], [0], [1], [0, 0, 1, 1], [], []>} : vector<16x80xf32>, vector<80x256xf32>, vector<16x256xf32> -> vector<16x256xf32>
    %17 = vector.broadcast %15 : vector<1x256xf32> to vector<16x256xf32>
    %18 = arith.addf %16, %17 : vector<16x256xf32>
    %19 = vector.extract_strided_slice %18 {offsets = [0, 0], sizes = [2, 256], strides = [1, 1]} : vector<16x256xf32> to vector<2x256xf32>
    %20 = vector.extract_strided_slice %18 {offsets = [14, 0], sizes = [2, 256], strides = [1, 1]} : vector<16x256xf32> to vector<2x256xf32>
    %21 = arith.select %8, %19, %20 : vector<2x256xi1>, vector<2x256xf32>
    %22 = vector.extract_strided_slice %18 {offsets = [2, 0], sizes = [2, 256], strides = [1, 1]} : vector<16x256xf32> to vector<2x256xf32>
    %23 = vector.extract_strided_slice %18 {offsets = [12, 0], sizes = [2, 256], strides = [1, 1]} : vector<16x256xf32> to vector<2x256xf32>
    %24 = arith.select %8, %22, %23 : vector<2x256xi1>, vector<2x256xf32>
    %25 = vector.extract_strided_slice %18 {offsets = [4, 0], sizes = [2, 256], strides = [1, 1]} : vector<16x256xf32> to vector<2x256xf32>
    %26 = vector.extract_strided_slice %18 {offsets = [10, 0], sizes = [2, 256], strides = [1, 1]} : vector<16x256xf32> to vector<2x256xf32>
    %27 = arith.select %8, %25, %26 : vector<2x256xi1>, vector<2x256xf32>
    %28 = vector.extract_strided_slice %18 {offsets = [6, 0], sizes = [2, 256], strides = [1, 1]} : vector<16x256xf32> to vector<2x256xf32>
    %29 = vector.extract_strided_slice %18 {offsets = [8, 0], sizes = [2, 256], strides = [1, 1]} : vector<16x256xf32> to vector<2x256xf32>
    %30 = arith.select %8, %28, %29 : vector<2x256xi1>, vector<2x256xf32>
    %31 = vector.extract_strided_slice %18 {offsets = [8, 0], sizes = [2, 256], strides = [1, 1]} : vector<16x256xf32> to vector<2x256xf32>
    %32 = vector.extract_strided_slice %18 {offsets = [6, 0], sizes = [2, 256], strides = [1, 1]} : vector<16x256xf32> to vector<2x256xf32>
    %33 = arith.select %8, %31, %32 : vector<2x256xi1>, vector<2x256xf32>
    %34 = vector.extract_strided_slice %18 {offsets = [10, 0], sizes = [2, 256], strides = [1, 1]} : vector<16x256xf32> to vector<2x256xf32>
    %35 = vector.extract_strided_slice %18 {offsets = [4, 0], sizes = [2, 256], strides = [1, 1]} : vector<16x256xf32> to vector<2x256xf32>
    %36 = arith.select %8, %34, %35 : vector<2x256xi1>, vector<2x256xf32>
    %37 = vector.extract_strided_slice %18 {offsets = [12, 0], sizes = [2, 256], strides = [1, 1]} : vector<16x256xf32> to vector<2x256xf32>
    %38 = vector.extract_strided_slice %18 {offsets = [2, 0], sizes = [2, 256], strides = [1, 1]} : vector<16x256xf32> to vector<2x256xf32>
    %39 = arith.select %8, %37, %38 : vector<2x256xi1>, vector<2x256xf32>
    %40 = vector.extract_strided_slice %18 {offsets = [14, 0], sizes = [2, 256], strides = [1, 1]} : vector<16x256xf32> to vector<2x256xf32>
    %41 = vector.extract_strided_slice %18 {offsets = [0, 0], sizes = [2, 256], strides = [1, 1]} : vector<16x256xf32> to vector<2x256xf32>
    %42 = arith.select %8, %40, %41 : vector<2x256xi1>, vector<2x256xf32>
    %cst_9 = arith.constant 0.000000e+00 : f32
    %43 = vector.broadcast %cst_9 : f32 to vector<2x64xf32>
    %cst_10 = arith.constant 0.000000e+00 : f32
    %44 = vector.broadcast %cst_10 : f32 to vector<2x64xf32>
    %cst_11 = arith.constant dense<0.000000e+00> : vector<2x256xf32>
    %45 = tpu.matmul %43, %14, %cst_11 {dimension_numbers = #tpu.dot_dimension_numbers<[1], [0], [0], [1], [0, 0, 1, 1], [], []>} : vector<2x64xf32>, vector<64x256xf32>, vector<2x256xf32> -> vector<2x256xf32>
    %46 = arith.addf %21, %45 : vector<2x256xf32>
    %47 = vector.extract_strided_slice %46 {offsets = [0, 0], sizes = [2, 192], strides = [1, 1]} : vector<2x256xf32> to vector<2x192xf32>
    %48 = arith.negf %47 : vector<2x192xf32>
    %49 = math.exp %48 : vector<2x192xf32>
    %cst_12 = arith.constant 1.000000e+00 : f32
    %50 = vector.broadcast %cst_12 : f32 to vector<2x192xf32>
    %51 = arith.addf %50, %49 : vector<2x192xf32>
    %52 = arith.divf %50, %51 : vector<2x192xf32>
    %53 = vector.extract_strided_slice %46 {offsets = [0, 192], sizes = [2, 64], strides = [1, 1]} : vector<2x256xf32> to vector<2x64xf32>
    %54 = math.tanh %53 : vector<2x64xf32>
    %55 = vector.extract_strided_slice %52 {offsets = [0, 0], sizes = [2, 64], strides = [1, 1]} : vector<2x192xf32> to vector<2x64xf32>
    %56 = vector.extract_strided_slice %52 {offsets = [0, 64], sizes = [2, 64], strides = [1, 1]} : vector<2x192xf32> to vector<2x64xf32>
    %57 = vector.extract_strided_slice %52 {offsets = [0, 128], sizes = [2, 64], strides = [1, 1]} : vector<2x192xf32> to vector<2x64xf32>
    %58 = arith.mulf %56, %44 : vector<2x64xf32>
    %59 = arith.mulf %55, %54 : vector<2x64xf32>
    %60 = arith.addf %58, %59 : vector<2x64xf32>
    %61 = math.tanh %60 : vector<2x64xf32>
    %62 = arith.mulf %57, %61 : vector<2x64xf32>
    %cst_13 = arith.constant dense<0.000000e+00> : vector<2x256xf32>
    %63 = tpu.matmul %62, %14, %cst_13 {dimension_numbers = #tpu.dot_dimension_numbers<[1], [0], [0], [1], [0, 0, 1, 1], [], []>} : vector<2x64xf32>, vector<64x256xf32>, vector<2x256xf32> -> vector<2x256xf32>
    %64 = arith.addf %24, %63 : vector<2x256xf32>
    %65 = vector.extract_strided_slice %64 {offsets = [0, 0], sizes = [2, 192], strides = [1, 1]} : vector<2x256xf32> to vector<2x192xf32>
    %66 = arith.negf %65 : vector<2x192xf32>
    %67 = math.exp %66 : vector<2x192xf32>
    %cst_14 = arith.constant 1.000000e+00 : f32
    %68 = vector.broadcast %cst_14 : f32 to vector<2x192xf32>
    %69 = arith.addf %68, %67 : vector<2x192xf32>
    %70 = arith.divf %68, %69 : vector<2x192xf32>
    %71 = vector.extract_strided_slice %64 {offsets = [0, 192], sizes = [2, 64], strides = [1, 1]} : vector<2x256xf32> to vector<2x64xf32>
    %72 = math.tanh %71 : vector<2x64xf32>
    %73 = vector.extract_strided_slice %70 {offsets = [0, 0], sizes = [2, 64], strides = [1, 1]} : vector<2x192xf32> to vector<2x64xf32>
    %74 = vector.extract_strided_slice %70 {offsets = [0, 64], sizes = [2, 64], strides = [1, 1]} : vector<2x192xf32> to vector<2x64xf32>
    %75 = vector.extract_strided_slice %70 {offsets = [0, 128], sizes = [2, 64], strides = [1, 1]} : vector<2x192xf32> to vector<2x64xf32>
    %76 = arith.mulf %74, %60 : vector<2x64xf32>
    %77 = arith.mulf %73, %72 : vector<2x64xf32>
    %78 = arith.addf %76, %77 : vector<2x64xf32>
    %79 = math.tanh %78 : vector<2x64xf32>
    %80 = arith.mulf %75, %79 : vector<2x64xf32>
    %cst_15 = arith.constant dense<0.000000e+00> : vector<2x256xf32>
    %81 = tpu.matmul %80, %14, %cst_15 {dimension_numbers = #tpu.dot_dimension_numbers<[1], [0], [0], [1], [0, 0, 1, 1], [], []>} : vector<2x64xf32>, vector<64x256xf32>, vector<2x256xf32> -> vector<2x256xf32>
    %82 = arith.addf %27, %81 : vector<2x256xf32>
    %83 = vector.extract_strided_slice %82 {offsets = [0, 0], sizes = [2, 192], strides = [1, 1]} : vector<2x256xf32> to vector<2x192xf32>
    %84 = arith.negf %83 : vector<2x192xf32>
    %85 = math.exp %84 : vector<2x192xf32>
    %cst_16 = arith.constant 1.000000e+00 : f32
    %86 = vector.broadcast %cst_16 : f32 to vector<2x192xf32>
    %87 = arith.addf %86, %85 : vector<2x192xf32>
    %88 = arith.divf %86, %87 : vector<2x192xf32>
    %89 = vector.extract_strided_slice %82 {offsets = [0, 192], sizes = [2, 64], strides = [1, 1]} : vector<2x256xf32> to vector<2x64xf32>
    %90 = math.tanh %89 : vector<2x64xf32>
    %91 = vector.extract_strided_slice %88 {offsets = [0, 0], sizes = [2, 64], strides = [1, 1]} : vector<2x192xf32> to vector<2x64xf32>
    %92 = vector.extract_strided_slice %88 {offsets = [0, 64], sizes = [2, 64], strides = [1, 1]} : vector<2x192xf32> to vector<2x64xf32>
    %93 = vector.extract_strided_slice %88 {offsets = [0, 128], sizes = [2, 64], strides = [1, 1]} : vector<2x192xf32> to vector<2x64xf32>
    %94 = arith.mulf %92, %78 : vector<2x64xf32>
    %95 = arith.mulf %91, %90 : vector<2x64xf32>
    %96 = arith.addf %94, %95 : vector<2x64xf32>
    %97 = math.tanh %96 : vector<2x64xf32>
    %98 = arith.mulf %93, %97 : vector<2x64xf32>
    %cst_17 = arith.constant dense<0.000000e+00> : vector<2x256xf32>
    %99 = tpu.matmul %98, %14, %cst_17 {dimension_numbers = #tpu.dot_dimension_numbers<[1], [0], [0], [1], [0, 0, 1, 1], [], []>} : vector<2x64xf32>, vector<64x256xf32>, vector<2x256xf32> -> vector<2x256xf32>
    %100 = arith.addf %30, %99 : vector<2x256xf32>
    %101 = vector.extract_strided_slice %100 {offsets = [0, 0], sizes = [2, 192], strides = [1, 1]} : vector<2x256xf32> to vector<2x192xf32>
    %102 = arith.negf %101 : vector<2x192xf32>
    %103 = math.exp %102 : vector<2x192xf32>
    %cst_18 = arith.constant 1.000000e+00 : f32
    %104 = vector.broadcast %cst_18 : f32 to vector<2x192xf32>
    %105 = arith.addf %104, %103 : vector<2x192xf32>
    %106 = arith.divf %104, %105 : vector<2x192xf32>
    %107 = vector.extract_strided_slice %100 {offsets = [0, 192], sizes = [2, 64], strides = [1, 1]} : vector<2x256xf32> to vector<2x64xf32>
    %108 = math.tanh %107 : vector<2x64xf32>
    %109 = vector.extract_strided_slice %106 {offsets = [0, 0], sizes = [2, 64], strides = [1, 1]} : vector<2x192xf32> to vector<2x64xf32>
    %110 = vector.extract_strided_slice %106 {offsets = [0, 64], sizes = [2, 64], strides = [1, 1]} : vector<2x192xf32> to vector<2x64xf32>
    %111 = vector.extract_strided_slice %106 {offsets = [0, 128], sizes = [2, 64], strides = [1, 1]} : vector<2x192xf32> to vector<2x64xf32>
    %112 = arith.mulf %110, %96 : vector<2x64xf32>
    %113 = arith.mulf %109, %108 : vector<2x64xf32>
    %114 = arith.addf %112, %113 : vector<2x64xf32>
    %115 = math.tanh %114 : vector<2x64xf32>
    %116 = arith.mulf %111, %115 : vector<2x64xf32>
    %cst_19 = arith.constant dense<0.000000e+00> : vector<2x256xf32>
    %117 = tpu.matmul %116, %14, %cst_19 {dimension_numbers = #tpu.dot_dimension_numbers<[1], [0], [0], [1], [0, 0, 1, 1], [], []>} : vector<2x64xf32>, vector<64x256xf32>, vector<2x256xf32> -> vector<2x256xf32>
    %118 = arith.addf %33, %117 : vector<2x256xf32>
    %119 = vector.extract_strided_slice %118 {offsets = [0, 0], sizes = [2, 192], strides = [1, 1]} : vector<2x256xf32> to vector<2x192xf32>
    %120 = arith.negf %119 : vector<2x192xf32>
    %121 = math.exp %120 : vector<2x192xf32>
    %cst_20 = arith.constant 1.000000e+00 : f32
    %122 = vector.broadcast %cst_20 : f32 to vector<2x192xf32>
    %123 = arith.addf %122, %121 : vector<2x192xf32>
    %124 = arith.divf %122, %123 : vector<2x192xf32>
    %125 = vector.extract_strided_slice %118 {offsets = [0, 192], sizes = [2, 64], strides = [1, 1]} : vector<2x256xf32> to vector<2x64xf32>
    %126 = math.tanh %125 : vector<2x64xf32>
    %127 = vector.extract_strided_slice %124 {offsets = [0, 0], sizes = [2, 64], strides = [1, 1]} : vector<2x192xf32> to vector<2x64xf32>
    %128 = vector.extract_strided_slice %124 {offsets = [0, 64], sizes = [2, 64], strides = [1, 1]} : vector<2x192xf32> to vector<2x64xf32>
    %129 = vector.extract_strided_slice %124 {offsets = [0, 128], sizes = [2, 64], strides = [1, 1]} : vector<2x192xf32> to vector<2x64xf32>
    %130 = arith.mulf %128, %114 : vector<2x64xf32>
    %131 = arith.mulf %127, %126 : vector<2x64xf32>
    %132 = arith.addf %130, %131 : vector<2x64xf32>
    %133 = math.tanh %132 : vector<2x64xf32>
    %134 = arith.mulf %129, %133 : vector<2x64xf32>
    %cst_21 = arith.constant dense<0.000000e+00> : vector<2x256xf32>
    %135 = tpu.matmul %134, %14, %cst_21 {dimension_numbers = #tpu.dot_dimension_numbers<[1], [0], [0], [1], [0, 0, 1, 1], [], []>} : vector<2x64xf32>, vector<64x256xf32>, vector<2x256xf32> -> vector<2x256xf32>
    %136 = arith.addf %36, %135 : vector<2x256xf32>
    %137 = vector.extract_strided_slice %136 {offsets = [0, 0], sizes = [2, 192], strides = [1, 1]} : vector<2x256xf32> to vector<2x192xf32>
    %138 = arith.negf %137 : vector<2x192xf32>
    %139 = math.exp %138 : vector<2x192xf32>
    %cst_22 = arith.constant 1.000000e+00 : f32
    %140 = vector.broadcast %cst_22 : f32 to vector<2x192xf32>
    %141 = arith.addf %140, %139 : vector<2x192xf32>
    %142 = arith.divf %140, %141 : vector<2x192xf32>
    %143 = vector.extract_strided_slice %136 {offsets = [0, 192], sizes = [2, 64], strides = [1, 1]} : vector<2x256xf32> to vector<2x64xf32>
    %144 = math.tanh %143 : vector<2x64xf32>
    %145 = vector.extract_strided_slice %142 {offsets = [0, 0], sizes = [2, 64], strides = [1, 1]} : vector<2x192xf32> to vector<2x64xf32>
    %146 = vector.extract_strided_slice %142 {offsets = [0, 64], sizes = [2, 64], strides = [1, 1]} : vector<2x192xf32> to vector<2x64xf32>
    %147 = vector.extract_strided_slice %142 {offsets = [0, 128], sizes = [2, 64], strides = [1, 1]} : vector<2x192xf32> to vector<2x64xf32>
    %148 = arith.mulf %146, %132 : vector<2x64xf32>
    %149 = arith.mulf %145, %144 : vector<2x64xf32>
    %150 = arith.addf %148, %149 : vector<2x64xf32>
    %151 = math.tanh %150 : vector<2x64xf32>
    %152 = arith.mulf %147, %151 : vector<2x64xf32>
    %cst_23 = arith.constant dense<0.000000e+00> : vector<2x256xf32>
    %153 = tpu.matmul %152, %14, %cst_23 {dimension_numbers = #tpu.dot_dimension_numbers<[1], [0], [0], [1], [0, 0, 1, 1], [], []>} : vector<2x64xf32>, vector<64x256xf32>, vector<2x256xf32> -> vector<2x256xf32>
    %154 = arith.addf %39, %153 : vector<2x256xf32>
    %155 = vector.extract_strided_slice %154 {offsets = [0, 0], sizes = [2, 192], strides = [1, 1]} : vector<2x256xf32> to vector<2x192xf32>
    %156 = arith.negf %155 : vector<2x192xf32>
    %157 = math.exp %156 : vector<2x192xf32>
    %cst_24 = arith.constant 1.000000e+00 : f32
    %158 = vector.broadcast %cst_24 : f32 to vector<2x192xf32>
    %159 = arith.addf %158, %157 : vector<2x192xf32>
    %160 = arith.divf %158, %159 : vector<2x192xf32>
    %161 = vector.extract_strided_slice %154 {offsets = [0, 192], sizes = [2, 64], strides = [1, 1]} : vector<2x256xf32> to vector<2x64xf32>
    %162 = math.tanh %161 : vector<2x64xf32>
    %163 = vector.extract_strided_slice %160 {offsets = [0, 0], sizes = [2, 64], strides = [1, 1]} : vector<2x192xf32> to vector<2x64xf32>
    %164 = vector.extract_strided_slice %160 {offsets = [0, 64], sizes = [2, 64], strides = [1, 1]} : vector<2x192xf32> to vector<2x64xf32>
    %165 = vector.extract_strided_slice %160 {offsets = [0, 128], sizes = [2, 64], strides = [1, 1]} : vector<2x192xf32> to vector<2x64xf32>
    %166 = arith.mulf %164, %150 : vector<2x64xf32>
    %167 = arith.mulf %163, %162 : vector<2x64xf32>
    %168 = arith.addf %166, %167 : vector<2x64xf32>
    %169 = math.tanh %168 : vector<2x64xf32>
    %170 = arith.mulf %165, %169 : vector<2x64xf32>
    %cst_25 = arith.constant dense<0.000000e+00> : vector<2x256xf32>
    %171 = tpu.matmul %170, %14, %cst_25 {dimension_numbers = #tpu.dot_dimension_numbers<[1], [0], [0], [1], [0, 0, 1, 1], [], []>} : vector<2x64xf32>, vector<64x256xf32>, vector<2x256xf32> -> vector<2x256xf32>
    %172 = arith.addf %42, %171 : vector<2x256xf32>
    %173 = vector.extract_strided_slice %172 {offsets = [0, 0], sizes = [2, 192], strides = [1, 1]} : vector<2x256xf32> to vector<2x192xf32>
    %174 = arith.negf %173 : vector<2x192xf32>
    %175 = math.exp %174 : vector<2x192xf32>
    %cst_26 = arith.constant 1.000000e+00 : f32
    %176 = vector.broadcast %cst_26 : f32 to vector<2x192xf32>
    %177 = arith.addf %176, %175 : vector<2x192xf32>
    %178 = arith.divf %176, %177 : vector<2x192xf32>
    %179 = vector.extract_strided_slice %172 {offsets = [0, 192], sizes = [2, 64], strides = [1, 1]} : vector<2x256xf32> to vector<2x64xf32>
    %180 = math.tanh %179 : vector<2x64xf32>
    %181 = vector.extract_strided_slice %178 {offsets = [0, 0], sizes = [2, 64], strides = [1, 1]} : vector<2x192xf32> to vector<2x64xf32>
    %182 = vector.extract_strided_slice %178 {offsets = [0, 64], sizes = [2, 64], strides = [1, 1]} : vector<2x192xf32> to vector<2x64xf32>
    %183 = vector.extract_strided_slice %178 {offsets = [0, 128], sizes = [2, 64], strides = [1, 1]} : vector<2x192xf32> to vector<2x64xf32>
    %184 = arith.mulf %182, %168 : vector<2x64xf32>
    %185 = arith.mulf %181, %180 : vector<2x64xf32>
    %186 = arith.addf %184, %185 : vector<2x64xf32>
    %187 = math.tanh %186 : vector<2x64xf32>
    %188 = arith.mulf %183, %187 : vector<2x64xf32>
    %189 = arith.select %11, %62, %188 : vector<2x64xi1>, vector<2x64xf32>
    %190 = arith.select %11, %80, %170 : vector<2x64xi1>, vector<2x64xf32>
    %191 = arith.select %11, %98, %152 : vector<2x64xi1>, vector<2x64xf32>
    %192 = arith.select %11, %116, %134 : vector<2x64xi1>, vector<2x64xf32>
    %193 = arith.select %11, %134, %116 : vector<2x64xi1>, vector<2x64xf32>
    %194 = arith.select %11, %152, %98 : vector<2x64xi1>, vector<2x64xf32>
    %195 = arith.select %11, %170, %80 : vector<2x64xi1>, vector<2x64xf32>
    %196 = arith.select %11, %188, %62 : vector<2x64xi1>, vector<2x64xf32>
    %197 = tpu.concatenate %189, %190, %191, %192, %193, %194, %195, %196 in 0 : vector<2x64xf32>, vector<2x64xf32>, vector<2x64xf32>, vector<2x64xf32>, vector<2x64xf32>, vector<2x64xf32>, vector<2x64xf32>, vector<2x64xf32> -> vector<16x64xf32>
    %c0_27 = arith.constant 0 : index
    %c0_28 = arith.constant 0 : index
    %198 = vector.load %arg4[%c0_27, %c0_28] : memref<64x256xf32, #tpu.memory_space<vmem>>, vector<64x256xf32>
    %c0_29 = arith.constant 0 : index
    %c0_30 = arith.constant 0 : index
    %199 = vector.load %arg5[%c0_29, %c0_30] : memref<64x256xf32, #tpu.memory_space<vmem>>, vector<64x256xf32>
    %c0_31 = arith.constant 0 : index
    %c0_32 = arith.constant 0 : index
    %200 = vector.load %arg6[%c0_31, %c0_32] : memref<1x256xf32, #tpu.memory_space<vmem>>, vector<1x256xf32>
    %cst_33 = arith.constant dense<0.000000e+00> : vector<16x256xf32>
    %201 = tpu.matmul %197, %198, %cst_33 {dimension_numbers = #tpu.dot_dimension_numbers<[1], [0], [0], [1], [0, 0, 1, 1], [], []>} : vector<16x64xf32>, vector<64x256xf32>, vector<16x256xf32> -> vector<16x256xf32>
    %202 = vector.broadcast %200 : vector<1x256xf32> to vector<16x256xf32>
    %203 = arith.addf %201, %202 : vector<16x256xf32>
    %204 = vector.extract_strided_slice %203 {offsets = [0, 0], sizes = [2, 256], strides = [1, 1]} : vector<16x256xf32> to vector<2x256xf32>
    %205 = vector.extract_strided_slice %203 {offsets = [14, 0], sizes = [2, 256], strides = [1, 1]} : vector<16x256xf32> to vector<2x256xf32>
    %206 = arith.select %8, %204, %205 : vector<2x256xi1>, vector<2x256xf32>
    %207 = vector.extract_strided_slice %203 {offsets = [2, 0], sizes = [2, 256], strides = [1, 1]} : vector<16x256xf32> to vector<2x256xf32>
    %208 = vector.extract_strided_slice %203 {offsets = [12, 0], sizes = [2, 256], strides = [1, 1]} : vector<16x256xf32> to vector<2x256xf32>
    %209 = arith.select %8, %207, %208 : vector<2x256xi1>, vector<2x256xf32>
    %210 = vector.extract_strided_slice %203 {offsets = [4, 0], sizes = [2, 256], strides = [1, 1]} : vector<16x256xf32> to vector<2x256xf32>
    %211 = vector.extract_strided_slice %203 {offsets = [10, 0], sizes = [2, 256], strides = [1, 1]} : vector<16x256xf32> to vector<2x256xf32>
    %212 = arith.select %8, %210, %211 : vector<2x256xi1>, vector<2x256xf32>
    %213 = vector.extract_strided_slice %203 {offsets = [6, 0], sizes = [2, 256], strides = [1, 1]} : vector<16x256xf32> to vector<2x256xf32>
    %214 = vector.extract_strided_slice %203 {offsets = [8, 0], sizes = [2, 256], strides = [1, 1]} : vector<16x256xf32> to vector<2x256xf32>
    %215 = arith.select %8, %213, %214 : vector<2x256xi1>, vector<2x256xf32>
    %216 = vector.extract_strided_slice %203 {offsets = [8, 0], sizes = [2, 256], strides = [1, 1]} : vector<16x256xf32> to vector<2x256xf32>
    %217 = vector.extract_strided_slice %203 {offsets = [6, 0], sizes = [2, 256], strides = [1, 1]} : vector<16x256xf32> to vector<2x256xf32>
    %218 = arith.select %8, %216, %217 : vector<2x256xi1>, vector<2x256xf32>
    %219 = vector.extract_strided_slice %203 {offsets = [10, 0], sizes = [2, 256], strides = [1, 1]} : vector<16x256xf32> to vector<2x256xf32>
    %220 = vector.extract_strided_slice %203 {offsets = [4, 0], sizes = [2, 256], strides = [1, 1]} : vector<16x256xf32> to vector<2x256xf32>
    %221 = arith.select %8, %219, %220 : vector<2x256xi1>, vector<2x256xf32>
    %222 = vector.extract_strided_slice %203 {offsets = [12, 0], sizes = [2, 256], strides = [1, 1]} : vector<16x256xf32> to vector<2x256xf32>
    %223 = vector.extract_strided_slice %203 {offsets = [2, 0], sizes = [2, 256], strides = [1, 1]} : vector<16x256xf32> to vector<2x256xf32>
    %224 = arith.select %8, %222, %223 : vector<2x256xi1>, vector<2x256xf32>
    %225 = vector.extract_strided_slice %203 {offsets = [14, 0], sizes = [2, 256], strides = [1, 1]} : vector<16x256xf32> to vector<2x256xf32>
    %226 = vector.extract_strided_slice %203 {offsets = [0, 0], sizes = [2, 256], strides = [1, 1]} : vector<16x256xf32> to vector<2x256xf32>
    %227 = arith.select %8, %225, %226 : vector<2x256xi1>, vector<2x256xf32>
    %cst_34 = arith.constant 0.000000e+00 : f32
    %228 = vector.broadcast %cst_34 : f32 to vector<2x64xf32>
    %cst_35 = arith.constant 0.000000e+00 : f32
    %229 = vector.broadcast %cst_35 : f32 to vector<2x64xf32>
    %cst_36 = arith.constant dense<0.000000e+00> : vector<2x256xf32>
    %230 = tpu.matmul %228, %199, %cst_36 {dimension_numbers = #tpu.dot_dimension_numbers<[1], [0], [0], [1], [0, 0, 1, 1], [], []>} : vector<2x64xf32>, vector<64x256xf32>, vector<2x256xf32> -> vector<2x256xf32>
    %231 = arith.addf %206, %230 : vector<2x256xf32>
    %232 = vector.extract_strided_slice %231 {offsets = [0, 0], sizes = [2, 192], strides = [1, 1]} : vector<2x256xf32> to vector<2x192xf32>
    %233 = arith.negf %232 : vector<2x192xf32>
    %234 = math.exp %233 : vector<2x192xf32>
    %cst_37 = arith.constant 1.000000e+00 : f32
    %235 = vector.broadcast %cst_37 : f32 to vector<2x192xf32>
    %236 = arith.addf %235, %234 : vector<2x192xf32>
    %237 = arith.divf %235, %236 : vector<2x192xf32>
    %238 = vector.extract_strided_slice %231 {offsets = [0, 192], sizes = [2, 64], strides = [1, 1]} : vector<2x256xf32> to vector<2x64xf32>
    %239 = math.tanh %238 : vector<2x64xf32>
    %240 = vector.extract_strided_slice %237 {offsets = [0, 0], sizes = [2, 64], strides = [1, 1]} : vector<2x192xf32> to vector<2x64xf32>
    %241 = vector.extract_strided_slice %237 {offsets = [0, 64], sizes = [2, 64], strides = [1, 1]} : vector<2x192xf32> to vector<2x64xf32>
    %242 = vector.extract_strided_slice %237 {offsets = [0, 128], sizes = [2, 64], strides = [1, 1]} : vector<2x192xf32> to vector<2x64xf32>
    %243 = arith.mulf %241, %229 : vector<2x64xf32>
    %244 = arith.mulf %240, %239 : vector<2x64xf32>
    %245 = arith.addf %243, %244 : vector<2x64xf32>
    %246 = math.tanh %245 : vector<2x64xf32>
    %247 = arith.mulf %242, %246 : vector<2x64xf32>
    %cst_38 = arith.constant dense<0.000000e+00> : vector<2x256xf32>
    %248 = tpu.matmul %247, %199, %cst_38 {dimension_numbers = #tpu.dot_dimension_numbers<[1], [0], [0], [1], [0, 0, 1, 1], [], []>} : vector<2x64xf32>, vector<64x256xf32>, vector<2x256xf32> -> vector<2x256xf32>
    %249 = arith.addf %209, %248 : vector<2x256xf32>
    %250 = vector.extract_strided_slice %249 {offsets = [0, 0], sizes = [2, 192], strides = [1, 1]} : vector<2x256xf32> to vector<2x192xf32>
    %251 = arith.negf %250 : vector<2x192xf32>
    %252 = math.exp %251 : vector<2x192xf32>
    %cst_39 = arith.constant 1.000000e+00 : f32
    %253 = vector.broadcast %cst_39 : f32 to vector<2x192xf32>
    %254 = arith.addf %253, %252 : vector<2x192xf32>
    %255 = arith.divf %253, %254 : vector<2x192xf32>
    %256 = vector.extract_strided_slice %249 {offsets = [0, 192], sizes = [2, 64], strides = [1, 1]} : vector<2x256xf32> to vector<2x64xf32>
    %257 = math.tanh %256 : vector<2x64xf32>
    %258 = vector.extract_strided_slice %255 {offsets = [0, 0], sizes = [2, 64], strides = [1, 1]} : vector<2x192xf32> to vector<2x64xf32>
    %259 = vector.extract_strided_slice %255 {offsets = [0, 64], sizes = [2, 64], strides = [1, 1]} : vector<2x192xf32> to vector<2x64xf32>
    %260 = vector.extract_strided_slice %255 {offsets = [0, 128], sizes = [2, 64], strides = [1, 1]} : vector<2x192xf32> to vector<2x64xf32>
    %261 = arith.mulf %259, %245 : vector<2x64xf32>
    %262 = arith.mulf %258, %257 : vector<2x64xf32>
    %263 = arith.addf %261, %262 : vector<2x64xf32>
    %264 = math.tanh %263 : vector<2x64xf32>
    %265 = arith.mulf %260, %264 : vector<2x64xf32>
    %cst_40 = arith.constant dense<0.000000e+00> : vector<2x256xf32>
    %266 = tpu.matmul %265, %199, %cst_40 {dimension_numbers = #tpu.dot_dimension_numbers<[1], [0], [0], [1], [0, 0, 1, 1], [], []>} : vector<2x64xf32>, vector<64x256xf32>, vector<2x256xf32> -> vector<2x256xf32>
    %267 = arith.addf %212, %266 : vector<2x256xf32>
    %268 = vector.extract_strided_slice %267 {offsets = [0, 0], sizes = [2, 192], strides = [1, 1]} : vector<2x256xf32> to vector<2x192xf32>
    %269 = arith.negf %268 : vector<2x192xf32>
    %270 = math.exp %269 : vector<2x192xf32>
    %cst_41 = arith.constant 1.000000e+00 : f32
    %271 = vector.broadcast %cst_41 : f32 to vector<2x192xf32>
    %272 = arith.addf %271, %270 : vector<2x192xf32>
    %273 = arith.divf %271, %272 : vector<2x192xf32>
    %274 = vector.extract_strided_slice %267 {offsets = [0, 192], sizes = [2, 64], strides = [1, 1]} : vector<2x256xf32> to vector<2x64xf32>
    %275 = math.tanh %274 : vector<2x64xf32>
    %276 = vector.extract_strided_slice %273 {offsets = [0, 0], sizes = [2, 64], strides = [1, 1]} : vector<2x192xf32> to vector<2x64xf32>
    %277 = vector.extract_strided_slice %273 {offsets = [0, 64], sizes = [2, 64], strides = [1, 1]} : vector<2x192xf32> to vector<2x64xf32>
    %278 = vector.extract_strided_slice %273 {offsets = [0, 128], sizes = [2, 64], strides = [1, 1]} : vector<2x192xf32> to vector<2x64xf32>
    %279 = arith.mulf %277, %263 : vector<2x64xf32>
    %280 = arith.mulf %276, %275 : vector<2x64xf32>
    %281 = arith.addf %279, %280 : vector<2x64xf32>
    %282 = math.tanh %281 : vector<2x64xf32>
    %283 = arith.mulf %278, %282 : vector<2x64xf32>
    %cst_42 = arith.constant dense<0.000000e+00> : vector<2x256xf32>
    %284 = tpu.matmul %283, %199, %cst_42 {dimension_numbers = #tpu.dot_dimension_numbers<[1], [0], [0], [1], [0, 0, 1, 1], [], []>} : vector<2x64xf32>, vector<64x256xf32>, vector<2x256xf32> -> vector<2x256xf32>
    %285 = arith.addf %215, %284 : vector<2x256xf32>
    %286 = vector.extract_strided_slice %285 {offsets = [0, 0], sizes = [2, 192], strides = [1, 1]} : vector<2x256xf32> to vector<2x192xf32>
    %287 = arith.negf %286 : vector<2x192xf32>
    %288 = math.exp %287 : vector<2x192xf32>
    %cst_43 = arith.constant 1.000000e+00 : f32
    %289 = vector.broadcast %cst_43 : f32 to vector<2x192xf32>
    %290 = arith.addf %289, %288 : vector<2x192xf32>
    %291 = arith.divf %289, %290 : vector<2x192xf32>
    %292 = vector.extract_strided_slice %285 {offsets = [0, 192], sizes = [2, 64], strides = [1, 1]} : vector<2x256xf32> to vector<2x64xf32>
    %293 = math.tanh %292 : vector<2x64xf32>
    %294 = vector.extract_strided_slice %291 {offsets = [0, 0], sizes = [2, 64], strides = [1, 1]} : vector<2x192xf32> to vector<2x64xf32>
    %295 = vector.extract_strided_slice %291 {offsets = [0, 64], sizes = [2, 64], strides = [1, 1]} : vector<2x192xf32> to vector<2x64xf32>
    %296 = vector.extract_strided_slice %291 {offsets = [0, 128], sizes = [2, 64], strides = [1, 1]} : vector<2x192xf32> to vector<2x64xf32>
    %297 = arith.mulf %295, %281 : vector<2x64xf32>
    %298 = arith.mulf %294, %293 : vector<2x64xf32>
    %299 = arith.addf %297, %298 : vector<2x64xf32>
    %300 = math.tanh %299 : vector<2x64xf32>
    %301 = arith.mulf %296, %300 : vector<2x64xf32>
    %cst_44 = arith.constant dense<0.000000e+00> : vector<2x256xf32>
    %302 = tpu.matmul %301, %199, %cst_44 {dimension_numbers = #tpu.dot_dimension_numbers<[1], [0], [0], [1], [0, 0, 1, 1], [], []>} : vector<2x64xf32>, vector<64x256xf32>, vector<2x256xf32> -> vector<2x256xf32>
    %303 = arith.addf %218, %302 : vector<2x256xf32>
    %304 = vector.extract_strided_slice %303 {offsets = [0, 0], sizes = [2, 192], strides = [1, 1]} : vector<2x256xf32> to vector<2x192xf32>
    %305 = arith.negf %304 : vector<2x192xf32>
    %306 = math.exp %305 : vector<2x192xf32>
    %cst_45 = arith.constant 1.000000e+00 : f32
    %307 = vector.broadcast %cst_45 : f32 to vector<2x192xf32>
    %308 = arith.addf %307, %306 : vector<2x192xf32>
    %309 = arith.divf %307, %308 : vector<2x192xf32>
    %310 = vector.extract_strided_slice %303 {offsets = [0, 192], sizes = [2, 64], strides = [1, 1]} : vector<2x256xf32> to vector<2x64xf32>
    %311 = math.tanh %310 : vector<2x64xf32>
    %312 = vector.extract_strided_slice %309 {offsets = [0, 0], sizes = [2, 64], strides = [1, 1]} : vector<2x192xf32> to vector<2x64xf32>
    %313 = vector.extract_strided_slice %309 {offsets = [0, 64], sizes = [2, 64], strides = [1, 1]} : vector<2x192xf32> to vector<2x64xf32>
    %314 = vector.extract_strided_slice %309 {offsets = [0, 128], sizes = [2, 64], strides = [1, 1]} : vector<2x192xf32> to vector<2x64xf32>
    %315 = arith.mulf %313, %299 : vector<2x64xf32>
    %316 = arith.mulf %312, %311 : vector<2x64xf32>
    %317 = arith.addf %315, %316 : vector<2x64xf32>
    %318 = math.tanh %317 : vector<2x64xf32>
    %319 = arith.mulf %314, %318 : vector<2x64xf32>
    %cst_46 = arith.constant dense<0.000000e+00> : vector<2x256xf32>
    %320 = tpu.matmul %319, %199, %cst_46 {dimension_numbers = #tpu.dot_dimension_numbers<[1], [0], [0], [1], [0, 0, 1, 1], [], []>} : vector<2x64xf32>, vector<64x256xf32>, vector<2x256xf32> -> vector<2x256xf32>
    %321 = arith.addf %221, %320 : vector<2x256xf32>
    %322 = vector.extract_strided_slice %321 {offsets = [0, 0], sizes = [2, 192], strides = [1, 1]} : vector<2x256xf32> to vector<2x192xf32>
    %323 = arith.negf %322 : vector<2x192xf32>
    %324 = math.exp %323 : vector<2x192xf32>
    %cst_47 = arith.constant 1.000000e+00 : f32
    %325 = vector.broadcast %cst_47 : f32 to vector<2x192xf32>
    %326 = arith.addf %325, %324 : vector<2x192xf32>
    %327 = arith.divf %325, %326 : vector<2x192xf32>
    %328 = vector.extract_strided_slice %321 {offsets = [0, 192], sizes = [2, 64], strides = [1, 1]} : vector<2x256xf32> to vector<2x64xf32>
    %329 = math.tanh %328 : vector<2x64xf32>
    %330 = vector.extract_strided_slice %327 {offsets = [0, 0], sizes = [2, 64], strides = [1, 1]} : vector<2x192xf32> to vector<2x64xf32>
    %331 = vector.extract_strided_slice %327 {offsets = [0, 64], sizes = [2, 64], strides = [1, 1]} : vector<2x192xf32> to vector<2x64xf32>
    %332 = vector.extract_strided_slice %327 {offsets = [0, 128], sizes = [2, 64], strides = [1, 1]} : vector<2x192xf32> to vector<2x64xf32>
    %333 = arith.mulf %331, %317 : vector<2x64xf32>
    %334 = arith.mulf %330, %329 : vector<2x64xf32>
    %335 = arith.addf %333, %334 : vector<2x64xf32>
    %336 = math.tanh %335 : vector<2x64xf32>
    %337 = arith.mulf %332, %336 : vector<2x64xf32>
    %cst_48 = arith.constant dense<0.000000e+00> : vector<2x256xf32>
    %338 = tpu.matmul %337, %199, %cst_48 {dimension_numbers = #tpu.dot_dimension_numbers<[1], [0], [0], [1], [0, 0, 1, 1], [], []>} : vector<2x64xf32>, vector<64x256xf32>, vector<2x256xf32> -> vector<2x256xf32>
    %339 = arith.addf %224, %338 : vector<2x256xf32>
    %340 = vector.extract_strided_slice %339 {offsets = [0, 0], sizes = [2, 192], strides = [1, 1]} : vector<2x256xf32> to vector<2x192xf32>
    %341 = arith.negf %340 : vector<2x192xf32>
    %342 = math.exp %341 : vector<2x192xf32>
    %cst_49 = arith.constant 1.000000e+00 : f32
    %343 = vector.broadcast %cst_49 : f32 to vector<2x192xf32>
    %344 = arith.addf %343, %342 : vector<2x192xf32>
    %345 = arith.divf %343, %344 : vector<2x192xf32>
    %346 = vector.extract_strided_slice %339 {offsets = [0, 192], sizes = [2, 64], strides = [1, 1]} : vector<2x256xf32> to vector<2x64xf32>
    %347 = math.tanh %346 : vector<2x64xf32>
    %348 = vector.extract_strided_slice %345 {offsets = [0, 0], sizes = [2, 64], strides = [1, 1]} : vector<2x192xf32> to vector<2x64xf32>
    %349 = vector.extract_strided_slice %345 {offsets = [0, 64], sizes = [2, 64], strides = [1, 1]} : vector<2x192xf32> to vector<2x64xf32>
    %350 = vector.extract_strided_slice %345 {offsets = [0, 128], sizes = [2, 64], strides = [1, 1]} : vector<2x192xf32> to vector<2x64xf32>
    %351 = arith.mulf %349, %335 : vector<2x64xf32>
    %352 = arith.mulf %348, %347 : vector<2x64xf32>
    %353 = arith.addf %351, %352 : vector<2x64xf32>
    %354 = math.tanh %353 : vector<2x64xf32>
    %355 = arith.mulf %350, %354 : vector<2x64xf32>
    %cst_50 = arith.constant dense<0.000000e+00> : vector<2x256xf32>
    %356 = tpu.matmul %355, %199, %cst_50 {dimension_numbers = #tpu.dot_dimension_numbers<[1], [0], [0], [1], [0, 0, 1, 1], [], []>} : vector<2x64xf32>, vector<64x256xf32>, vector<2x256xf32> -> vector<2x256xf32>
    %357 = arith.addf %227, %356 : vector<2x256xf32>
    %358 = vector.extract_strided_slice %357 {offsets = [0, 0], sizes = [2, 192], strides = [1, 1]} : vector<2x256xf32> to vector<2x192xf32>
    %359 = arith.negf %358 : vector<2x192xf32>
    %360 = math.exp %359 : vector<2x192xf32>
    %cst_51 = arith.constant 1.000000e+00 : f32
    %361 = vector.broadcast %cst_51 : f32 to vector<2x192xf32>
    %362 = arith.addf %361, %360 : vector<2x192xf32>
    %363 = arith.divf %361, %362 : vector<2x192xf32>
    %364 = vector.extract_strided_slice %357 {offsets = [0, 192], sizes = [2, 64], strides = [1, 1]} : vector<2x256xf32> to vector<2x64xf32>
    %365 = math.tanh %364 : vector<2x64xf32>
    %366 = vector.extract_strided_slice %363 {offsets = [0, 0], sizes = [2, 64], strides = [1, 1]} : vector<2x192xf32> to vector<2x64xf32>
    %367 = vector.extract_strided_slice %363 {offsets = [0, 64], sizes = [2, 64], strides = [1, 1]} : vector<2x192xf32> to vector<2x64xf32>
    %368 = vector.extract_strided_slice %363 {offsets = [0, 128], sizes = [2, 64], strides = [1, 1]} : vector<2x192xf32> to vector<2x64xf32>
    %369 = arith.mulf %367, %353 : vector<2x64xf32>
    %370 = arith.mulf %366, %365 : vector<2x64xf32>
    %371 = arith.addf %369, %370 : vector<2x64xf32>
    %372 = math.tanh %371 : vector<2x64xf32>
    %373 = arith.mulf %368, %372 : vector<2x64xf32>
    %374 = arith.select %11, %247, %373 : vector<2x64xi1>, vector<2x64xf32>
    %375 = arith.select %11, %265, %355 : vector<2x64xi1>, vector<2x64xf32>
    %376 = arith.select %11, %283, %337 : vector<2x64xi1>, vector<2x64xf32>
    %377 = arith.select %11, %301, %319 : vector<2x64xi1>, vector<2x64xf32>
    %378 = arith.select %11, %319, %301 : vector<2x64xi1>, vector<2x64xf32>
    %379 = arith.select %11, %337, %283 : vector<2x64xi1>, vector<2x64xf32>
    %380 = arith.select %11, %355, %265 : vector<2x64xi1>, vector<2x64xf32>
    %381 = arith.select %11, %373, %247 : vector<2x64xi1>, vector<2x64xf32>
    %382 = tpu.concatenate %374, %375, %376, %377, %378, %379, %380, %381 in 0 : vector<2x64xf32>, vector<2x64xf32>, vector<2x64xf32>, vector<2x64xf32>, vector<2x64xf32>, vector<2x64xf32>, vector<2x64xf32>, vector<2x64xf32> -> vector<16x64xf32>
    %c0_i32_52 = arith.constant 0 : i32
    %383 = tpu.memref_slice %arg14[%c0_i32_52] : memref<2x!tpu.dma_semaphore, #tpu.memory_space<semaphore_mem>> -> memref<1x!tpu.dma_semaphore, #tpu.memory_space<semaphore_mem>>
    %384 = tpu.memref_squeeze %383 : memref<1x!tpu.dma_semaphore, #tpu.memory_space<semaphore_mem>> -> memref<!tpu.dma_semaphore, #tpu.memory_space<semaphore_mem>>
    tpu.wait_dma2 semaphore(%384 : memref<!tpu.dma_semaphore, #tpu.memory_space<semaphore_mem>>) src(%arg9 : memref<64x1024xf32, #tpu.memory_space<any>>) dst(%arg12 : memref<64x1024xf32, #tpu.memory_space<vmem>>)
    %c1_i32_53 = arith.constant 1 : i32
    %385 = tpu.memref_slice %arg14[%c1_i32_53] : memref<2x!tpu.dma_semaphore, #tpu.memory_space<semaphore_mem>> -> memref<1x!tpu.dma_semaphore, #tpu.memory_space<semaphore_mem>>
    %386 = tpu.memref_squeeze %385 : memref<1x!tpu.dma_semaphore, #tpu.memory_space<semaphore_mem>> -> memref<!tpu.dma_semaphore, #tpu.memory_space<semaphore_mem>>
    tpu.wait_dma2 semaphore(%386 : memref<!tpu.dma_semaphore, #tpu.memory_space<semaphore_mem>>) src(%arg10 : memref<1024x128xf32, #tpu.memory_space<any>>) dst(%arg13 : memref<1024x128xf32, #tpu.memory_space<vmem>>)
    %c0_54 = arith.constant 0 : index
    %c0_55 = arith.constant 0 : index
    %387 = vector.load %arg12[%c0_54, %c0_55] : memref<64x1024xf32, #tpu.memory_space<vmem>>, vector<64x1024xf32>
    %cst_56 = arith.constant dense<0.000000e+00> : vector<16x1024xf32>
    %388 = tpu.matmul %382, %387, %cst_56 {dimension_numbers = #tpu.dot_dimension_numbers<[1], [0], [0], [1], [0, 0, 1, 1], [], []>} : vector<16x64xf32>, vector<64x1024xf32>, vector<16x1024xf32> -> vector<16x1024xf32>
    %c0_57 = arith.constant 0 : index
    %c0_58 = arith.constant 0 : index
    %389 = vector.load %arg7[%c0_57, %c0_58] : memref<1x1024xf32, #tpu.memory_space<vmem>>, vector<1x1024xf32>
    %390 = vector.broadcast %389 : vector<1x1024xf32> to vector<16x1024xf32>
    %391 = arith.addf %388, %390 : vector<16x1024xf32>
    %c0_59 = arith.constant 0 : index
    %c0_60 = arith.constant 0 : index
    %392 = vector.load %arg13[%c0_59, %c0_60] : memref<1024x128xf32, #tpu.memory_space<vmem>>, vector<1024x128xf32>
    %cst_61 = arith.constant dense<0.000000e+00> : vector<16x128xf32>
    %393 = tpu.matmul %391, %392, %cst_61 {dimension_numbers = #tpu.dot_dimension_numbers<[1], [0], [0], [1], [0, 0, 1, 1], [], []>} : vector<16x1024xf32>, vector<1024x128xf32>, vector<16x128xf32> -> vector<16x128xf32>
    %c0_62 = arith.constant 0 : index
    %c0_63 = arith.constant 0 : index
    %394 = vector.load %arg8[%c0_62, %c0_63] : memref<1x128xf32, #tpu.memory_space<vmem>>, vector<1x128xf32>
    %395 = vector.broadcast %394 : vector<1x128xf32> to vector<16x128xf32>
    %396 = arith.addf %393, %395 : vector<16x128xf32>
    %c0_64 = arith.constant 0 : index
    %c0_65 = arith.constant 0 : index
    %397 = vector.load %arg11[%c0_64, %c0_65] : memref<16x128xf32, #tpu.memory_space<vmem>>, vector<16x128xf32>
    tpu.vector_store %arg11[%c0_64, %c0_65], %396 {strides = array<i32>} : memref<16x128xf32, #tpu.memory_space<vmem>>, vector<16x128xf32>,
    return
  }
}

</mosaic_0001>

<llo_original>
// kernel: bi_lstm_c_forward.1
$region0: #{bi_lstm_c_forward.1}
  #allocation0 [shape = 'u32[]', space=smem, size = 0x4, offset = 0x4, fixed_abs, tag = 'smem constant byte address 0x4 - core index']
  #allocation1 [shape = 'u32[144,128]{1,0:T(1,128)}', space=vmem, size = 0x12000, scoped, tag = 'internal scratch']
  #allocation2 [shape = 'f32[64,1024]{1,0:T(8,128)}', space=vmem, size = 0x40000, scoped, tag = 'scratch operand']
  #allocation3 [shape = 'f32[1024,128]{1,0:T(8,128)}', space=vmem, size = 0x80000, scoped, tag = 'scratch operand']
  #allocation4 [shape = 's32[2]{0}', space=sflag, size = 0x8, scoped, tag = 'scratch operand']
  #allocation12 [shape = 's32[]', space=sflag, size = 0x4, offset = 0, fixed_abs, tag = 'sflag constant byte address 0x0 - dummy sync flag']
  #allocation13 [shape = 's32[]', space=sflag, size = 0x4, offset = 0, fixed_abs, tag = 'sflag constant byte address 0x0 - dummy sync flag']
  #allocation14 [shape = 'u32[]', space=smem, size = 0x4, offset = 0x44, fixed_abs, tag = 'smem constant byte address 0x44 - assertion arg 0']
  #allocation15 [shape = 'u32[]', space=smem, size = 0x4, offset = 0x48, fixed_abs, tag = 'smem constant byte address 0x48 - assertion arg 1']
  #allocation16 [shape = 's32[]', space=sflag, size = 0x4, offset = 0, fixed_abs, tag = 'sflag constant byte address 0x0 - dummy sync flag']
  #allocation17 [shape = 's32[]', space=sflag, size = 0x4, offset = 0, fixed_abs, tag = 'sflag constant byte address 0x0 - dummy sync flag']
  %s0 = inlined_call_operand.vmem [shape: f32[16,80], index: 0, kind: input, shape index: {}]
  %s1 = inlined_call_operand.hbm [shape: f32[80,256], index: 1, kind: input, shape index: {}]
  %s2 = inlined_call_operand.hbm [shape: f32[64,256], index: 2, kind: input, shape index: {}]
  %s3 = inlined_call_operand.vmem [shape: f32[1,256], index: 3, kind: input, shape index: {}]
  %s4 = inlined_call_operand.hbm [shape: f32[64,256], index: 4, kind: input, shape index: {}]
  %s5 = inlined_call_operand.hbm [shape: f32[64,256], index: 5, kind: input, shape index: {}]
  %s6 = inlined_call_operand.vmem [shape: f32[1,256], index: 6, kind: input, shape index: {}]
  %s7 = inlined_call_operand.vmem [shape: f32[1,1024], index: 7, kind: input, shape index: {}]
  %s8 = inlined_call_operand.vmem [shape: f32[1,128], index: 8, kind: input, shape index: {}]
  %s9 = inlined_call_operand.hbm [shape: f32[64,1024], index: 9, kind: input, shape index: {}]
  %s10 = inlined_call_operand.hbm [shape: f32[1024,128], index: 10, kind: input, shape index: {}]
  %s11 = inlined_call_operand.vmem [shape: f32[16,128], index: 11, kind: output, shape index: {}]
  %s12 = sld [smem:[#allocation0]]
  $region70: #{bi_lstm_c_forward.1} parent=0
    _
  %s14 = ssub.s32 1, %s12
  %s15 = scalar_select 0, %s14, %s12
  $region1: #{bi_lstm_c_forward.1} parent=0
    #allocation5 [shape = 'u8[81920]{0}', space=vmem, size = 0x14000, scoped, tag = 'input window, operand 1, single buffered']
    #allocation6 [shape = 's32[1]{0}', space=sflag, size = 0x4, scoped, tag = 'scoped memory for bi_lstm_c_forward.1']
    #allocation7 [shape = 'u8[65536]{0}', space=vmem, size = 0x10000, scoped, tag = 'input window, operand 2, single buffered']
    #allocation8 [shape = 's32[1]{0}', space=sflag, size = 0x4, scoped, tag = 'scoped memory for bi_lstm_c_forward.1']
    #allocation9 [shape = 'u8[65536]{0}', space=vmem, size = 0x10000, scoped, tag = 'input window, operand 4, single buffered']
    #allocation10 [shape = 'u8[65536]{0}', space=vmem, size = 0x10000, scoped, tag = 'input window, operand 5, single buffered']
    #allocation11 [shape = 's32[1]{0}', space=sflag, size = 0x4, scoped, tag = 'scoped memory for bi_lstm_c_forward.1']
    %16 = vsyncpa [#allocation6], 0
    %17 = vsyncpa [#allocation8], 0
    %18 = vsyncpa [#allocation11], 0
    // Predicated region
    $region2: #{bi_lstm_c_forward.1} parent=1 // pred_check
      _
    $region3: #{bi_lstm_c_forward.1} parent=1 // pred_check_branch
      %20 = sbr.rel (0) target = $region5
    $region4: #{bi_lstm_c_forward.1} parent=1 // pred_region
      _
    $region5: #{bi_lstm_c_forward.1} parent=1 // pred_fallthru
      _
    // Predicated region
    $region6: #{bi_lstm_c_forward.1} parent=1 // pred_check
      _
    $region7: #{bi_lstm_c_forward.1} parent=1 // pred_check_branch
      %22 = sbr.rel (0) target = $region9
    $region8: #{bi_lstm_c_forward.1} parent=1 // pred_region
      %s24 = ssub.s32 2560, 2560
      %25 = vsyncadd [#allocation6], %s24
      %s26 = sshll.u32 [#allocation5], 4
      %s27 = int_to_ptr.vmem [resolvable:$true] %s26
      %32 = dma.hbm_to_vmem [thread:$0]  %s1, 2560, %s27, [#allocation6], 256, 256, 16
    $region9: #{bi_lstm_c_forward.1} parent=1 // pred_fallthru
      _
    // Predicated region
    $region10: #{bi_lstm_c_forward.1} parent=1 // pred_check
      _
    $region11: #{bi_lstm_c_forward.1} parent=1 // pred_check_branch
      %34 = sbr.rel (0) target = $region13
    $region12: #{bi_lstm_c_forward.1} parent=1 // pred_region
      %s36 = ssub.s32 2048, 2048
      %37 = vsyncadd [#allocation8], %s36
      %s38 = sshll.u32 [#allocation7], 4
      %s39 = int_to_ptr.vmem [resolvable:$true] %s38
      %44 = dma.hbm_to_vmem [thread:$0]  %s2, 2048, %s39, [#allocation8], 256, 256, 16
    $region13: #{bi_lstm_c_forward.1} parent=1 // pred_fallthru
      _
    // Predicated region
    $region14: #{bi_lstm_c_forward.1} parent=1 // pred_check
      _
    $region15: #{bi_lstm_c_forward.1} parent=1 // pred_check_branch
      %46 = sbr.rel (0) target = $region17
    $region16: #{bi_lstm_c_forward.1} parent=1 // pred_region
      _
    $region17: #{bi_lstm_c_forward.1} parent=1 // pred_fallthru
      _
    // Predicated region
    $region18: #{bi_lstm_c_forward.1} parent=1 // pred_check
      _
    $region19: #{bi_lstm_c_forward.1} parent=1 // pred_check_branch
      %48 = sbr.rel (0) target = $region21
    $region20: #{bi_lstm_c_forward.1} parent=1 // pred_region
      %s50 = ssub.s32 2048, 2048
      %51 = vsyncadd [#allocation8], %s50
      %s52 = sshll.u32 [#allocation9], 4
      %s53 = int_to_ptr.vmem [resolvable:$true] %s52
      %58 = dma.hbm_to_vmem [thread:$0]  %s4, 2048, %s53, [#allocation8], 256, 256, 16
    $region21: #{bi_lstm_c_forward.1} parent=1 // pred_fallthru
      _
    // Predicated region
    $region22: #{bi_lstm_c_forward.1} parent=1 // pred_check
      _
    $region23: #{bi_lstm_c_forward.1} parent=1 // pred_check_branch
      %60 = sbr.rel (0) target = $region25
    $region24: #{bi_lstm_c_forward.1} parent=1 // pred_region
      %s62 = ssub.s32 2048, 2048
      %63 = vsyncadd [#allocation11], %s62
      %s64 = sshll.u32 [#allocation10], 4
      %s65 = int_to_ptr.vmem [resolvable:$true] %s64
      %70 = dma.hbm_to_vmem [thread:$0]  %s5, 2048, %s65, [#allocation11], 256, 256, 16
    $region25: #{bi_lstm_c_forward.1} parent=1 // pred_fallthru
      _
    // Predicated region
    $region26: #{bi_lstm_c_forward.1} parent=1 // pred_check
      _
    $region27: #{bi_lstm_c_forward.1} parent=1 // pred_check_branch
      %72 = sbr.rel (0) target = $region29
    $region28: #{bi_lstm_c_forward.1} parent=1 // pred_region
      _
    $region29: #{bi_lstm_c_forward.1} parent=1 // pred_fallthru
      _
    // Predicated region
    $region30: #{bi_lstm_c_forward.1} parent=1 // pred_check
      _
    $region31: #{bi_lstm_c_forward.1} parent=1 // pred_check_branch
      %74 = sbr.rel (0) target = $region33
    $region32: #{bi_lstm_c_forward.1} parent=1 // pred_region
      _
    $region33: #{bi_lstm_c_forward.1} parent=1 // pred_fallthru
      _
    // Predicated region
    $region34: #{bi_lstm_c_forward.1} parent=1 // pred_check
      _
    $region35: #{bi_lstm_c_forward.1} parent=1 // pred_check_branch
      %76 = sbr.rel (0) target = $region37
    $region36: #{bi_lstm_c_forward.1} parent=1 // pred_region
      _
    $region37: #{bi_lstm_c_forward.1} parent=1 // pred_fallthru
      _
    // Predicated region
    $region38: #{bi_lstm_c_forward.1} parent=1 // pred_check
      _
    $region39: #{bi_lstm_c_forward.1} parent=1 // pred_check_branch
      %78 = sbr.rel (0) target = $region41
    $region40: #{bi_lstm_c_forward.1} parent=1 // pred_region
      %79 = dma.done [#allocation6], 2560
    $region41: #{bi_lstm_c_forward.1} parent=1 // pred_fallthru
      _
    // Predicated region
    $region42: #{bi_lstm_c_forward.1} parent=1 // pred_check
      _
    $region43: #{bi_lstm_c_forward.1} parent=1 // pred_check_branch
      %81 = sbr.rel (0) target = $region45
    $region44: #{bi_lstm_c_forward.1} parent=1 // pred_region
      %82 = dma.done [#allocation8], 2048
    $region45: #{bi_lstm_c_forward.1} parent=1 // pred_fallthru
      _
    // Predicated region
    $region46: #{bi_lstm_c_forward.1} parent=1 // pred_check
      _
    $region47: #{bi_lstm_c_forward.1} parent=1 // pred_check_branch
      %84 = sbr.rel (0) target = $region49
    $region48: #{bi_lstm_c_forward.1} parent=1 // pred_region
      %85 = dma.done [#allocation8], 2048
    $region49: #{bi_lstm_c_forward.1} parent=1 // pred_fallthru
      _
    // Predicated region
    $region50: #{bi_lstm_c_forward.1} parent=1 // pred_check
      _
    $region51: #{bi_lstm_c_forward.1} parent=1 // pred_check_branch
      %87 = sbr.rel (0) target = $region53
    $region52: #{bi_lstm_c_forward.1} parent=1 // pred_region
      %88 = dma.done [#allocation11], 2048
    $region53: #{bi_lstm_c_forward.1} parent=1 // pred_fallthru
      _
    // Predicated region
    $region54: #{bi_lstm_c_forward.1} parent=1 // pred_check
      _
    $region55: #{bi_lstm_c_forward.1} parent=1 // pred_check_branch
      %90 = sbr.rel target = $region57
    $region56: #{bi_lstm_c_forward.1} parent=1 // pred_region
      %91 = sst [smem:[#allocation14]] [#allocation13]
      %92 = sst [smem:[#allocation15]] [#allocation12]
    $region57: #{bi_lstm_c_forward.1} parent=1 // pred_fallthru
      _
    %94 = shalt.err (0)
    %s96 = sshll.u32 [#allocation2], 4
    %s97 = int_to_ptr.vmem [resolvable:$true] %s96
    %99 = dma.hbm_to_vmem [thread:$0]  %s9, 8192, %s97, [#allocation4]
    %s100 = scalar_lea.sflag [#allocation4], 1
    // Predicated region
    $region58: #{bi_lstm_c_forward.1} parent=1 // pred_check
      _
    $region59: #{bi_lstm_c_forward.1} parent=1 // pred_check_branch
      %102 = sbr.rel target = $region61
    $region60: #{bi_lstm_c_forward.1} parent=1 // pred_region
      %103 = sst [smem:[#allocation14]] [#allocation17]
      %104 = sst [smem:[#allocation15]] [#allocation16]
    $region61: #{bi_lstm_c_forward.1} parent=1 // pred_fallthru
      _
    %106 = shalt.err (0)
    %s108 = sshll.u32 [#allocation3], 4
    %s109 = int_to_ptr.vmem [resolvable:$true] %s108
    %111 = dma.hbm_to_vmem [thread:$0]  %s10, 16384, %s109, %s100
    %v112 = vlaneseq
    %v113 = vand.u32 %v112, 127
    %v114 = vadd.s32 %v113, 128
    %v115 = vand.u32 %v113, 32
    %v116 = vand.u32 %v114, 32
    %vm117 = vcmp.eq.s32.totalorder %v115, 0
    %vm118 = vcmp.eq.s32.totalorder %v116, 0
    %vm119 = vcmp.lt.s32.totalorder %v113, 32
    %v120 = vld [vmem:[%s0] sm:$0xff]
    %v121 = vld [vmem:[%s0 + $0x8] sm:$0xff]
    %v122 = vld [vmem:[#allocation5] sm:$0xff]
    %v123 = vld [vmem:[#allocation5 + $0x8] sm:$0xff]
    %v124 = vld [vmem:[#allocation5 + $0x10] sm:$0xff]
    %v125 = vld [vmem:[#allocation5 + $0x18] sm:$0xff]
    %v126 = vld [vmem:[#allocation5 + $0x20] sm:$0xff]
    %v127 = vld [vmem:[#allocation5 + $0x28] sm:$0xff]
    %v128 = vld [vmem:[#allocation5 + $0x30] sm:$0xff]
    %v129 = vld [vmem:[#allocation5 + $0x38] sm:$0xff]
    %v130 = vld [vmem:[#allocation5 + $0x40] sm:$0xff]
    %v131 = vld [vmem:[#allocation5 + $0x48] sm:$0xff]
    %v132 = vld [vmem:[#allocation5 + $0x50] sm:$0xff]
    %v133 = vld [vmem:[#allocation5 + $0x58] sm:$0xff]
    %v134 = vld [vmem:[#allocation5 + $0x60] sm:$0xff]
    %v135 = vld [vmem:[#allocation5 + $0x68] sm:$0xff]
    %v136 = vld [vmem:[#allocation5 + $0x70] sm:$0xff]
    %v137 = vld [vmem:[#allocation5 + $0x78] sm:$0xff]
    %v138 = vld [vmem:[#allocation5 + $0x80] sm:$0xff]
    %v139 = vld [vmem:[#allocation5 + $0x88] sm:$0xff]
    %v140 = vld [vmem:[#allocation5 + $0x90] sm:$0xff]
    %v141 = vld [vmem:[#allocation5 + $0x98] sm:$0xff]
    %v142 = vld [vmem:[#allocation7] sm:$0xff]
    %v143 = vld [vmem:[#allocation7 + $0x8] sm:$0xff]
    %v144 = vld [vmem:[#allocation7 + $0x10] sm:$0xff]
    %v145 = vld [vmem:[#allocation7 + $0x18] sm:$0xff]
    %v146 = vld [vmem:[#allocation7 + $0x20] sm:$0xff]
    %v147 = vld [vmem:[#allocation7 + $0x28] sm:$0xff]
    %v148 = vld [vmem:[#allocation7 + $0x30] sm:$0xff]
    %v149 = vld [vmem:[#allocation7 + $0x38] sm:$0xff]
    %v150 = vld [vmem:[#allocation7 + $0x40] sm:$0xff]
    %v151 = vld [vmem:[#allocation7 + $0x48] sm:$0xff]
    %v152 = vld [vmem:[#allocation7 + $0x50] sm:$0xff]
    %v153 = vld [vmem:[#allocation7 + $0x58] sm:$0xff]
    %v154 = vld [vmem:[#allocation7 + $0x60] sm:$0xff]
    %v155 = vld [vmem:[#allocation7 + $0x68] sm:$0xff]
    %v156 = vld [vmem:[#allocation7 + $0x70] sm:$0xff]
    %v157 = vld [vmem:[#allocation7 + $0x78] sm:$0xff]
    %v158 = vld [vmem:[%s3] sm:$0x3]
    %v160 = vlaneseq
    %v161 = vshrl.u32 %v160, 7
    %v162 = vsub.s32 0, %v161
    %v163 = vrot.slane %v158, %v162
    %v164 = vlaneseq
    %v165 = vshrl.u32 %v164, 7
    %v166 = vsub.s32 1, %v165
    %v167 = vrot.slane %v158, %v166
    %vm170 = vcmask 654336
    %v172 = vsel %vm170, %v120, 0
    %v175 = vsel %vm170, %v121, 0
    %177 = vmatprep.subr.mxu0 %v123
    %178 = vmatpush1.msra.mxu0 %v122
    %179 = vmatprep.subr.mxu0 %v125
    %180 = vmatpush1.msra.mxu0 %v124
    %181 = vmatprep.subr.mxu0 %v127
    %182 = vmatpush1.msra.mxu0 %v126
    %183 = vmatprep.subr.mxu0 %v129
    %184 = vmatpush1.msra.mxu0 %v128
    %185 = vmatprep.subr.mxu0 %v131
    %186 = vmatpush1.msra.mxu0 %v130
    %187 = vmatprep.subr.mxu0 %v133
    %188 = vmatpush1.msra.mxu0 %v132
    %189 = vmatprep.subr.mxu0 %v135
    %190 = vmatpush1.msra.mxu0 %v134
    %191 = vmatprep.subr.mxu0 %v137
    %192 = vmatpush1.msra.mxu0 %v136
    %193 = vmatprep.subr.mxu0 %v139
    %194 = vmatpush1.msra.mxu0 %v138
    %195 = vmatprep.subr.mxu0 %v141
    %196 = vmatpush1.msra.mxu0 %v140
    %197 = vmatprep.subr.mxu0 0.0
    %198 = vmatpush1.msra.mxu0 0.0
    %199 = vmatprep.subr.mxu0 0.0
    %200 = vmatpush1.msra.mxu0 0.0
    %201 = vmatprep.subr.mxu0 0.0
    %202 = vmatpush1.msra.mxu0 0.0
    %203 = vmatprep.subr.mxu0 0.0
    %204 = vmatpush1.msra.mxu0 0.0
    %205 = vmatprep.subr.mxu0 0.0
    %206 = vmatpush1.msra.mxu0 0.0
    %207 = vmatprep.subr.mxu0 0.0
    %208 = vmatpush1.msra.mxu0 0.0
    %209 = vmatprep.subr.mxu0 0.0
    %210 = vmatpush1.msra.mxu0 0.0
    %211 = vmatprep.subr.mxu0 0.0
    %212 = vmatpush1.msra.mxu0 0.0
    %213 = vmatprep.subr.mxu0 0.0
    %214 = vmatpush1.msra.mxu0 0.0
    %215 = vmatprep.subr.mxu0 0.0
    %216 = vmatpush1.msra.mxu0 0.0
    %217 = vmatprep.subr.mxu0 0.0
    %218 = vmatpush1.msra.mxu0 0.0
    %219 = vmatprep.subr.mxu0 0.0
    %220 = vmatpush1.msra.mxu0 0.0
    %221 = vmatprep.subr.mxu0 0.0
    %222 = vmatpush1.msra.mxu0 0.0
    %223 = vmatprep.subr.mxu0 0.0
    %224 = vmatpush1.msra.mxu0 0.0
    %225 = vmatprep.subr.mxu0 0.0
    %226 = vmatpush1.msra.mxu0 0.0
    %227 = vmatprep.subr.mxu0 0.0
    %228 = vmatpush1.msra.mxu0 0.0
    %229 = vmatprep.subr.mxu0 0.0
    %230 = vmatpush1.msra.mxu0 0.0
    %231 = vmatprep.subr.mxu0 0.0
    %232 = vmatpush1.msra.mxu0 0.0
    %233 = vmatprep.subr.mxu0 0.0
    %234 = vmatpush1.msra.mxu0 0.0
    %235 = vmatprep.subr.mxu0 0.0
    %236 = vmatpush1.msra.mxu0 0.0
    %237 = vmatprep.subr.mxu0 0.0
    %238 = vmatpush1.msra.mxu0 0.0
    %239 = vmatprep.subr.mxu0 0.0
    %240 = vmatpush1.msra.mxu0 0.0
    %241 = vmatprep.mubr.f32.mxu0 0.0
    %242 = vmatmul.mubr.f32.gmra.mrb[0].mxu0 %v172
    %v243 = vpop.f32.mrb[0].mxu0
    %v244 = vadd.f32 %v163, %v243
    %v245 = vpop.f32.mrb[0].mxu0
    %v246 = vadd.f32 %v167, %v245
    %247 = vmatprep.mubr.f32.mxu0 0.0
    %248 = vmatmul.mubr.f32.gmra.mrb[0].mxu0 %v175
    %v249 = vpop.f32.mrb[0].mxu0
    %v250 = vadd.f32 %v163, %v249
    %v251 = vpop.f32.mrb[0].mxu0
    %v252 = vadd.f32 %v167, %v251
    %253 = vdwg.mxu0
    %v256 = vrot.slane %v250, 6
    %v257 = vrot.slane %v252, 6
    %v260 = vsel %vm117, %v244, %v256
    %v261 = vsel %vm118, %v246, %v257
    %v262 = vrot.slane %v250, 2
    %v263 = vrot.slane %v252, 2
    %v266 = vsel %vm117, %v244, %v262
    %v267 = vsel %vm118, %v246, %v263
    %v270 = vrot.slane %v244, 6
    %v271 = vrot.slane %v246, 6
    %v274 = vsel %vm117, %v250, %v270
    %v275 = vsel %vm118, %v252, %v271
    %v276 = vrot.slane %v244, 2
    %v277 = vrot.slane %v246, 2
    %v280 = vsel %vm117, %v250, %v276
    %v281 = vsel %vm118, %v252, %v277
    %vm282 = vcmask 523264
    %v284 = vsel %vm282, 0.0, 0
    %286 = vmatprep.subr.mxu0 %v143
    %287 = vmatpush1.msra.mxu0 %v142
    %288 = vmatprep.subr.mxu0 %v145
    %289 = vmatpush1.msra.mxu0 %v144
    %290 = vmatprep.subr.mxu0 %v147
    %291 = vmatpush1.msra.mxu0 %v146
    %292 = vmatprep.subr.mxu0 %v149
    %293 = vmatpush1.msra.mxu0 %v148
    %294 = vmatprep.subr.mxu0 %v151
    %295 = vmatpush1.msra.mxu0 %v150
    %296 = vmatprep.subr.mxu0 %v153
    %297 = vmatpush1.msra.mxu0 %v152
    %298 = vmatprep.subr.mxu0 %v155
    %299 = vmatpush1.msra.mxu0 %v154
    %300 = vmatprep.subr.mxu0 %v157
    %301 = vmatpush1.msra.mxu0 %v156
    %302 = vmatprep.subr.mxu0 0.0
    %303 = vmatpush1.msra.mxu0 0.0
    %304 = vmatprep.subr.mxu0 0.0
    %305 = vmatpush1.msra.mxu0 0.0
    %306 = vmatprep.subr.mxu0 0.0
    %307 = vmatpush1.msra.mxu0 0.0
    %308 = vmatprep.subr.mxu0 0.0
    %309 = vmatpush1.msra.mxu0 0.0
    %310 = vmatprep.subr.mxu0 0.0
    %311 = vmatpush1.msra.mxu0 0.0
    %312 = vmatprep.subr.mxu0 0.0
    %313 = vmatpush1.msra.mxu0 0.0
    %314 = vmatprep.subr.mxu0 0.0
    %315 = vmatpush1.msra.mxu0 0.0
    %316 = vmatprep.subr.mxu0 0.0
    %317 = vmatpush1.msra.mxu0 0.0
    %318 = vmatprep.subr.mxu0 0.0
    %319 = vmatpush1.msra.mxu0 0.0
    %320 = vmatprep.subr.mxu0 0.0
    %321 = vmatpush1.msra.mxu0 0.0
    %322 = vmatprep.subr.mxu0 0.0
    %323 = vmatpush1.msra.mxu0 0.0
    %324 = vmatprep.subr.mxu0 0.0
    %325 = vmatpush1.msra.mxu0 0.0
    %326 = vmatprep.subr.mxu0 0.0
    %327 = vmatpush1.msra.mxu0 0.0
    %328 = vmatprep.subr.mxu0 0.0
    %329 = vmatpush1.msra.mxu0 0.0
    %330 = vmatprep.subr.mxu0 0.0
    %331 = vmatpush1.msra.mxu0 0.0
    %332 = vmatprep.subr.mxu0 0.0
    %333 = vmatpush1.msra.mxu0 0.0
    %334 = vmatprep.subr.mxu0 0.0
    %335 = vmatpush1.msra.mxu0 0.0
    %336 = vmatprep.subr.mxu0 0.0
    %337 = vmatpush1.msra.mxu0 0.0
    %338 = vmatprep.subr.mxu0 0.0
    %339 = vmatpush1.msra.mxu0 0.0
    %340 = vmatprep.subr.mxu0 0.0
    %341 = vmatpush1.msra.mxu0 0.0
    %342 = vmatprep.subr.mxu0 0.0
    %343 = vmatpush1.msra.mxu0 0.0
    %344 = vmatprep.subr.mxu0 0.0
    %345 = vmatpush1.msra.mxu0 0.0
    %346 = vmatprep.subr.mxu0 0.0
    %347 = vmatpush1.msra.mxu0 0.0
    %348 = vmatprep.subr.mxu0 0.0
    %349 = vmatpush1.msra.mxu0 0.0
    %350 = vmatprep.mubr.f32.mxu0 0.0
    %351 = vmatmul.mubr.f32.gmra.mrb[0].mxu0 %v284
    %v352 = vpop.f32.mrb[0].mxu0
    %v353 = vadd.f32 0.0, %v352
    %v354 = vpop.f32.mrb[0].mxu0
    %v355 = vadd.f32 0.0, %v354
    %356 = vdwg.mxu0
    %v357 = vadd.f32 %v260, %v353
    %v358 = vadd.f32 %v261, %v355
    %v359 = vxor.u32 %v357, 2147483648
    %v360 = vxor.u32 %v358, 2147483648
    %v361 = vmul.f32 %v359, 1.442695
    %v362 = vpow.pop %v361
    %v363 = vmul.f32 %v360, 1.442695
    %v364 = vpow.pop %v363
    %v365 = vadd.f32 %v362, 1.0
    %v366 = vadd.f32 %v364, 1.0
    %v367 = vrcp.pop %v365
    %v368 = vmul.f32 1.0, %v367
    %v369 = vrcp.pop %v366
    %v370 = vmul.f32 1.0, %v369
    %v371 = vtanh.pop %v358
    %v372 = vmul.f32 %v368, 0.0
    %374 = vrot.lane.b32.xlu0 %v371, 64
    %v375 = vpop.permute.xlu0 %374
    %v377 = vmul.f32 %v368, %v375
    %379 = vrot.lane.b32.xlu0 %v377, 64
    %v380 = vpop.permute.xlu0 %379
    %v382 = vadd.f32 %v372, %v380
    %v383 = vtanh.pop %v382
    %385 = vrot.lane.b32.xlu0 %v383, 64
    %v386 = vpop.permute.xlu0 %385
    %v388 = vmul.f32 %v370, %v386
    %v390 = vsel %vm282, %v388, 0
    %392 = vmatprep.subr.mxu0 %v143
    %393 = vmatpush1.msra.mxu0 %v142
    %394 = vmatprep.subr.mxu0 %v145
    %395 = vmatpush1.msra.mxu0 %v144
    %396 = vmatprep.subr.mxu0 %v147
    %397 = vmatpush1.msra.mxu0 %v146
    %398 = vmatprep.subr.mxu0 %v149
    %399 = vmatpush1.msra.mxu0 %v148
    %400 = vmatprep.subr.mxu0 %v151
    %401 = vmatpush1.msra.mxu0 %v150
    %402 = vmatprep.subr.mxu0 %v153
    %403 = vmatpush1.msra.mxu0 %v152
    %404 = vmatprep.subr.mxu0 %v155
    %405 = vmatpush1.msra.mxu0 %v154
    %406 = vmatprep.subr.mxu0 %v157
    %407 = vmatpush1.msra.mxu0 %v156
    %408 = vmatprep.subr.mxu0 0.0
    %409 = vmatpush1.msra.mxu0 0.0
    %410 = vmatprep.subr.mxu0 0.0
    %411 = vmatpush1.msra.mxu0 0.0
    %412 = vmatprep.subr.mxu0 0.0
    %413 = vmatpush1.msra.mxu0 0.0
    %414 = vmatprep.subr.mxu0 0.0
    %415 = vmatpush1.msra.mxu0 0.0
    %416 = vmatprep.subr.mxu0 0.0
    %417 = vmatpush1.msra.mxu0 0.0
    %418 = vmatprep.subr.mxu0 0.0
    %419 = vmatpush1.msra.mxu0 0.0
    %420 = vmatprep.subr.mxu0 0.0
    %421 = vmatpush1.msra.mxu0 0.0
    %422 = vmatprep.subr.mxu0 0.0
    %423 = vmatpush1.msra.mxu0 0.0
    %424 = vmatprep.subr.mxu0 0.0
    %425 = vmatpush1.msra.mxu0 0.0
    %426 = vmatprep.subr.mxu0 0.0
    %427 = vmatpush1.msra.mxu0 0.0
    %428 = vmatprep.subr.mxu0 0.0
    %429 = vmatpush1.msra.mxu0 0.0
    %430 = vmatprep.subr.mxu0 0.0
    %431 = vmatpush1.msra.mxu0 0.0
    %432 = vmatprep.subr.mxu0 0.0
    %433 = vmatpush1.msra.mxu0 0.0
    %434 = vmatprep.subr.mxu0 0.0
    %435 = vmatpush1.msra.mxu0 0.0
    %436 = vmatprep.subr.mxu0 0.0
    %437 = vmatpush1.msra.mxu0 0.0
    %438 = vmatprep.subr.mxu0 0.0
    %439 = vmatpush1.msra.mxu0 0.0
    %440 = vmatprep.subr.mxu0 0.0
    %441 = vmatpush1.msra.mxu0 0.0
    %442 = vmatprep.subr.mxu0 0.0
    %443 = vmatpush1.msra.mxu0 0.0
    %444 = vmatprep.subr.mxu0 0.0
    %445 = vmatpush1.msra.mxu0 0.0
    %446 = vmatprep.subr.mxu0 0.0
    %447 = vmatpush1.msra.mxu0 0.0
    %448 = vmatprep.subr.mxu0 0.0
    %449 = vmatpush1.msra.mxu0 0.0
    %450 = vmatprep.subr.mxu0 0.0
    %451 = vmatpush1.msra.mxu0 0.0
    %452 = vmatprep.subr.mxu0 0.0
    %453 = vmatpush1.msra.mxu0 0.0
    %454 = vmatprep.subr.mxu0 0.0
    %455 = vmatpush1.msra.mxu0 0.0
    %456 = vmatprep.mubr.f32.mxu0 0.0
    %457 = vmatmul.mubr.f32.gmra.mrb[0].mxu0 %v390
    %v458 = vpop.f32.mrb[0].mxu0
    %v459 = vadd.f32 0.0, %v458
    %v460 = vpop.f32.mrb[0].mxu0
    %v461 = vadd.f32 0.0, %v460
    %462 = vdwg.mxu0
    %v465 = vrot.slane %v459, 6
    %v466 = vrot.slane %v461, 6
    %v469 = vadd.f32 %v266, %v465
    %v470 = vadd.f32 %v267, %v466
    %v471 = vxor.u32 %v469, 2147483648
    %v472 = vxor.u32 %v470, 2147483648
    %v473 = vmul.f32 %v471, 1.442695
    %v474 = vpow.pop %v473
    %v475 = vmul.f32 %v472, 1.442695
    %v476 = vpow.pop %v475
    %v477 = vadd.f32 %v474, 1.0
    %v478 = vadd.f32 %v476, 1.0
    %v479 = vrcp.pop %v477
    %v480 = vmul.f32 1.0, %v479
    %v481 = vrcp.pop %v478
    %v482 = vmul.f32 1.0, %v481
    %v483 = vtanh.pop %v470
    %v485 = vrot.slane %v382, 6
    %v487 = vmul.f32 %v480, %v485
    %489 = vrot.lane.b32.xlu0 %v483, 64
    %v490 = vpop.permute.xlu0 %489
    %v492 = vmul.f32 %v480, %v490
    %494 = vrot.lane.b32.xlu0 %v492, 64
    %v495 = vpop.permute.xlu0 %494
    %v497 = vadd.f32 %v487, %v495
    %v498 = vtanh.pop %v497
    %500 = vrot.lane.b32.xlu0 %v498, 64
    %v501 = vpop.permute.xlu0 %500
    %v503 = vmul.f32 %v482, %v501
    %v505 = vrot.slane %v503, 2
    %v506 = vsel %vm282, %v505, 0
    %508 = vmatprep.subr.mxu0 %v143
    %509 = vmatpush1.msra.mxu0 %v142
    %510 = vmatprep.subr.mxu0 %v145
    %511 = vmatpush1.msra.mxu0 %v144
    %512 = vmatprep.subr.mxu0 %v147
    %513 = vmatpush1.msra.mxu0 %v146
    %514 = vmatprep.subr.mxu0 %v149
    %515 = vmatpush1.msra.mxu0 %v148
    %516 = vmatprep.subr.mxu0 %v151
    %517 = vmatpush1.msra.mxu0 %v150
    %518 = vmatprep.subr.mxu0 %v153
    %519 = vmatpush1.msra.mxu0 %v152
    %520 = vmatprep.subr.mxu0 %v155
    %521 = vmatpush1.msra.mxu0 %v154
    %522 = vmatprep.subr.mxu0 %v157
    %523 = vmatpush1.msra.mxu0 %v156
    %524 = vmatprep.subr.mxu0 0.0
    %525 = vmatpush1.msra.mxu0 0.0
    %526 = vmatprep.subr.mxu0 0.0
    %527 = vmatpush1.msra.mxu0 0.0
    %528 = vmatprep.subr.mxu0 0.0
    %529 = vmatpush1.msra.mxu0 0.0
    %530 = vmatprep.subr.mxu0 0.0
    %531 = vmatpush1.msra.mxu0 0.0
    %532 = vmatprep.subr.mxu0 0.0
    %533 = vmatpush1.msra.mxu0 0.0
    %534 = vmatprep.subr.mxu0 0.0
    %535 = vmatpush1.msra.mxu0 0.0
    %536 = vmatprep.subr.mxu0 0.0
    %537 = vmatpush1.msra.mxu0 0.0
    %538 = vmatprep.subr.mxu0 0.0
    %539 = vmatpush1.msra.mxu0 0.0
    %540 = vmatprep.subr.mxu0 0.0
    %541 = vmatpush1.msra.mxu0 0.0
    %542 = vmatprep.subr.mxu0 0.0
    %543 = vmatpush1.msra.mxu0 0.0
    %544 = vmatprep.subr.mxu0 0.0
    %545 = vmatpush1.msra.mxu0 0.0
    %546 = vmatprep.subr.mxu0 0.0
    %547 = vmatpush1.msra.mxu0 0.0
    %548 = vmatprep.subr.mxu0 0.0
    %549 = vmatpush1.msra.mxu0 0.0
    %550 = vmatprep.subr.mxu0 0.0
    %551 = vmatpush1.msra.mxu0 0.0
    %552 = vmatprep.subr.mxu0 0.0
    %553 = vmatpush1.msra.mxu0 0.0
    %554 = vmatprep.subr.mxu0 0.0
    %555 = vmatpush1.msra.mxu0 0.0
    %556 = vmatprep.subr.mxu0 0.0
    %557 = vmatpush1.msra.mxu0 0.0
    %558 = vmatprep.subr.mxu0 0.0
    %559 = vmatpush1.msra.mxu0 0.0
    %560 = vmatprep.subr.mxu0 0.0
    %561 = vmatpush1.msra.mxu0 0.0
    %562 = vmatprep.subr.mxu0 0.0
    %563 = vmatpush1.msra.mxu0 0.0
    %564 = vmatprep.subr.mxu0 0.0
    %565 = vmatpush1.msra.mxu0 0.0
    %566 = vmatprep.subr.mxu0 0.0
    %567 = vmatpush1.msra.mxu0 0.0
    %568 = vmatprep.subr.mxu0 0.0
    %569 = vmatpush1.msra.mxu0 0.0
    %570 = vmatprep.subr.mxu0 0.0
    %571 = vmatpush1.msra.mxu0 0.0
    %572 = vmatprep.mubr.f32.mxu0 0.0
    %573 = vmatmul.mubr.f32.gmra.mrb[0].mxu0 %v506
    %v574 = vpop.f32.mrb[0].mxu0
    %v575 = vadd.f32 0.0, %v574
    %v576 = vpop.f32.mrb[0].mxu0
    %v577 = vadd.f32 0.0, %v576
    %578 = vdwg.mxu0
    %v581 = vrot.slane %v575, 4
    %v582 = vrot.slane %v577, 4
    %v585 = vadd.f32 %v260, %v581
    %v586 = vadd.f32 %v261, %v582
    %v587 = vxor.u32 %v585, 2147483648
    %v588 = vxor.u32 %v586, 2147483648
    %v589 = vmul.f32 %v587, 1.442695
    %v590 = vpow.pop %v589
    %v591 = vmul.f32 %v588, 1.442695
    %v592 = vpow.pop %v591
    %v593 = vadd.f32 %v590, 1.0
    %v594 = vadd.f32 %v592, 1.0
    %v595 = vrcp.pop %v593
    %v596 = vmul.f32 1.0, %v595
    %v597 = vrcp.pop %v594
    %v598 = vmul.f32 1.0, %v597
    %v599 = vtanh.pop %v586
    %v601 = vrot.slane %v497, 6
    %v603 = vmul.f32 %v596, %v601
    %605 = vrot.lane.b32.xlu0 %v599, 64
    %v606 = vpop.permute.xlu0 %605
    %v608 = vmul.f32 %v596, %v606
    %610 = vrot.lane.b32.xlu0 %v608, 64
    %v611 = vpop.permute.xlu0 %610
    %v613 = vadd.f32 %v603, %v611
    %v614 = vtanh.pop %v613
    %616 = vrot.lane.b32.xlu0 %v614, 64
    %v617 = vpop.permute.xlu0 %616
    %v619 = vmul.f32 %v598, %v617
    %v621 = vrot.slane %v619, 4
    %v622 = vsel %vm282, %v621, 0
    %624 = vmatprep.subr.mxu0 %v143
    %625 = vmatpush1.msra.mxu0 %v142
    %626 = vmatprep.subr.mxu0 %v145
    %627 = vmatpush1.msra.mxu0 %v144
    %628 = vmatprep.subr.mxu0 %v147
    %629 = vmatpush1.msra.mxu0 %v146
    %630 = vmatprep.subr.mxu0 %v149
    %631 = vmatpush1.msra.mxu0 %v148
    %632 = vmatprep.subr.mxu0 %v151
    %633 = vmatpush1.msra.mxu0 %v150
    %634 = vmatprep.subr.mxu0 %v153
    %635 = vmatpush1.msra.mxu0 %v152
    %636 = vmatprep.subr.mxu0 %v155
    %637 = vmatpush1.msra.mxu0 %v154
    %638 = vmatprep.subr.mxu0 %v157
    %639 = vmatpush1.msra.mxu0 %v156
    %640 = vmatprep.subr.mxu0 0.0
    %641 = vmatpush1.msra.mxu0 0.0
    %642 = vmatprep.subr.mxu0 0.0
    %643 = vmatpush1.msra.mxu0 0.0
    %644 = vmatprep.subr.mxu0 0.0
    %645 = vmatpush1.msra.mxu0 0.0
    %646 = vmatprep.subr.mxu0 0.0
    %647 = vmatpush1.msra.mxu0 0.0
    %648 = vmatprep.subr.mxu0 0.0
    %649 = vmatpush1.msra.mxu0 0.0
    %650 = vmatprep.subr.mxu0 0.0
    %651 = vmatpush1.msra.mxu0 0.0
    %652 = vmatprep.subr.mxu0 0.0
    %653 = vmatpush1.msra.mxu0 0.0
    %654 = vmatprep.subr.mxu0 0.0
    %655 = vmatpush1.msra.mxu0 0.0
    %656 = vmatprep.subr.mxu0 0.0
    %657 = vmatpush1.msra.mxu0 0.0
    %658 = vmatprep.subr.mxu0 0.0
    %659 = vmatpush1.msra.mxu0 0.0
    %660 = vmatprep.subr.mxu0 0.0
    %661 = vmatpush1.msra.mxu0 0.0
    %662 = vmatprep.subr.mxu0 0.0
    %663 = vmatpush1.msra.mxu0 0.0
    %664 = vmatprep.subr.mxu0 0.0
    %665 = vmatpush1.msra.mxu0 0.0
    %666 = vmatprep.subr.mxu0 0.0
    %667 = vmatpush1.msra.mxu0 0.0
    %668 = vmatprep.subr.mxu0 0.0
    %669 = vmatpush1.msra.mxu0 0.0
    %670 = vmatprep.subr.mxu0 0.0
    %671 = vmatpush1.msra.mxu0 0.0
    %672 = vmatprep.subr.mxu0 0.0
    %673 = vmatpush1.msra.mxu0 0.0
    %674 = vmatprep.subr.mxu0 0.0
    %675 = vmatpush1.msra.mxu0 0.0
    %676 = vmatprep.subr.mxu0 0.0
    %677 = vmatpush1.msra.mxu0 0.0
    %678 = vmatprep.subr.mxu0 0.0
    %679 = vmatpush1.msra.mxu0 0.0
    %680 = vmatprep.subr.mxu0 0.0
    %681 = vmatpush1.msra.mxu0 0.0
    %682 = vmatprep.subr.mxu0 0.0
    %683 = vmatpush1.msra.mxu0 0.0
    %684 = vmatprep.subr.mxu0 0.0
    %685 = vmatpush1.msra.mxu0 0.0
    %686 = vmatprep.subr.mxu0 0.0
    %687 = vmatpush1.msra.mxu0 0.0
    %688 = vmatprep.mubr.f32.mxu0 0.0
    %689 = vmatmul.mubr.f32.gmra.mrb[0].mxu0 %v622
    %v690 = vpop.f32.mrb[0].mxu0
    %v691 = vadd.f32 0.0, %v690
    %v692 = vpop.f32.mrb[0].mxu0
    %v693 = vadd.f32 0.0, %v692
    %694 = vdwg.mxu0
    %v697 = vrot.slane %v691, 2
    %v698 = vrot.slane %v693, 2
    %v701 = vadd.f32 %v266, %v697
    %v702 = vadd.f32 %v267, %v698
    %v703 = vxor.u32 %v701, 2147483648
    %v704 = vxor.u32 %v702, 2147483648
    %v705 = vmul.f32 %v703, 1.442695
    %v706 = vpow.pop %v705
    %v707 = vmul.f32 %v704, 1.442695
    %v708 = vpow.pop %v707
    %v709 = vadd.f32 %v706, 1.0
    %v710 = vadd.f32 %v708, 1.0
    %v711 = vrcp.pop %v709
    %v712 = vmul.f32 1.0, %v711
    %v713 = vrcp.pop %v710
    %v714 = vmul.f32 1.0, %v713
    %v715 = vtanh.pop %v702
    %v717 = vrot.slane %v613, 6
    %v719 = vmul.f32 %v712, %v717
    %721 = vrot.lane.b32.xlu0 %v715, 64
    %v722 = vpop.permute.xlu0 %721
    %v724 = vmul.f32 %v712, %v722
    %726 = vrot.lane.b32.xlu0 %v724, 64
    %v727 = vpop.permute.xlu0 %726
    %v729 = vadd.f32 %v719, %v727
    %v730 = vtanh.pop %v729
    %732 = vrot.lane.b32.xlu0 %v730, 64
    %v733 = vpop.permute.xlu0 %732
    %v735 = vmul.f32 %v714, %v733
    %v737 = vrot.slane %v735, 6
    %v738 = vsel %vm282, %v737, 0
    %740 = vmatprep.subr.mxu0 %v143
    %741 = vmatpush1.msra.mxu0 %v142
    %742 = vmatprep.subr.mxu0 %v145
    %743 = vmatpush1.msra.mxu0 %v144
    %744 = vmatprep.subr.mxu0 %v147
    %745 = vmatpush1.msra.mxu0 %v146
    %746 = vmatprep.subr.mxu0 %v149
    %747 = vmatpush1.msra.mxu0 %v148
    %748 = vmatprep.subr.mxu0 %v151
    %749 = vmatpush1.msra.mxu0 %v150
    %750 = vmatprep.subr.mxu0 %v153
    %751 = vmatpush1.msra.mxu0 %v152
    %752 = vmatprep.subr.mxu0 %v155
    %753 = vmatpush1.msra.mxu0 %v154
    %754 = vmatprep.subr.mxu0 %v157
    %755 = vmatpush1.msra.mxu0 %v156
    %756 = vmatprep.subr.mxu0 0.0
    %757 = vmatpush1.msra.mxu0 0.0
    %758 = vmatprep.subr.mxu0 0.0
    %759 = vmatpush1.msra.mxu0 0.0
    %760 = vmatprep.subr.mxu0 0.0
    %761 = vmatpush1.msra.mxu0 0.0
    %762 = vmatprep.subr.mxu0 0.0
    %763 = vmatpush1.msra.mxu0 0.0
    %764 = vmatprep.subr.mxu0 0.0
    %765 = vmatpush1.msra.mxu0 0.0
    %766 = vmatprep.subr.mxu0 0.0
    %767 = vmatpush1.msra.mxu0 0.0
    %768 = vmatprep.subr.mxu0 0.0
    %769 = vmatpush1.msra.mxu0 0.0
    %770 = vmatprep.subr.mxu0 0.0
    %771 = vmatpush1.msra.mxu0 0.0
    %772 = vmatprep.subr.mxu0 0.0
    %773 = vmatpush1.msra.mxu0 0.0
    %774 = vmatprep.subr.mxu0 0.0
    %775 = vmatpush1.msra.mxu0 0.0
    %776 = vmatprep.subr.mxu0 0.0
    %777 = vmatpush1.msra.mxu0 0.0
    %778 = vmatprep.subr.mxu0 0.0
    %779 = vmatpush1.msra.mxu0 0.0
    %780 = vmatprep.subr.mxu0 0.0
    %781 = vmatpush1.msra.mxu0 0.0
    %782 = vmatprep.subr.mxu0 0.0
    %783 = vmatpush1.msra.mxu0 0.0
    %784 = vmatprep.subr.mxu0 0.0
    %785 = vmatpush1.msra.mxu0 0.0
    %786 = vmatprep.subr.mxu0 0.0
    %787 = vmatpush1.msra.mxu0 0.0
    %788 = vmatprep.subr.mxu0 0.0
    %789 = vmatpush1.msra.mxu0 0.0
    %790 = vmatprep.subr.mxu0 0.0
    %791 = vmatpush1.msra.mxu0 0.0
    %792 = vmatprep.subr.mxu0 0.0
    %793 = vmatpush1.msra.mxu0 0.0
    %794 = vmatprep.subr.mxu0 0.0
    %795 = vmatpush1.msra.mxu0 0.0
    %796 = vmatprep.subr.mxu0 0.0
    %797 = vmatpush1.msra.mxu0 0.0
    %798 = vmatprep.subr.mxu0 0.0
    %799 = vmatpush1.msra.mxu0 0.0
    %800 = vmatprep.subr.mxu0 0.0
    %801 = vmatpush1.msra.mxu0 0.0
    %802 = vmatprep.subr.mxu0 0.0
    %803 = vmatpush1.msra.mxu0 0.0
    %804 = vmatprep.mubr.f32.mxu0 0.0
    %805 = vmatmul.mubr.f32.gmra.mrb[0].mxu0 %v738
    %v806 = vpop.f32.mrb[0].mxu0
    %v807 = vadd.f32 0.0, %v806
    %v808 = vpop.f32.mrb[0].mxu0
    %v809 = vadd.f32 0.0, %v808
    %810 = vdwg.mxu0
    %v811 = vadd.f32 %v274, %v807
    %v812 = vadd.f32 %v275, %v809
    %v813 = vxor.u32 %v811, 2147483648
    %v814 = vxor.u32 %v812, 2147483648
    %v815 = vmul.f32 %v813, 1.442695
    %v816 = vpow.pop %v815
    %v817 = vmul.f32 %v814, 1.442695
    %v818 = vpow.pop %v817
    %v819 = vadd.f32 %v816, 1.0
    %v820 = vadd.f32 %v818, 1.0
    %v821 = vrcp.pop %v819
    %v822 = vmul.f32 1.0, %v821
    %v823 = vrcp.pop %v820
    %v824 = vmul.f32 1.0, %v823
    %v825 = vtanh.pop %v812
    %v827 = vrot.slane %v729, 6
    %v829 = vmul.f32 %v822, %v827
    %831 = vrot.lane.b32.xlu0 %v825, 64
    %v832 = vpop.permute.xlu0 %831
    %v834 = vmul.f32 %v822, %v832
    %836 = vrot.lane.b32.xlu0 %v834, 64
    %v837 = vpop.permute.xlu0 %836
    %v839 = vadd.f32 %v829, %v837
    %v840 = vtanh.pop %v839
    %842 = vrot.lane.b32.xlu0 %v840, 64
    %v843 = vpop.permute.xlu0 %842
    %v845 = vmul.f32 %v824, %v843
    %v847 = vsel %vm282, %v845, 0
    %849 = vmatprep.subr.mxu0 %v143
    %850 = vmatpush1.msra.mxu0 %v142
    %851 = vmatprep.subr.mxu0 %v145
    %852 = vmatpush1.msra.mxu0 %v144
    %853 = vmatprep.subr.mxu0 %v147
    %854 = vmatpush1.msra.mxu0 %v146
    %855 = vmatprep.subr.mxu0 %v149
    %856 = vmatpush1.msra.mxu0 %v148
    %857 = vmatprep.subr.mxu0 %v151
    %858 = vmatpush1.msra.mxu0 %v150
    %859 = vmatprep.subr.mxu0 %v153
    %860 = vmatpush1.msra.mxu0 %v152
    %861 = vmatprep.subr.mxu0 %v155
    %862 = vmatpush1.msra.mxu0 %v154
    %863 = vmatprep.subr.mxu0 %v157
    %864 = vmatpush1.msra.mxu0 %v156
    %865 = vmatprep.subr.mxu0 0.0
    %866 = vmatpush1.msra.mxu0 0.0
    %867 = vmatprep.subr.mxu0 0.0
    %868 = vmatpush1.msra.mxu0 0.0
    %869 = vmatprep.subr.mxu0 0.0
    %870 = vmatpush1.msra.mxu0 0.0
    %871 = vmatprep.subr.mxu0 0.0
    %872 = vmatpush1.msra.mxu0 0.0
    %873 = vmatprep.subr.mxu0 0.0
    %874 = vmatpush1.msra.mxu0 0.0
    %875 = vmatprep.subr.mxu0 0.0
    %876 = vmatpush1.msra.mxu0 0.0
    %877 = vmatprep.subr.mxu0 0.0
    %878 = vmatpush1.msra.mxu0 0.0
    %879 = vmatprep.subr.mxu0 0.0
    %880 = vmatpush1.msra.mxu0 0.0
    %881 = vmatprep.subr.mxu0 0.0
    %882 = vmatpush1.msra.mxu0 0.0
    %883 = vmatprep.subr.mxu0 0.0
    %884 = vmatpush1.msra.mxu0 0.0
    %885 = vmatprep.subr.mxu0 0.0
    %886 = vmatpush1.msra.mxu0 0.0
    %887 = vmatprep.subr.mxu0 0.0
    %888 = vmatpush1.msra.mxu0 0.0
    %889 = vmatprep.subr.mxu0 0.0
    %890 = vmatpush1.msra.mxu0 0.0
    %891 = vmatprep.subr.mxu0 0.0
    %892 = vmatpush1.msra.mxu0 0.0
    %893 = vmatprep.subr.mxu0 0.0
    %894 = vmatpush1.msra.mxu0 0.0
    %895 = vmatprep.subr.mxu0 0.0
    %896 = vmatpush1.msra.mxu0 0.0
    %897 = vmatprep.subr.mxu0 0.0
    %898 = vmatpush1.msra.mxu0 0.0
    %899 = vmatprep.subr.mxu0 0.0
    %900 = vmatpush1.msra.mxu0 0.0
    %901 = vmatprep.subr.mxu0 0.0
    %902 = vmatpush1.msra.mxu0 0.0
    %903 = vmatprep.subr.mxu0 0.0
    %904 = vmatpush1.msra.mxu0 0.0
    %905 = vmatprep.subr.mxu0 0.0
    %906 = vmatpush1.msra.mxu0 0.0
    %907 = vmatprep.subr.mxu0 0.0
    %908 = vmatpush1.msra.mxu0 0.0
    %909 = vmatprep.subr.mxu0 0.0
    %910 = vmatpush1.msra.mxu0 0.0
    %911 = vmatprep.subr.mxu0 0.0
    %912 = vmatpush1.msra.mxu0 0.0
    %913 = vmatprep.mubr.f32.mxu0 0.0
    %914 = vmatmul.mubr.f32.gmra.mrb[0].mxu0 %v847
    %v915 = vpop.f32.mrb[0].mxu0
    %v916 = vadd.f32 0.0, %v915
    %v917 = vpop.f32.mrb[0].mxu0
    %v918 = vadd.f32 0.0, %v917
    %919 = vdwg.mxu0
    %v922 = vrot.slane %v916, 6
    %v923 = vrot.slane %v918, 6
    %v926 = vadd.f32 %v280, %v922
    %v927 = vadd.f32 %v281, %v923
    %v928 = vxor.u32 %v926, 2147483648
    %v929 = vxor.u32 %v927, 2147483648
    %v930 = vmul.f32 %v928, 1.442695
    %v931 = vpow.pop %v930
    %v932 = vmul.f32 %v929, 1.442695
    %v933 = vpow.pop %v932
    %v934 = vadd.f32 %v931, 1.0
    %v935 = vadd.f32 %v933, 1.0
    %v936 = vrcp.pop %v934
    %v937 = vmul.f32 1.0, %v936
    %v938 = vrcp.pop %v935
    %v939 = vmul.f32 1.0, %v938
    %v940 = vtanh.pop %v927
    %v942 = vrot.slane %v839, 6
    %v944 = vmul.f32 %v937, %v942
    %946 = vrot.lane.b32.xlu0 %v940, 64
    %v947 = vpop.permute.xlu0 %946
    %v949 = vmul.f32 %v937, %v947
    %951 = vrot.lane.b32.xlu0 %v949, 64
    %v952 = vpop.permute.xlu0 %951
    %v954 = vadd.f32 %v944, %v952
    %v955 = vtanh.pop %v954
    %957 = vrot.lane.b32.xlu0 %v955, 64
    %v958 = vpop.permute.xlu0 %957
    %v960 = vmul.f32 %v939, %v958
    %v962 = vrot.slane %v960, 2
    %v963 = vsel %vm282, %v962, 0
    %965 = vmatprep.subr.mxu0 %v143
    %966 = vmatpush1.msra.mxu0 %v142
    %967 = vmatprep.subr.mxu0 %v145
    %968 = vmatpush1.msra.mxu0 %v144
    %969 = vmatprep.subr.mxu0 %v147
    %970 = vmatpush1.msra.mxu0 %v146
    %971 = vmatprep.subr.mxu0 %v149
    %972 = vmatpush1.msra.mxu0 %v148
    %973 = vmatprep.subr.mxu0 %v151
    %974 = vmatpush1.msra.mxu0 %v150
    %975 = vmatprep.subr.mxu0 %v153
    %976 = vmatpush1.msra.mxu0 %v152
    %977 = vmatprep.subr.mxu0 %v155
    %978 = vmatpush1.msra.mxu0 %v154
    %979 = vmatprep.subr.mxu0 %v157
    %980 = vmatpush1.msra.mxu0 %v156
    %981 = vmatprep.subr.mxu0 0.0
    %982 = vmatpush1.msra.mxu0 0.0
    %983 = vmatprep.subr.mxu0 0.0
    %984 = vmatpush1.msra.mxu0 0.0
    %985 = vmatprep.subr.mxu0 0.0
    %986 = vmatpush1.msra.mxu0 0.0
    %987 = vmatprep.subr.mxu0 0.0
    %988 = vmatpush1.msra.mxu0 0.0
    %989 = vmatprep.subr.mxu0 0.0
    %990 = vmatpush1.msra.mxu0 0.0
    %991 = vmatprep.subr.mxu0 0.0
    %992 = vmatpush1.msra.mxu0 0.0
    %993 = vmatprep.subr.mxu0 0.0
    %994 = vmatpush1.msra.mxu0 0.0
    %995 = vmatprep.subr.mxu0 0.0
    %996 = vmatpush1.msra.mxu0 0.0
    %997 = vmatprep.subr.mxu0 0.0
    %998 = vmatpush1.msra.mxu0 0.0
    %999 = vmatprep.subr.mxu0 0.0
    %1000 = vmatpush1.msra.mxu0 0.0
    %1001 = vmatprep.subr.mxu0 0.0
    %1002 = vmatpush1.msra.mxu0 0.0
    %1003 = vmatprep.subr.mxu0 0.0
    %1004 = vmatpush1.msra.mxu0 0.0
    %1005 = vmatprep.subr.mxu0 0.0
    %1006 = vmatpush1.msra.mxu0 0.0
    %1007 = vmatprep.subr.mxu0 0.0
    %1008 = vmatpush1.msra.mxu0 0.0
    %1009 = vmatprep.subr.mxu0 0.0
    %1010 = vmatpush1.msra.mxu0 0.0
    %1011 = vmatprep.subr.mxu0 0.0
    %1012 = vmatpush1.msra.mxu0 0.0
    %1013 = vmatprep.subr.mxu0 0.0
    %1014 = vmatpush1.msra.mxu0 0.0
    %1015 = vmatprep.subr.mxu0 0.0
    %1016 = vmatpush1.msra.mxu0 0.0
    %1017 = vmatprep.subr.mxu0 0.0
    %1018 = vmatpush1.msra.mxu0 0.0
    %1019 = vmatprep.subr.mxu0 0.0
    %1020 = vmatpush1.msra.mxu0 0.0
    %1021 = vmatprep.subr.mxu0 0.0
    %1022 = vmatpush1.msra.mxu0 0.0
    %1023 = vmatprep.subr.mxu0 0.0
    %1024 = vmatpush1.msra.mxu0 0.0
    %1025 = vmatprep.subr.mxu0 0.0
    %1026 = vmatpush1.msra.mxu0 0.0
    %1027 = vmatprep.subr.mxu0 0.0
    %1028 = vmatpush1.msra.mxu0 0.0
    %1029 = vmatprep.mubr.f32.mxu0 0.0
    %1030 = vmatmul.mubr.f32.gmra.mrb[0].mxu0 %v963
    %v1031 = vpop.f32.mrb[0].mxu0
    %v1032 = vadd.f32 0.0, %v1031
    %v1033 = vpop.f32.mrb[0].mxu0
    %v1034 = vadd.f32 0.0, %v1033
    %1035 = vdwg.mxu0
    %v1038 = vrot.slane %v1032, 4
    %v1039 = vrot.slane %v1034, 4
    %v1042 = vadd.f32 %v274, %v1038
    %v1043 = vadd.f32 %v275, %v1039
    %v1044 = vxor.u32 %v1042, 2147483648
    %v1045 = vxor.u32 %v1043, 2147483648
    %v1046 = vmul.f32 %v1044, 1.442695
    %v1047 = vpow.pop %v1046
    %v1048 = vmul.f32 %v1045, 1.442695
    %v1049 = vpow.pop %v1048
    %v1050 = vadd.f32 %v1047, 1.0
    %v1051 = vadd.f32 %v1049, 1.0
    %v1052 = vrcp.pop %v1050
    %v1053 = vmul.f32 1.0, %v1052
    %v1054 = vrcp.pop %v1051
    %v1055 = vmul.f32 1.0, %v1054
    %v1056 = vtanh.pop %v1043
    %v1058 = vrot.slane %v954, 6
    %v1060 = vmul.f32 %v1053, %v1058
    %1062 = vrot.lane.b32.xlu0 %v1056, 64
    %v1063 = vpop.permute.xlu0 %1062
    %v1065 = vmul.f32 %v1053, %v1063
    %1067 = vrot.lane.b32.xlu0 %v1065, 64
    %v1068 = vpop.permute.xlu0 %1067
    %v1070 = vadd.f32 %v1060, %v1068
    %v1071 = vtanh.pop %v1070
    %1073 = vrot.lane.b32.xlu0 %v1071, 64
    %v1074 = vpop.permute.xlu0 %1073
    %v1076 = vmul.f32 %v1055, %v1074
    %v1078 = vrot.slane %v1076, 4
    %v1079 = vsel %vm282, %v1078, 0
    %1081 = vmatprep.subr.mxu0 %v143
    %1082 = vmatpush1.msra.mxu0 %v142
    %1083 = vmatprep.subr.mxu0 %v145
    %1084 = vmatpush1.msra.mxu0 %v144
    %1085 = vmatprep.subr.mxu0 %v147
    %1086 = vmatpush1.msra.mxu0 %v146
    %1087 = vmatprep.subr.mxu0 %v149
    %1088 = vmatpush1.msra.mxu0 %v148
    %1089 = vmatprep.subr.mxu0 %v151
    %1090 = vmatpush1.msra.mxu0 %v150
    %1091 = vmatprep.subr.mxu0 %v153
    %1092 = vmatpush1.msra.mxu0 %v152
    %1093 = vmatprep.subr.mxu0 %v155
    %1094 = vmatpush1.msra.mxu0 %v154
    %1095 = vmatprep.subr.mxu0 %v157
    %1096 = vmatpush1.msra.mxu0 %v156
    %1097 = vmatprep.subr.mxu0 0.0
    %1098 = vmatpush1.msra.mxu0 0.0
    %1099 = vmatprep.subr.mxu0 0.0
    %1100 = vmatpush1.msra.mxu0 0.0
    %1101 = vmatprep.subr.mxu0 0.0
    %1102 = vmatpush1.msra.mxu0 0.0
    %1103 = vmatprep.subr.mxu0 0.0
    %1104 = vmatpush1.msra.mxu0 0.0
    %1105 = vmatprep.subr.mxu0 0.0
    %1106 = vmatpush1.msra.mxu0 0.0
    %1107 = vmatprep.subr.mxu0 0.0
    %1108 = vmatpush1.msra.mxu0 0.0
    %1109 = vmatprep.subr.mxu0 0.0
    %1110 = vmatpush1.msra.mxu0 0.0
    %1111 = vmatprep.subr.mxu0 0.0
    %1112 = vmatpush1.msra.mxu0 0.0
    %1113 = vmatprep.subr.mxu0 0.0
    %1114 = vmatpush1.msra.mxu0 0.0
    %1115 = vmatprep.subr.mxu0 0.0
    %1116 = vmatpush1.msra.mxu0 0.0
    %1117 = vmatprep.subr.mxu0 0.0
    %1118 = vmatpush1.msra.mxu0 0.0
    %1119 = vmatprep.subr.mxu0 0.0
    %1120 = vmatpush1.msra.mxu0 0.0
    %1121 = vmatprep.subr.mxu0 0.0
    %1122 = vmatpush1.msra.mxu0 0.0
    %1123 = vmatprep.subr.mxu0 0.0
    %1124 = vmatpush1.msra.mxu0 0.0
    %1125 = vmatprep.subr.mxu0 0.0
    %1126 = vmatpush1.msra.mxu0 0.0
    %1127 = vmatprep.subr.mxu0 0.0
    %1128 = vmatpush1.msra.mxu0 0.0
    %1129 = vmatprep.subr.mxu0 0.0
    %1130 = vmatpush1.msra.mxu0 0.0
    %1131 = vmatprep.subr.mxu0 0.0
    %1132 = vmatpush1.msra.mxu0 0.0
    %1133 = vmatprep.subr.mxu0 0.0
    %1134 = vmatpush1.msra.mxu0 0.0
    %1135 = vmatprep.subr.mxu0 0.0
    %1136 = vmatpush1.msra.mxu0 0.0
    %1137 = vmatprep.subr.mxu0 0.0
    %1138 = vmatpush1.msra.mxu0 0.0
    %1139 = vmatprep.subr.mxu0 0.0
    %1140 = vmatpush1.msra.mxu0 0.0
    %1141 = vmatprep.subr.mxu0 0.0
    %1142 = vmatpush1.msra.mxu0 0.0
    %1143 = vmatprep.subr.mxu0 0.0
    %1144 = vmatpush1.msra.mxu0 0.0
    %1145 = vmatprep.mubr.f32.mxu0 0.0
    %1146 = vmatmul.mubr.f32.gmra.mrb[0].mxu0 %v1079
    %v1147 = vpop.f32.mrb[0].mxu0
    %v1148 = vadd.f32 0.0, %v1147
    %v1149 = vpop.f32.mrb[0].mxu0
    %v1150 = vadd.f32 0.0, %v1149
    %1151 = vdwg.mxu0
    %v1154 = vrot.slane %v1148, 2
    %v1155 = vrot.slane %v1150, 2
    %v1158 = vadd.f32 %v280, %v1154
    %v1159 = vadd.f32 %v281, %v1155
    %v1160 = vxor.u32 %v1158, 2147483648
    %v1161 = vxor.u32 %v1159, 2147483648
    %v1162 = vmul.f32 %v1160, 1.442695
    %v1163 = vpow.pop %v1162
    %v1164 = vmul.f32 %v1161, 1.442695
    %v1165 = vpow.pop %v1164
    %v1166 = vadd.f32 %v1163, 1.0
    %v1167 = vadd.f32 %v1165, 1.0
    %v1168 = vrcp.pop %v1166
    %v1169 = vmul.f32 1.0, %v1168
    %v1170 = vrcp.pop %v1167
    %v1171 = vmul.f32 1.0, %v1170
    %v1172 = vtanh.pop %v1159
    %v1174 = vrot.slane %v1070, 6
    %v1176 = vmul.f32 %v1169, %v1174
    %1178 = vrot.lane.b32.xlu0 %v1172, 64
    %v1179 = vpop.permute.xlu0 %1178
    %v1181 = vmul.f32 %v1169, %v1179
    %1183 = vrot.lane.b32.xlu0 %v1181, 64
    %v1184 = vpop.permute.xlu0 %1183
    %v1186 = vadd.f32 %v1176, %v1184
    %v1187 = vtanh.pop %v1186
    %1189 = vrot.lane.b32.xlu0 %v1187, 64
    %v1190 = vpop.permute.xlu0 %1189
    %v1192 = vmul.f32 %v1171, %v1190
    %v1194 = vrot.slane %v1192, 6
    %v1196 = vsel %vm119, %v388, %v1194
    %v1197 = vrot.slane %v1076, 2
    %v1199 = vsel %vm119, %v503, %v1197
    %v1200 = vrot.slane %v960, 6
    %v1202 = vsel %vm119, %v619, %v1200
    %v1203 = vrot.slane %v845, 2
    %v1205 = vsel %vm119, %v735, %v1203
    %v1207 = vsel %vm119, %v845, %v737
    %v1208 = vrot.slane %v619, 2
    %v1210 = vsel %vm119, %v960, %v1208
    %v1211 = vrot.slane %v503, 6
    %v1213 = vsel %vm119, %v1076, %v1211
    %v1214 = vrot.slane %v388, 2
    %v1216 = vsel %vm119, %v1192, %v1214
    %vm1217 = vcmask 1041408
    %v1218 = vsel %vm1217, %v1196, %v1199
    %vm1219 = vcmask 1043456
    %v1220 = vsel %vm1219, %v1218, %v1202
    %vm1221 = vcmask 1045504
    %v1222 = vsel %vm1221, %v1220, %v1205
    %v1223 = vsel %vm1217, %v1207, %v1210
    %v1224 = vsel %vm1219, %v1223, %v1213
    %v1225 = vsel %vm1221, %v1224, %v1216
    %v1226 = vld [vmem:[#allocation9] sm:$0xff]
    %v1227 = vld [vmem:[#allocation9 + $0x8] sm:$0xff]
    %v1228 = vld [vmem:[#allocation9 + $0x10] sm:$0xff]
    %v1229 = vld [vmem:[#allocation9 + $0x18] sm:$0xff]
    %v1230 = vld [vmem:[#allocation9 + $0x20] sm:$0xff]
    %v1231 = vld [vmem:[#allocation9 + $0x28] sm:$0xff]
    %v1232 = vld [vmem:[#allocation9 + $0x30] sm:$0xff]
    %v1233 = vld [vmem:[#allocation9 + $0x38] sm:$0xff]
    %v1234 = vld [vmem:[#allocation9 + $0x40] sm:$0xff]
    %v1235 = vld [vmem:[#allocation9 + $0x48] sm:$0xff]
    %v1236 = vld [vmem:[#allocation9 + $0x50] sm:$0xff]
    %v1237 = vld [vmem:[#allocation9 + $0x58] sm:$0xff]
    %v1238 = vld [vmem:[#allocation9 + $0x60] sm:$0xff]
    %v1239 = vld [vmem:[#allocation9 + $0x68] sm:$0xff]
    %v1240 = vld [vmem:[#allocation9 + $0x70] sm:$0xff]
    %v1241 = vld [vmem:[#allocation9 + $0x78] sm:$0xff]
    %v1242 = vld [vmem:[#allocation10] sm:$0xff]
    %v1243 = vld [vmem:[#allocation10 + $0x8] sm:$0xff]
    %v1244 = vld [vmem:[#allocation10 + $0x10] sm:$0xff]
    %v1245 = vld [vmem:[#allocation10 + $0x18] sm:$0xff]
    %v1246 = vld [vmem:[#allocation10 + $0x20] sm:$0xff]
    %v1247 = vld [vmem:[#allocation10 + $0x28] sm:$0xff]
    %v1248 = vld [vmem:[#allocation10 + $0x30] sm:$0xff]
    %v1249 = vld [vmem:[#allocation10 + $0x38] sm:$0xff]
    %v1250 = vld [vmem:[#allocation10 + $0x40] sm:$0xff]
    %v1251 = vld [vmem:[#allocation10 + $0x48] sm:$0xff]
    %v1252 = vld [vmem:[#allocation10 + $0x50] sm:$0xff]
    %v1253 = vld [vmem:[#allocation10 + $0x58] sm:$0xff]
    %v1254 = vld [vmem:[#allocation10 + $0x60] sm:$0xff]
    %v1255 = vld [vmem:[#allocation10 + $0x68] sm:$0xff]
    %v1256 = vld [vmem:[#allocation10 + $0x70] sm:$0xff]
    %v1257 = vld [vmem:[#allocation10 + $0x78] sm:$0xff]
    %v1258 = vld [vmem:[%s6] sm:$0x3]
    %v1260 = vlaneseq
    %v1261 = vshrl.u32 %v1260, 7
    %v1262 = vsub.s32 0, %v1261
    %v1263 = vrot.slane %v1258, %v1262
    %v1264 = vlaneseq
    %v1265 = vshrl.u32 %v1264, 7
    %v1266 = vsub.s32 1, %v1265
    %v1267 = vrot.slane %v1258, %v1266
    %v1271 = vsel %vm282, %v1222, 0
    %v1274 = vsel %vm282, %v1225, 0
    %1276 = vmatprep.subr.mxu0 %v1227
    %1277 = vmatpush1.msra.mxu0 %v1226
    %1278 = vmatprep.subr.mxu0 %v1229
    %1279 = vmatpush1.msra.mxu0 %v1228
    %1280 = vmatprep.subr.mxu0 %v1231
    %1281 = vmatpush1.msra.mxu0 %v1230
    %1282 = vmatprep.subr.mxu0 %v1233
    %1283 = vmatpush1.msra.mxu0 %v1232
    %1284 = vmatprep.subr.mxu0 %v1235
    %1285 = vmatpush1.msra.mxu0 %v1234
    %1286 = vmatprep.subr.mxu0 %v1237
    %1287 = vmatpush1.msra.mxu0 %v1236
    %1288 = vmatprep.subr.mxu0 %v1239
    %1289 = vmatpush1.msra.mxu0 %v1238
    %1290 = vmatprep.subr.mxu0 %v1241
    %1291 = vmatpush1.msra.mxu0 %v1240
    %1292 = vmatprep.subr.mxu0 0.0
    %1293 = vmatpush1.msra.mxu0 0.0
    %1294 = vmatprep.subr.mxu0 0.0
    %1295 = vmatpush1.msra.mxu0 0.0
    %1296 = vmatprep.subr.mxu0 0.0
    %1297 = vmatpush1.msra.mxu0 0.0
    %1298 = vmatprep.subr.mxu0 0.0
    %1299 = vmatpush1.msra.mxu0 0.0
    %1300 = vmatprep.subr.mxu0 0.0
    %1301 = vmatpush1.msra.mxu0 0.0
    %1302 = vmatprep.subr.mxu0 0.0
    %1303 = vmatpush1.msra.mxu0 0.0
    %1304 = vmatprep.subr.mxu0 0.0
    %1305 = vmatpush1.msra.mxu0 0.0
    %1306 = vmatprep.subr.mxu0 0.0
    %1307 = vmatpush1.msra.mxu0 0.0
    %1308 = vmatprep.subr.mxu0 0.0
    %1309 = vmatpush1.msra.mxu0 0.0
    %1310 = vmatprep.subr.mxu0 0.0
    %1311 = vmatpush1.msra.mxu0 0.0
    %1312 = vmatprep.subr.mxu0 0.0
    %1313 = vmatpush1.msra.mxu0 0.0
    %1314 = vmatprep.subr.mxu0 0.0
    %1315 = vmatpush1.msra.mxu0 0.0
    %1316 = vmatprep.subr.mxu0 0.0
    %1317 = vmatpush1.msra.mxu0 0.0
    %1318 = vmatprep.subr.mxu0 0.0
    %1319 = vmatpush1.msra.mxu0 0.0
    %1320 = vmatprep.subr.mxu0 0.0
    %1321 = vmatpush1.msra.mxu0 0.0
    %1322 = vmatprep.subr.mxu0 0.0
    %1323 = vmatpush1.msra.mxu0 0.0
    %1324 = vmatprep.subr.mxu0 0.0
    %1325 = vmatpush1.msra.mxu0 0.0
    %1326 = vmatprep.subr.mxu0 0.0
    %1327 = vmatpush1.msra.mxu0 0.0
    %1328 = vmatprep.subr.mxu0 0.0
    %1329 = vmatpush1.msra.mxu0 0.0
    %1330 = vmatprep.subr.mxu0 0.0
    %1331 = vmatpush1.msra.mxu0 0.0
    %1332 = vmatprep.subr.mxu0 0.0
    %1333 = vmatpush1.msra.mxu0 0.0
    %1334 = vmatprep.subr.mxu0 0.0
    %1335 = vmatpush1.msra.mxu0 0.0
    %1336 = vmatprep.subr.mxu0 0.0
    %1337 = vmatpush1.msra.mxu0 0.0
    %1338 = vmatprep.subr.mxu0 0.0
    %1339 = vmatpush1.msra.mxu0 0.0
    %1340 = vmatprep.mubr.f32.mxu0 0.0
    %1341 = vmatmul.mubr.f32.gmra.mrb[0].mxu0 %v1271
    %v1342 = vpop.f32.mrb[0].mxu0
    %v1343 = vadd.f32 %v1263, %v1342
    %v1344 = vpop.f32.mrb[0].mxu0
    %v1345 = vadd.f32 %v1267, %v1344
    %1346 = vmatprep.mubr.f32.mxu0 0.0
    %1347 = vmatmul.mubr.f32.gmra.mrb[0].mxu0 %v1274
    %v1348 = vpop.f32.mrb[0].mxu0
    %v1349 = vadd.f32 %v1263, %v1348
    %v1350 = vpop.f32.mrb[0].mxu0
    %v1351 = vadd.f32 %v1267, %v1350
    %1352 = vdwg.mxu0
    %v1355 = vrot.slane %v1349, 6
    %v1356 = vrot.slane %v1351, 6
    %v1359 = vsel %vm117, %v1343, %v1355
    %v1360 = vsel %vm118, %v1345, %v1356
    %v1361 = vrot.slane %v1349, 2
    %v1362 = vrot.slane %v1351, 2
    %v1365 = vsel %vm117, %v1343, %v1361
    %v1366 = vsel %vm118, %v1345, %v1362
    %v1369 = vrot.slane %v1343, 6
    %v1370 = vrot.slane %v1345, 6
    %v1373 = vsel %vm117, %v1349, %v1369
    %v1374 = vsel %vm118, %v1351, %v1370
    %v1375 = vrot.slane %v1343, 2
    %v1376 = vrot.slane %v1345, 2
    %v1379 = vsel %vm117, %v1349, %v1375
    %v1380 = vsel %vm118, %v1351, %v1376
    %1381 = vmatprep.subr.mxu0 %v1243
    %1382 = vmatpush1.msra.mxu0 %v1242
    %1383 = vmatprep.subr.mxu0 %v1245
    %1384 = vmatpush1.msra.mxu0 %v1244
    %1385 = vmatprep.subr.mxu0 %v1247
    %1386 = vmatpush1.msra.mxu0 %v1246
    %1387 = vmatprep.subr.mxu0 %v1249
    %1388 = vmatpush1.msra.mxu0 %v1248
    %1389 = vmatprep.subr.mxu0 %v1251
    %1390 = vmatpush1.msra.mxu0 %v1250
    %1391 = vmatprep.subr.mxu0 %v1253
    %1392 = vmatpush1.msra.mxu0 %v1252
    %1393 = vmatprep.subr.mxu0 %v1255
    %1394 = vmatpush1.msra.mxu0 %v1254
    %1395 = vmatprep.subr.mxu0 %v1257
    %1396 = vmatpush1.msra.mxu0 %v1256
    %1397 = vmatprep.subr.mxu0 0.0
    %1398 = vmatpush1.msra.mxu0 0.0
    %1399 = vmatprep.subr.mxu0 0.0
    %1400 = vmatpush1.msra.mxu0 0.0
    %1401 = vmatprep.subr.mxu0 0.0
    %1402 = vmatpush1.msra.mxu0 0.0
    %1403 = vmatprep.subr.mxu0 0.0
    %1404 = vmatpush1.msra.mxu0 0.0
    %1405 = vmatprep.subr.mxu0 0.0
    %1406 = vmatpush1.msra.mxu0 0.0
    %1407 = vmatprep.subr.mxu0 0.0
    %1408 = vmatpush1.msra.mxu0 0.0
    %1409 = vmatprep.subr.mxu0 0.0
    %1410 = vmatpush1.msra.mxu0 0.0
    %1411 = vmatprep.subr.mxu0 0.0
    %1412 = vmatpush1.msra.mxu0 0.0
    %1413 = vmatprep.subr.mxu0 0.0
    %1414 = vmatpush1.msra.mxu0 0.0
    %1415 = vmatprep.subr.mxu0 0.0
    %1416 = vmatpush1.msra.mxu0 0.0
    %1417 = vmatprep.subr.mxu0 0.0
    %1418 = vmatpush1.msra.mxu0 0.0
    %1419 = vmatprep.subr.mxu0 0.0
    %1420 = vmatpush1.msra.mxu0 0.0
    %1421 = vmatprep.subr.mxu0 0.0
    %1422 = vmatpush1.msra.mxu0 0.0
    %1423 = vmatprep.subr.mxu0 0.0
    %1424 = vmatpush1.msra.mxu0 0.0
    %1425 = vmatprep.subr.mxu0 0.0
    %1426 = vmatpush1.msra.mxu0 0.0
    %1427 = vmatprep.subr.mxu0 0.0
    %1428 = vmatpush1.msra.mxu0 0.0
    %1429 = vmatprep.subr.mxu0 0.0
    %1430 = vmatpush1.msra.mxu0 0.0
    %1431 = vmatprep.subr.mxu0 0.0
    %1432 = vmatpush1.msra.mxu0 0.0
    %1433 = vmatprep.subr.mxu0 0.0
    %1434 = vmatpush1.msra.mxu0 0.0
    %1435 = vmatprep.subr.mxu0 0.0
    %1436 = vmatpush1.msra.mxu0 0.0
    %1437 = vmatprep.subr.mxu0 0.0
    %1438 = vmatpush1.msra.mxu0 0.0
    %1439 = vmatprep.subr.mxu0 0.0
    %1440 = vmatpush1.msra.mxu0 0.0
    %1441 = vmatprep.subr.mxu0 0.0
    %1442 = vmatpush1.msra.mxu0 0.0
    %1443 = vmatprep.subr.mxu0 0.0
    %1444 = vmatpush1.msra.mxu0 0.0
    %1445 = vmatprep.mubr.f32.mxu0 0.0
    %1446 = vmatmul.mubr.f32.gmra.mrb[0].mxu0 %v284
    %v1447 = vpop.f32.mrb[0].mxu0
    %v1448 = vadd.f32 0.0, %v1447
    %v1449 = vpop.f32.mrb[0].mxu0
    %v1450 = vadd.f32 0.0, %v1449
    %1451 = vdwg.mxu0
    %v1452 = vadd.f32 %v1359, %v1448
    %v1453 = vadd.f32 %v1360, %v1450
    %v1454 = vxor.u32 %v1452, 2147483648
    %v1455 = vxor.u32 %v1453, 2147483648
    %v1456 = vmul.f32 %v1454, 1.442695
    %v1457 = vpow.pop %v1456
    %v1458 = vmul.f32 %v1455, 1.442695
    %v1459 = vpow.pop %v1458
    %v1460 = vadd.f32 %v1457, 1.0
    %v1461 = vadd.f32 %v1459, 1.0
    %v1462 = vrcp.pop %v1460
    %v1463 = vmul.f32 1.0, %v1462
    %v1464 = vrcp.pop %v1461
    %v1465 = vmul.f32 1.0, %v1464
    %v1466 = vtanh.pop %v1453
    %v1467 = vmul.f32 %v1463, 0.0
    %1469 = vrot.lane.b32.xlu0 %v1466, 64
    %v1470 = vpop.permute.xlu0 %1469
    %v1472 = vmul.f32 %v1463, %v1470
    %1474 = vrot.lane.b32.xlu0 %v1472, 64
    %v1475 = vpop.permute.xlu0 %1474
    %v1477 = vadd.f32 %v1467, %v1475
    %v1478 = vtanh.pop %v1477
    %1480 = vrot.lane.b32.xlu0 %v1478, 64
    %v1481 = vpop.permute.xlu0 %1480
    %v1483 = vmul.f32 %v1465, %v1481
    %v1485 = vsel %vm282, %v1483, 0
    %1487 = vmatprep.subr.mxu0 %v1243
    %1488 = vmatpush1.msra.mxu0 %v1242
    %1489 = vmatprep.subr.mxu0 %v1245
    %1490 = vmatpush1.msra.mxu0 %v1244
    %1491 = vmatprep.subr.mxu0 %v1247
    %1492 = vmatpush1.msra.mxu0 %v1246
    %1493 = vmatprep.subr.mxu0 %v1249
    %1494 = vmatpush1.msra.mxu0 %v1248
    %1495 = vmatprep.subr.mxu0 %v1251
    %1496 = vmatpush1.msra.mxu0 %v1250
    %1497 = vmatprep.subr.mxu0 %v1253
    %1498 = vmatpush1.msra.mxu0 %v1252
    %1499 = vmatprep.subr.mxu0 %v1255
    %1500 = vmatpush1.msra.mxu0 %v1254
    %1501 = vmatprep.subr.mxu0 %v1257
    %1502 = vmatpush1.msra.mxu0 %v1256
    %1503 = vmatprep.subr.mxu0 0.0
    %1504 = vmatpush1.msra.mxu0 0.0
    %1505 = vmatprep.subr.mxu0 0.0
    %1506 = vmatpush1.msra.mxu0 0.0
    %1507 = vmatprep.subr.mxu0 0.0
    %1508 = vmatpush1.msra.mxu0 0.0
    %1509 = vmatprep.subr.mxu0 0.0
    %1510 = vmatpush1.msra.mxu0 0.0
    %1511 = vmatprep.subr.mxu0 0.0
    %1512 = vmatpush1.msra.mxu0 0.0
    %1513 = vmatprep.subr.mxu0 0.0
    %1514 = vmatpush1.msra.mxu0 0.0
    %1515 = vmatprep.subr.mxu0 0.0
    %1516 = vmatpush1.msra.mxu0 0.0
    %1517 = vmatprep.subr.mxu0 0.0
    %1518 = vmatpush1.msra.mxu0 0.0
    %1519 = vmatprep.subr.mxu0 0.0
    %1520 = vmatpush1.msra.mxu0 0.0
    %1521 = vmatprep.subr.mxu0 0.0
    %1522 = vmatpush1.msra.mxu0 0.0
    %1523 = vmatprep.subr.mxu0 0.0
    %1524 = vmatpush1.msra.mxu0 0.0
    %1525 = vmatprep.subr.mxu0 0.0
    %1526 = vmatpush1.msra.mxu0 0.0
    %1527 = vmatprep.subr.mxu0 0.0
    %1528 = vmatpush1.msra.mxu0 0.0
    %1529 = vmatprep.subr.mxu0 0.0
    %1530 = vmatpush1.msra.mxu0 0.0
    %1531 = vmatprep.subr.mxu0 0.0
    %1532 = vmatpush1.msra.mxu0 0.0
    %1533 = vmatprep.subr.mxu0 0.0
    %1534 = vmatpush1.msra.mxu0 0.0
    %1535 = vmatprep.subr.mxu0 0.0
    %1536 = vmatpush1.msra.mxu0 0.0
    %1537 = vmatprep.subr.mxu0 0.0
    %1538 = vmatpush1.msra.mxu0 0.0
    %1539 = vmatprep.subr.mxu0 0.0
    %1540 = vmatpush1.msra.mxu0 0.0
    %1541 = vmatprep.subr.mxu0 0.0
    %1542 = vmatpush1.msra.mxu0 0.0
    %1543 = vmatprep.subr.mxu0 0.0
    %1544 = vmatpush1.msra.mxu0 0.0
    %1545 = vmatprep.subr.mxu0 0.0
    %1546 = vmatpush1.msra.mxu0 0.0
    %1547 = vmatprep.subr.mxu0 0.0
    %1548 = vmatpush1.msra.mxu0 0.0
    %1549 = vmatprep.subr.mxu0 0.0
    %1550 = vmatpush1.msra.mxu0 0.0
    %1551 = vmatprep.mubr.f32.mxu0 0.0
    %1552 = vmatmul.mubr.f32.gmra.mrb[0].mxu0 %v1485
    %v1553 = vpop.f32.mrb[0].mxu0
    %v1554 = vadd.f32 0.0, %v1553
    %v1555 = vpop.f32.mrb[0].mxu0
    %v1556 = vadd.f32 0.0, %v1555
    %1557 = vdwg.mxu0
    %v1560 = vrot.slane %v1554, 6
    %v1561 = vrot.slane %v1556, 6
    %v1564 = vadd.f32 %v1365, %v1560
    %v1565 = vadd.f32 %v1366, %v1561
    %v1566 = vxor.u32 %v1564, 2147483648
    %v1567 = vxor.u32 %v1565, 2147483648
    %v1568 = vmul.f32 %v1566, 1.442695
    %v1569 = vpow.pop %v1568
    %v1570 = vmul.f32 %v1567, 1.442695
    %v1571 = vpow.pop %v1570
    %v1572 = vadd.f32 %v1569, 1.0
    %v1573 = vadd.f32 %v1571, 1.0
    %v1574 = vrcp.pop %v1572
    %v1575 = vmul.f32 1.0, %v1574
    %v1576 = vrcp.pop %v1573
    %v1577 = vmul.f32 1.0, %v1576
    %v1578 = vtanh.pop %v1565
    %v1580 = vrot.slane %v1477, 6
    %v1582 = vmul.f32 %v1575, %v1580
    %1584 = vrot.lane.b32.xlu0 %v1578, 64
    %v1585 = vpop.permute.xlu0 %1584
    %v1587 = vmul.f32 %v1575, %v1585
    %1589 = vrot.lane.b32.xlu0 %v1587, 64
    %v1590 = vpop.permute.xlu0 %1589
    %v1592 = vadd.f32 %v1582, %v1590
    %v1593 = vtanh.pop %v1592
    %1595 = vrot.lane.b32.xlu0 %v1593, 64
    %v1596 = vpop.permute.xlu0 %1595
    %v1598 = vmul.f32 %v1577, %v1596
    %v1600 = vrot.slane %v1598, 2
    %v1601 = vsel %vm282, %v1600, 0
    %1603 = vmatprep.subr.mxu0 %v1243
    %1604 = vmatpush1.msra.mxu0 %v1242
    %1605 = vmatprep.subr.mxu0 %v1245
    %1606 = vmatpush1.msra.mxu0 %v1244
    %1607 = vmatprep.subr.mxu0 %v1247
    %1608 = vmatpush1.msra.mxu0 %v1246
    %1609 = vmatprep.subr.mxu0 %v1249
    %1610 = vmatpush1.msra.mxu0 %v1248
    %1611 = vmatprep.subr.mxu0 %v1251
    %1612 = vmatpush1.msra.mxu0 %v1250
    %1613 = vmatprep.subr.mxu0 %v1253
    %1614 = vmatpush1.msra.mxu0 %v1252
    %1615 = vmatprep.subr.mxu0 %v1255
    %1616 = vmatpush1.msra.mxu0 %v1254
    %1617 = vmatprep.subr.mxu0 %v1257
    %1618 = vmatpush1.msra.mxu0 %v1256
    %1619 = vmatprep.subr.mxu0 0.0
    %1620 = vmatpush1.msra.mxu0 0.0
    %1621 = vmatprep.subr.mxu0 0.0
    %1622 = vmatpush1.msra.mxu0 0.0
    %1623 = vmatprep.subr.mxu0 0.0
    %1624 = vmatpush1.msra.mxu0 0.0
    %1625 = vmatprep.subr.mxu0 0.0
    %1626 = vmatpush1.msra.mxu0 0.0
    %1627 = vmatprep.subr.mxu0 0.0
    %1628 = vmatpush1.msra.mxu0 0.0
    %1629 = vmatprep.subr.mxu0 0.0
    %1630 = vmatpush1.msra.mxu0 0.0
    %1631 = vmatprep.subr.mxu0 0.0
    %1632 = vmatpush1.msra.mxu0 0.0
    %1633 = vmatprep.subr.mxu0 0.0
    %1634 = vmatpush1.msra.mxu0 0.0
    %1635 = vmatprep.subr.mxu0 0.0
    %1636 = vmatpush1.msra.mxu0 0.0
    %1637 = vmatprep.subr.mxu0 0.0
    %1638 = vmatpush1.msra.mxu0 0.0
    %1639 = vmatprep.subr.mxu0 0.0
    %1640 = vmatpush1.msra.mxu0 0.0
    %1641 = vmatprep.subr.mxu0 0.0
    %1642 = vmatpush1.msra.mxu0 0.0
    %1643 = vmatprep.subr.mxu0 0.0
    %1644 = vmatpush1.msra.mxu0 0.0
    %1645 = vmatprep.subr.mxu0 0.0
    %1646 = vmatpush1.msra.mxu0 0.0
    %1647 = vmatprep.subr.mxu0 0.0
    %1648 = vmatpush1.msra.mxu0 0.0
    %1649 = vmatprep.subr.mxu0 0.0
    %1650 = vmatpush1.msra.mxu0 0.0
    %1651 = vmatprep.subr.mxu0 0.0
    %1652 = vmatpush1.msra.mxu0 0.0
    %1653 = vmatprep.subr.mxu0 0.0
    %1654 = vmatpush1.msra.mxu0 0.0
    %1655 = vmatprep.subr.mxu0 0.0
    %1656 = vmatpush1.msra.mxu0 0.0
    %1657 = vmatprep.subr.mxu0 0.0
    %1658 = vmatpush1.msra.mxu0 0.0
    %1659 = vmatprep.subr.mxu0 0.0
    %1660 = vmatpush1.msra.mxu0 0.0
    %1661 = vmatprep.subr.mxu0 0.0
    %1662 = vmatpush1.msra.mxu0 0.0
    %1663 = vmatprep.subr.mxu0 0.0
    %1664 = vmatpush1.msra.mxu0 0.0
    %1665 = vmatprep.subr.mxu0 0.0
    %1666 = vmatpush1.msra.mxu0 0.0
    %1667 = vmatprep.mubr.f32.mxu0 0.0
    %1668 = vmatmul.mubr.f32.gmra.mrb[0].mxu0 %v1601
    %v1669 = vpop.f32.mrb[0].mxu0
    %v1670 = vadd.f32 0.0, %v1669
    %v1671 = vpop.f32.mrb[0].mxu0
    %v1672 = vadd.f32 0.0, %v1671
    %1673 = vdwg.mxu0
    %v1676 = vrot.slane %v1670, 4
    %v1677 = vrot.slane %v1672, 4
    %v1680 = vadd.f32 %v1359, %v1676
    %v1681 = vadd.f32 %v1360, %v1677
    %v1682 = vxor.u32 %v1680, 2147483648
    %v1683 = vxor.u32 %v1681, 2147483648
    %v1684 = vmul.f32 %v1682, 1.442695
    %v1685 = vpow.pop %v1684
    %v1686 = vmul.f32 %v1683, 1.442695
    %v1687 = vpow.pop %v1686
    %v1688 = vadd.f32 %v1685, 1.0
    %v1689 = vadd.f32 %v1687, 1.0
    %v1690 = vrcp.pop %v1688
    %v1691 = vmul.f32 1.0, %v1690
    %v1692 = vrcp.pop %v1689
    %v1693 = vmul.f32 1.0, %v1692
    %v1694 = vtanh.pop %v1681
    %v1696 = vrot.slane %v1592, 6
    %v1698 = vmul.f32 %v1691, %v1696
    %1700 = vrot.lane.b32.xlu0 %v1694, 64
    %v1701 = vpop.permute.xlu0 %1700
    %v1703 = vmul.f32 %v1691, %v1701
    %1705 = vrot.lane.b32.xlu0 %v1703, 64
    %v1706 = vpop.permute.xlu0 %1705
    %v1708 = vadd.f32 %v1698, %v1706
    %v1709 = vtanh.pop %v1708
    %1711 = vrot.lane.b32.xlu0 %v1709, 64
    %v1712 = vpop.permute.xlu0 %1711
    %v1714 = vmul.f32 %v1693, %v1712
    %v1716 = vrot.slane %v1714, 4
    %v1717 = vsel %vm282, %v1716, 0
    %1719 = vmatprep.subr.mxu0 %v1243
    %1720 = vmatpush1.msra.mxu0 %v1242
    %1721 = vmatprep.subr.mxu0 %v1245
    %1722 = vmatpush1.msra.mxu0 %v1244
    %1723 = vmatprep.subr.mxu0 %v1247
    %1724 = vmatpush1.msra.mxu0 %v1246
    %1725 = vmatprep.subr.mxu0 %v1249
    %1726 = vmatpush1.msra.mxu0 %v1248
    %1727 = vmatprep.subr.mxu0 %v1251
    %1728 = vmatpush1.msra.mxu0 %v1250
    %1729 = vmatprep.subr.mxu0 %v1253
    %1730 = vmatpush1.msra.mxu0 %v1252
    %1731 = vmatprep.subr.mxu0 %v1255
    %1732 = vmatpush1.msra.mxu0 %v1254
    %1733 = vmatprep.subr.mxu0 %v1257
    %1734 = vmatpush1.msra.mxu0 %v1256
    %1735 = vmatprep.subr.mxu0 0.0
    %1736 = vmatpush1.msra.mxu0 0.0
    %1737 = vmatprep.subr.mxu0 0.0
    %1738 = vmatpush1.msra.mxu0 0.0
    %1739 = vmatprep.subr.mxu0 0.0
    %1740 = vmatpush1.msra.mxu0 0.0
    %1741 = vmatprep.subr.mxu0 0.0
    %1742 = vmatpush1.msra.mxu0 0.0
    %1743 = vmatprep.subr.mxu0 0.0
    %1744 = vmatpush1.msra.mxu0 0.0
    %1745 = vmatprep.subr.mxu0 0.0
    %1746 = vmatpush1.msra.mxu0 0.0
    %1747 = vmatprep.subr.mxu0 0.0
    %1748 = vmatpush1.msra.mxu0 0.0
    %1749 = vmatprep.subr.mxu0 0.0
    %1750 = vmatpush1.msra.mxu0 0.0
    %1751 = vmatprep.subr.mxu0 0.0
    %1752 = vmatpush1.msra.mxu0 0.0
    %1753 = vmatprep.subr.mxu0 0.0
    %1754 = vmatpush1.msra.mxu0 0.0
    %1755 = vmatprep.subr.mxu0 0.0
    %1756 = vmatpush1.msra.mxu0 0.0
    %1757 = vmatprep.subr.mxu0 0.0
    %1758 = vmatpush1.msra.mxu0 0.0
    %1759 = vmatprep.subr.mxu0 0.0
    %1760 = vmatpush1.msra.mxu0 0.0
    %1761 = vmatprep.subr.mxu0 0.0
    %1762 = vmatpush1.msra.mxu0 0.0
    %1763 = vmatprep.subr.mxu0 0.0
    %1764 = vmatpush1.msra.mxu0 0.0
    %1765 = vmatprep.subr.mxu0 0.0
    %1766 = vmatpush1.msra.mxu0 0.0
    %1767 = vmatprep.subr.mxu0 0.0
    %1768 = vmatpush1.msra.mxu0 0.0
    %1769 = vmatprep.subr.mxu0 0.0
    %1770 = vmatpush1.msra.mxu0 0.0
    %1771 = vmatprep.subr.mxu0 0.0
    %1772 = vmatpush1.msra.mxu0 0.0
    %1773 = vmatprep.subr.mxu0 0.0
    %1774 = vmatpush1.msra.mxu0 0.0
    %1775 = vmatprep.subr.mxu0 0.0
    %1776 = vmatpush1.msra.mxu0 0.0
    %1777 = vmatprep.subr.mxu0 0.0
    %1778 = vmatpush1.msra.mxu0 0.0
    %1779 = vmatprep.subr.mxu0 0.0
    %1780 = vmatpush1.msra.mxu0 0.0
    %1781 = vmatprep.subr.mxu0 0.0
    %1782 = vmatpush1.msra.mxu0 0.0
    %1783 = vmatprep.mubr.f32.mxu0 0.0
    %1784 = vmatmul.mubr.f32.gmra.mrb[0].mxu0 %v1717
    %v1785 = vpop.f32.mrb[0].mxu0
    %v1786 = vadd.f32 0.0, %v1785
    %v1787 = vpop.f32.mrb[0].mxu0
    %v1788 = vadd.f32 0.0, %v1787
    %1789 = vdwg.mxu0
    %v1792 = vrot.slane %v1786, 2
    %v1793 = vrot.slane %v1788, 2
    %v1796 = vadd.f32 %v1365, %v1792
    %v1797 = vadd.f32 %v1366, %v1793
    %v1798 = vxor.u32 %v1796, 2147483648
    %v1799 = vxor.u32 %v1797, 2147483648
    %v1800 = vmul.f32 %v1798, 1.442695
    %v1801 = vpow.pop %v1800
    %v1802 = vmul.f32 %v1799, 1.442695
    %v1803 = vpow.pop %v1802
    %v1804 = vadd.f32 %v1801, 1.0
    %v1805 = vadd.f32 %v1803, 1.0
    %v1806 = vrcp.pop %v1804
    %v1807 = vmul.f32 1.0, %v1806
    %v1808 = vrcp.pop %v1805
    %v1809 = vmul.f32 1.0, %v1808
    %v1810 = vtanh.pop %v1797
    %v1812 = vrot.slane %v1708, 6
    %v1814 = vmul.f32 %v1807, %v1812
    %1816 = vrot.lane.b32.xlu0 %v1810, 64
    %v1817 = vpop.permute.xlu0 %1816
    %v1819 = vmul.f32 %v1807, %v1817
    %1821 = vrot.lane.b32.xlu0 %v1819, 64
    %v1822 = vpop.permute.xlu0 %1821
    %v1824 = vadd.f32 %v1814, %v1822
    %v1825 = vtanh.pop %v1824
    %1827 = vrot.lane.b32.xlu0 %v1825, 64
    %v1828 = vpop.permute.xlu0 %1827
    %v1830 = vmul.f32 %v1809, %v1828
    %v1832 = vrot.slane %v1830, 6
    %v1833 = vsel %vm282, %v1832, 0
    %1835 = vmatprep.subr.mxu0 %v1243
    %1836 = vmatpush1.msra.mxu0 %v1242
    %1837 = vmatprep.subr.mxu0 %v1245
    %1838 = vmatpush1.msra.mxu0 %v1244
    %1839 = vmatprep.subr.mxu0 %v1247
    %1840 = vmatpush1.msra.mxu0 %v1246
    %1841 = vmatprep.subr.mxu0 %v1249
    %1842 = vmatpush1.msra.mxu0 %v1248
    %1843 = vmatprep.subr.mxu0 %v1251
    %1844 = vmatpush1.msra.mxu0 %v1250
    %1845 = vmatprep.subr.mxu0 %v1253
    %1846 = vmatpush1.msra.mxu0 %v1252
    %1847 = vmatprep.subr.mxu0 %v1255
    %1848 = vmatpush1.msra.mxu0 %v1254
    %1849 = vmatprep.subr.mxu0 %v1257
    %1850 = vmatpush1.msra.mxu0 %v1256
    %1851 = vmatprep.subr.mxu0 0.0
    %1852 = vmatpush1.msra.mxu0 0.0
    %1853 = vmatprep.subr.mxu0 0.0
    %1854 = vmatpush1.msra.mxu0 0.0
    %1855 = vmatprep.subr.mxu0 0.0
    %1856 = vmatpush1.msra.mxu0 0.0
    %1857 = vmatprep.subr.mxu0 0.0
    %1858 = vmatpush1.msra.mxu0 0.0
    %1859 = vmatprep.subr.mxu0 0.0
    %1860 = vmatpush1.msra.mxu0 0.0
    %1861 = vmatprep.subr.mxu0 0.0
    %1862 = vmatpush1.msra.mxu0 0.0
    %1863 = vmatprep.subr.mxu0 0.0
    %1864 = vmatpush1.msra.mxu0 0.0
    %1865 = vmatprep.subr.mxu0 0.0
    %1866 = vmatpush1.msra.mxu0 0.0
    %1867 = vmatprep.subr.mxu0 0.0
    %1868 = vmatpush1.msra.mxu0 0.0
    %1869 = vmatprep.subr.mxu0 0.0
    %1870 = vmatpush1.msra.mxu0 0.0
    %1871 = vmatprep.subr.mxu0 0.0
    %1872 = vmatpush1.msra.mxu0 0.0
    %1873 = vmatprep.subr.mxu0 0.0
    %1874 = vmatpush1.msra.mxu0 0.0
    %1875 = vmatprep.subr.mxu0 0.0
    %1876 = vmatpush1.msra.mxu0 0.0
    %1877 = vmatprep.subr.mxu0 0.0
    %1878 = vmatpush1.msra.mxu0 0.0
    %1879 = vmatprep.subr.mxu0 0.0
    %1880 = vmatpush1.msra.mxu0 0.0
    %1881 = vmatprep.subr.mxu0 0.0
    %1882 = vmatpush1.msra.mxu0 0.0
    %1883 = vmatprep.subr.mxu0 0.0
    %1884 = vmatpush1.msra.mxu0 0.0
    %1885 = vmatprep.subr.mxu0 0.0
    %1886 = vmatpush1.msra.mxu0 0.0
    %1887 = vmatprep.subr.mxu0 0.0
    %1888 = vmatpush1.msra.mxu0 0.0
    %1889 = vmatprep.subr.mxu0 0.0
    %1890 = vmatpush1.msra.mxu0 0.0
    %1891 = vmatprep.subr.mxu0 0.0
    %1892 = vmatpush1.msra.mxu0 0.0
    %1893 = vmatprep.subr.mxu0 0.0
    %1894 = vmatpush1.msra.mxu0 0.0
    %1895 = vmatprep.subr.mxu0 0.0
    %1896 = vmatpush1.msra.mxu0 0.0
    %1897 = vmatprep.subr.mxu0 0.0
    %1898 = vmatpush1.msra.mxu0 0.0
    %1899 = vmatprep.mubr.f32.mxu0 0.0
    %1900 = vmatmul.mubr.f32.gmra.mrb[0].mxu0 %v1833
    %v1901 = vpop.f32.mrb[0].mxu0
    %v1902 = vadd.f32 0.0, %v1901
    %v1903 = vpop.f32.mrb[0].mxu0
    %v1904 = vadd.f32 0.0, %v1903
    %1905 = vdwg.mxu0
    %v1906 = vadd.f32 %v1373, %v1902
    %v1907 = vadd.f32 %v1374, %v1904
    %v1908 = vxor.u32 %v1906, 2147483648
    %v1909 = vxor.u32 %v1907, 2147483648
    %v1910 = vmul.f32 %v1908, 1.442695
    %v1911 = vpow.pop %v1910
    %v1912 = vmul.f32 %v1909, 1.442695
    %v1913 = vpow.pop %v1912
    %v1914 = vadd.f32 %v1911, 1.0
    %v1915 = vadd.f32 %v1913, 1.0
    %v1916 = vrcp.pop %v1914
    %v1917 = vmul.f32 1.0, %v1916
    %v1918 = vrcp.pop %v1915
    %v1919 = vmul.f32 1.0, %v1918
    %v1920 = vtanh.pop %v1907
    %v1922 = vrot.slane %v1824, 6
    %v1924 = vmul.f32 %v1917, %v1922
    %1926 = vrot.lane.b32.xlu0 %v1920, 64
    %v1927 = vpop.permute.xlu0 %1926
    %v1929 = vmul.f32 %v1917, %v1927
    %1931 = vrot.lane.b32.xlu0 %v1929, 64
    %v1932 = vpop.permute.xlu0 %1931
    %v1934 = vadd.f32 %v1924, %v1932
    %v1935 = vtanh.pop %v1934
    %1937 = vrot.lane.b32.xlu0 %v1935, 64
    %v1938 = vpop.permute.xlu0 %1937
    %v1940 = vmul.f32 %v1919, %v1938
    %v1942 = vsel %vm282, %v1940, 0
    %1944 = vmatprep.subr.mxu0 %v1243
    %1945 = vmatpush1.msra.mxu0 %v1242
    %1946 = vmatprep.subr.mxu0 %v1245
    %1947 = vmatpush1.msra.mxu0 %v1244
    %1948 = vmatprep.subr.mxu0 %v1247
    %1949 = vmatpush1.msra.mxu0 %v1246
    %1950 = vmatprep.subr.mxu0 %v1249
    %1951 = vmatpush1.msra.mxu0 %v1248
    %1952 = vmatprep.subr.mxu0 %v1251
    %1953 = vmatpush1.msra.mxu0 %v1250
    %1954 = vmatprep.subr.mxu0 %v1253
    %1955 = vmatpush1.msra.mxu0 %v1252
    %1956 = vmatprep.subr.mxu0 %v1255
    %1957 = vmatpush1.msra.mxu0 %v1254
    %1958 = vmatprep.subr.mxu0 %v1257
    %1959 = vmatpush1.msra.mxu0 %v1256
    %1960 = vmatprep.subr.mxu0 0.0
    %1961 = vmatpush1.msra.mxu0 0.0
    %1962 = vmatprep.subr.mxu0 0.0
    %1963 = vmatpush1.msra.mxu0 0.0
    %1964 = vmatprep.subr.mxu0 0.0
    %1965 = vmatpush1.msra.mxu0 0.0
    %1966 = vmatprep.subr.mxu0 0.0
    %1967 = vmatpush1.msra.mxu0 0.0
    %1968 = vmatprep.subr.mxu0 0.0
    %1969 = vmatpush1.msra.mxu0 0.0
    %1970 = vmatprep.subr.mxu0 0.0
    %1971 = vmatpush1.msra.mxu0 0.0
    %1972 = vmatprep.subr.mxu0 0.0
    %1973 = vmatpush1.msra.mxu0 0.0
    %1974 = vmatprep.subr.mxu0 0.0
    %1975 = vmatpush1.msra.mxu0 0.0
    %1976 = vmatprep.subr.mxu0 0.0
    %1977 = vmatpush1.msra.mxu0 0.0
    %1978 = vmatprep.subr.mxu0 0.0
    %1979 = vmatpush1.msra.mxu0 0.0
    %1980 = vmatprep.subr.mxu0 0.0
    %1981 = vmatpush1.msra.mxu0 0.0
    %1982 = vmatprep.subr.mxu0 0.0
    %1983 = vmatpush1.msra.mxu0 0.0
    %1984 = vmatprep.subr.mxu0 0.0
    %1985 = vmatpush1.msra.mxu0 0.0
    %1986 = vmatprep.subr.mxu0 0.0
    %1987 = vmatpush1.msra.mxu0 0.0
    %1988 = vmatprep.subr.mxu0 0.0
    %1989 = vmatpush1.msra.mxu0 0.0
    %1990 = vmatprep.subr.mxu0 0.0
    %1991 = vmatpush1.msra.mxu0 0.0
    %1992 = vmatprep.subr.mxu0 0.0
    %1993 = vmatpush1.msra.mxu0 0.0
    %1994 = vmatprep.subr.mxu0 0.0
    %1995 = vmatpush1.msra.mxu0 0.0
    %1996 = vmatprep.subr.mxu0 0.0
    %1997 = vmatpush1.msra.mxu0 0.0
    %1998 = vmatprep.subr.mxu0 0.0
    %1999 = vmatpush1.msra.mxu0 0.0
    %2000 = vmatprep.subr.mxu0 0.0
    %2001 = vmatpush1.msra.mxu0 0.0
    %2002 = vmatprep.subr.mxu0 0.0
    %2003 = vmatpush1.msra.mxu0 0.0
    %2004 = vmatprep.subr.mxu0 0.0
    %2005 = vmatpush1.msra.mxu0 0.0
    %2006 = vmatprep.subr.mxu0 0.0
    %2007 = vmatpush1.msra.mxu0 0.0
    %2008 = vmatprep.mubr.f32.mxu0 0.0
    %2009 = vmatmul.mubr.f32.gmra.mrb[0].mxu0 %v1942
    %v2010 = vpop.f32.mrb[0].mxu0
    %v2011 = vadd.f32 0.0, %v2010
    %v2012 = vpop.f32.mrb[0].mxu0
    %v2013 = vadd.f32 0.0, %v2012
    %2014 = vdwg.mxu0
    %v2017 = vrot.slane %v2011, 6
    %v2018 = vrot.slane %v2013, 6
    %v2021 = vadd.f32 %v1379, %v2017
    %v2022 = vadd.f32 %v1380, %v2018
    %v2023 = vxor.u32 %v2021, 2147483648
    %v2024 = vxor.u32 %v2022, 2147483648
    %v2025 = vmul.f32 %v2023, 1.442695
    %v2026 = vpow.pop %v2025
    %v2027 = vmul.f32 %v2024, 1.442695
    %v2028 = vpow.pop %v2027
    %v2029 = vadd.f32 %v2026, 1.0
    %v2030 = vadd.f32 %v2028, 1.0
    %v2031 = vrcp.pop %v2029
    %v2032 = vmul.f32 1.0, %v2031
    %v2033 = vrcp.pop %v2030
    %v2034 = vmul.f32 1.0, %v2033
    %v2035 = vtanh.pop %v2022
    %v2037 = vrot.slane %v1934, 6
    %v2039 = vmul.f32 %v2032, %v2037
    %2041 = vrot.lane.b32.xlu0 %v2035, 64
    %v2042 = vpop.permute.xlu0 %2041
    %v2044 = vmul.f32 %v2032, %v2042
    %2046 = vrot.lane.b32.xlu0 %v2044, 64
    %v2047 = vpop.permute.xlu0 %2046
    %v2049 = vadd.f32 %v2039, %v2047
    %v2050 = vtanh.pop %v2049
    %2052 = vrot.lane.b32.xlu0 %v2050, 64
    %v2053 = vpop.permute.xlu0 %2052
    %v2055 = vmul.f32 %v2034, %v2053
    %v2057 = vrot.slane %v2055, 2
    %v2058 = vsel %vm282, %v2057, 0
    %2060 = vmatprep.subr.mxu0 %v1243
    %2061 = vmatpush1.msra.mxu0 %v1242
    %2062 = vmatprep.subr.mxu0 %v1245
    %2063 = vmatpush1.msra.mxu0 %v1244
    %2064 = vmatprep.subr.mxu0 %v1247
    %2065 = vmatpush1.msra.mxu0 %v1246
    %2066 = vmatprep.subr.mxu0 %v1249
    %2067 = vmatpush1.msra.mxu0 %v1248
    %2068 = vmatprep.subr.mxu0 %v1251
    %2069 = vmatpush1.msra.mxu0 %v1250
    %2070 = vmatprep.subr.mxu0 %v1253
    %2071 = vmatpush1.msra.mxu0 %v1252
    %2072 = vmatprep.subr.mxu0 %v1255
    %2073 = vmatpush1.msra.mxu0 %v1254
    %2074 = vmatprep.subr.mxu0 %v1257
    %2075 = vmatpush1.msra.mxu0 %v1256
    %2076 = vmatprep.subr.mxu0 0.0
    %2077 = vmatpush1.msra.mxu0 0.0
    %2078 = vmatprep.subr.mxu0 0.0
    %2079 = vmatpush1.msra.mxu0 0.0
    %2080 = vmatprep.subr.mxu0 0.0
    %2081 = vmatpush1.msra.mxu0 0.0
    %2082 = vmatprep.subr.mxu0 0.0
    %2083 = vmatpush1.msra.mxu0 0.0
    %2084 = vmatprep.subr.mxu0 0.0
    %2085 = vmatpush1.msra.mxu0 0.0
    %2086 = vmatprep.subr.mxu0 0.0
    %2087 = vmatpush1.msra.mxu0 0.0
    %2088 = vmatprep.subr.mxu0 0.0
    %2089 = vmatpush1.msra.mxu0 0.0
    %2090 = vmatprep.subr.mxu0 0.0
    %2091 = vmatpush1.msra.mxu0 0.0
    %2092 = vmatprep.subr.mxu0 0.0
    %2093 = vmatpush1.msra.mxu0 0.0
    %2094 = vmatprep.subr.mxu0 0.0
    %2095 = vmatpush1.msra.mxu0 0.0
    %2096 = vmatprep.subr.mxu0 0.0
    %2097 = vmatpush1.msra.mxu0 0.0
    %2098 = vmatprep.subr.mxu0 0.0
    %2099 = vmatpush1.msra.mxu0 0.0
    %2100 = vmatprep.subr.mxu0 0.0
    %2101 = vmatpush1.msra.mxu0 0.0
    %2102 = vmatprep.subr.mxu0 0.0
    %2103 = vmatpush1.msra.mxu0 0.0
    %2104 = vmatprep.subr.mxu0 0.0
    %2105 = vmatpush1.msra.mxu0 0.0
    %2106 = vmatprep.subr.mxu0 0.0
    %2107 = vmatpush1.msra.mxu0 0.0
    %2108 = vmatprep.subr.mxu0 0.0
    %2109 = vmatpush1.msra.mxu0 0.0
    %2110 = vmatprep.subr.mxu0 0.0
    %2111 = vmatpush1.msra.mxu0 0.0
    %2112 = vmatprep.subr.mxu0 0.0
    %2113 = vmatpush1.msra.mxu0 0.0
    %2114 = vmatprep.subr.mxu0 0.0
    %2115 = vmatpush1.msra.mxu0 0.0
    %2116 = vmatprep.subr.mxu0 0.0
    %2117 = vmatpush1.msra.mxu0 0.0
    %2118 = vmatprep.subr.mxu0 0.0
    %2119 = vmatpush1.msra.mxu0 0.0
    %2120 = vmatprep.subr.mxu0 0.0
    %2121 = vmatpush1.msra.mxu0 0.0
    %2122 = vmatprep.subr.mxu0 0.0
    %2123 = vmatpush1.msra.mxu0 0.0
    %2124 = vmatprep.mubr.f32.mxu0 0.0
    %2125 = vmatmul.mubr.f32.gmra.mrb[0].mxu0 %v2058
    %v2126 = vpop.f32.mrb[0].mxu0
    %v2127 = vadd.f32 0.0, %v2126
    %v2128 = vpop.f32.mrb[0].mxu0
    %v2129 = vadd.f32 0.0, %v2128
    %2130 = vdwg.mxu0
    %v2133 = vrot.slane %v2127, 4
    %v2134 = vrot.slane %v2129, 4
    %v2137 = vadd.f32 %v1373, %v2133
    %v2138 = vadd.f32 %v1374, %v2134
    %v2139 = vxor.u32 %v2137, 2147483648
    %v2140 = vxor.u32 %v2138, 2147483648
    %v2141 = vmul.f32 %v2139, 1.442695
    %v2142 = vpow.pop %v2141
    %v2143 = vmul.f32 %v2140, 1.442695
    %v2144 = vpow.pop %v2143
    %v2145 = vadd.f32 %v2142, 1.0
    %v2146 = vadd.f32 %v2144, 1.0
    %v2147 = vrcp.pop %v2145
    %v2148 = vmul.f32 1.0, %v2147
    %v2149 = vrcp.pop %v2146
    %v2150 = vmul.f32 1.0, %v2149
    %v2151 = vtanh.pop %v2138
    %v2153 = vrot.slane %v2049, 6
    %v2155 = vmul.f32 %v2148, %v2153
    %2157 = vrot.lane.b32.xlu0 %v2151, 64
    %v2158 = vpop.permute.xlu0 %2157
    %v2160 = vmul.f32 %v2148, %v2158
    %2162 = vrot.lane.b32.xlu0 %v2160, 64
    %v2163 = vpop.permute.xlu0 %2162
    %v2165 = vadd.f32 %v2155, %v2163
    %v2166 = vtanh.pop %v2165
    %2168 = vrot.lane.b32.xlu0 %v2166, 64
    %v2169 = vpop.permute.xlu0 %2168
    %v2171 = vmul.f32 %v2150, %v2169
    %v2173 = vrot.slane %v2171, 4
    %v2174 = vsel %vm282, %v2173, 0
    %2176 = vmatprep.subr.mxu0 %v1243
    %2177 = vmatpush1.msra.mxu0 %v1242
    %2178 = vmatprep.subr.mxu0 %v1245
    %2179 = vmatpush1.msra.mxu0 %v1244
    %2180 = vmatprep.subr.mxu0 %v1247
    %2181 = vmatpush1.msra.mxu0 %v1246
    %2182 = vmatprep.subr.mxu0 %v1249
    %2183 = vmatpush1.msra.mxu0 %v1248
    %2184 = vmatprep.subr.mxu0 %v1251
    %2185 = vmatpush1.msra.mxu0 %v1250
    %2186 = vmatprep.subr.mxu0 %v1253
    %2187 = vmatpush1.msra.mxu0 %v1252
    %2188 = vmatprep.subr.mxu0 %v1255
    %2189 = vmatpush1.msra.mxu0 %v1254
    %2190 = vmatprep.subr.mxu0 %v1257
    %2191 = vmatpush1.msra.mxu0 %v1256
    %2192 = vmatprep.subr.mxu0 0.0
    %2193 = vmatpush1.msra.mxu0 0.0
    %2194 = vmatprep.subr.mxu0 0.0
    %2195 = vmatpush1.msra.mxu0 0.0
    %2196 = vmatprep.subr.mxu0 0.0
    %2197 = vmatpush1.msra.mxu0 0.0
    %2198 = vmatprep.subr.mxu0 0.0
    %2199 = vmatpush1.msra.mxu0 0.0
    %2200 = vmatprep.subr.mxu0 0.0
    %2201 = vmatpush1.msra.mxu0 0.0
    %2202 = vmatprep.subr.mxu0 0.0
    %2203 = vmatpush1.msra.mxu0 0.0
    %2204 = vmatprep.subr.mxu0 0.0
    %2205 = vmatpush1.msra.mxu0 0.0
    %2206 = vmatprep.subr.mxu0 0.0
    %2207 = vmatpush1.msra.mxu0 0.0
    %2208 = vmatprep.subr.mxu0 0.0
    %2209 = vmatpush1.msra.mxu0 0.0
    %2210 = vmatprep.subr.mxu0 0.0
    %2211 = vmatpush1.msra.mxu0 0.0
    %2212 = vmatprep.subr.mxu0 0.0
    %2213 = vmatpush1.msra.mxu0 0.0
    %2214 = vmatprep.subr.mxu0 0.0
    %2215 = vmatpush1.msra.mxu0 0.0
    %2216 = vmatprep.subr.mxu0 0.0
    %2217 = vmatpush1.msra.mxu0 0.0
    %2218 = vmatprep.subr.mxu0 0.0
    %2219 = vmatpush1.msra.mxu0 0.0
    %2220 = vmatprep.subr.mxu0 0.0
    %2221 = vmatpush1.msra.mxu0 0.0
    %2222 = vmatprep.subr.mxu0 0.0
    %2223 = vmatpush1.msra.mxu0 0.0
    %2224 = vmatprep.subr.mxu0 0.0
    %2225 = vmatpush1.msra.mxu0 0.0
    %2226 = vmatprep.subr.mxu0 0.0
    %2227 = vmatpush1.msra.mxu0 0.0
    %2228 = vmatprep.subr.mxu0 0.0
    %2229 = vmatpush1.msra.mxu0 0.0
    %2230 = vmatprep.subr.mxu0 0.0
    %2231 = vmatpush1.msra.mxu0 0.0
    %2232 = vmatprep.subr.mxu0 0.0
    %2233 = vmatpush1.msra.mxu0 0.0
    %2234 = vmatprep.subr.mxu0 0.0
    %2235 = vmatpush1.msra.mxu0 0.0
    %2236 = vmatprep.subr.mxu0 0.0
    %2237 = vmatpush1.msra.mxu0 0.0
    %2238 = vmatprep.subr.mxu0 0.0
    %2239 = vmatpush1.msra.mxu0 0.0
    %2240 = vmatprep.mubr.f32.mxu0 0.0
    %2241 = vmatmul.mubr.f32.gmra.mrb[0].mxu0 %v2174
    %v2242 = vpop.f32.mrb[0].mxu0
    %v2243 = vadd.f32 0.0, %v2242
    %v2244 = vpop.f32.mrb[0].mxu0
    %v2245 = vadd.f32 0.0, %v2244
    %2246 = vdwg.mxu0
    %v2249 = vrot.slane %v2243, 2
    %v2250 = vrot.slane %v2245, 2
    %v2253 = vadd.f32 %v1379, %v2249
    %v2254 = vadd.f32 %v1380, %v2250
    %v2255 = vxor.u32 %v2253, 2147483648
    %v2256 = vxor.u32 %v2254, 2147483648
    %v2257 = vmul.f32 %v2255, 1.442695
    %v2258 = vpow.pop %v2257
    %v2259 = vmul.f32 %v2256, 1.442695
    %v2260 = vpow.pop %v2259
    %v2261 = vadd.f32 %v2258, 1.0
    %v2262 = vadd.f32 %v2260, 1.0
    %v2263 = vrcp.pop %v2261
    %v2264 = vmul.f32 1.0, %v2263
    %v2265 = vrcp.pop %v2262
    %v2266 = vmul.f32 1.0, %v2265
    %v2267 = vtanh.pop %v2254
    %v2269 = vrot.slane %v2165, 6
    %v2271 = vmul.f32 %v2264, %v2269
    %2273 = vrot.lane.b32.xlu0 %v2267, 64
    %v2274 = vpop.permute.xlu0 %2273
    %v2276 = vmul.f32 %v2264, %v2274
    %2278 = vrot.lane.b32.xlu0 %v2276, 64
    %v2279 = vpop.permute.xlu0 %2278
    %v2281 = vadd.f32 %v2271, %v2279
    %v2282 = vtanh.pop %v2281
    %2284 = vrot.lane.b32.xlu0 %v2282, 64
    %v2285 = vpop.permute.xlu0 %2284
    %v2287 = vmul.f32 %v2266, %v2285
    %v2289 = vrot.slane %v2287, 6
    %v2291 = vsel %vm119, %v1483, %v2289
    %v2292 = vrot.slane %v2171, 2
    %v2294 = vsel %vm119, %v1598, %v2292
    %v2295 = vrot.slane %v2055, 6
    %v2297 = vsel %vm119, %v1714, %v2295
    %v2298 = vrot.slane %v1940, 2
    %v2300 = vsel %vm119, %v1830, %v2298
    %v2302 = vsel %vm119, %v1940, %v1832
    %v2303 = vrot.slane %v1714, 2
    %v2305 = vsel %vm119, %v2055, %v2303
    %v2306 = vrot.slane %v1598, 6
    %v2308 = vsel %vm119, %v2171, %v2306
    %v2309 = vrot.slane %v1483, 2
    %v2311 = vsel %vm119, %v2287, %v2309
    %v2312 = vsel %vm1217, %v2291, %v2294
    %v2313 = vsel %vm1219, %v2312, %v2297
    %v2314 = vsel %vm1221, %v2313, %v2300
    %v2315 = vsel %vm1217, %v2302, %v2305
    %v2316 = vsel %vm1219, %v2315, %v2308
    %v2317 = vsel %vm1221, %v2316, %v2311
    %s2318 = smul.u32 8, 8
    %s2319 = smul.u32 %s2318, 8
    %s2320 = sshll.u32 %s2319, 4
    %2321 = dma.done [#allocation4], %s2320
    %s2322 = smul.u32 1024, 1
    %s2323 = sshll.u32 %s2322, 4
    %2324 = dma.done %s100, %s2323
    %v2325 = vld [vmem:[#allocation2] sm:$0xff]
    %v2326 = vld [vmem:[#allocation2 + $0x8] sm:$0xff]
    %v2327 = vld [vmem:[#allocation2 + $0x10] sm:$0xff]
    %v2328 = vld [vmem:[#allocation2 + $0x18] sm:$0xff]
    %v2329 = vld [vmem:[#allocation2 + $0x20] sm:$0xff]
    %v2330 = vld [vmem:[#allocation2 + $0x28] sm:$0xff]
    %v2331 = vld [vmem:[#allocation2 + $0x30] sm:$0xff]
    %v2332 = vld [vmem:[#allocation2 + $0x38] sm:$0xff]
    %v2333 = vld [vmem:[#allocation2 + $0x40] sm:$0xff]
    %v2334 = vld [vmem:[#allocation2 + $0x48] sm:$0xff]
    %v2335 = vld [vmem:[#allocation2 + $0x50] sm:$0xff]
    %v2336 = vld [vmem:[#allocation2 + $0x58] sm:$0xff]
    %v2337 = vld [vmem:[#allocation2 + $0x60] sm:$0xff]
    %v2338 = vld [vmem:[#allocation2 + $0x68] sm:$0xff]
    %v2339 = vld [vmem:[#allocation2 + $0x70] sm:$0xff]
    %v2340 = vld [vmem:[#allocation2 + $0x78] sm:$0xff]
    %v2341 = vld [vmem:[#allocation2 + $0x80] sm:$0xff]
    %v2342 = vld [vmem:[#allocation2 + $0x88] sm:$0xff]
    %v2343 = vld [vmem:[#allocation2 + $0x90] sm:$0xff]
    %v2344 = vld [vmem:[#allocation2 + $0x98] sm:$0xff]
    %v2345 = vld [vmem:[#allocation2 + $0xa0] sm:$0xff]
    %v2346 = vld [vmem:[#allocation2 + $0xa8] sm:$0xff]
    %v2347 = vld [vmem:[#allocation2 + $0xb0] sm:$0xff]
    %v2348 = vld [vmem:[#allocation2 + $0xb8] sm:$0xff]
    %v2349 = vld [vmem:[#allocation2 + $0xc0] sm:$0xff]
    %v2350 = vld [vmem:[#allocation2 + $0xc8] sm:$0xff]
    %v2351 = vld [vmem:[#allocation2 + $0xd0] sm:$0xff]
    %v2352 = vld [vmem:[#allocation2 + $0xd8] sm:$0xff]
    %v2353 = vld [vmem:[#allocation2 + $0xe0] sm:$0xff]
    %v2354 = vld [vmem:[#allocation2 + $0xe8] sm:$0xff]
    %v2355 = vld [vmem:[#allocation2 + $0xf0] sm:$0xff]
    %v2356 = vld [vmem:[#allocation2 + $0xf8] sm:$0xff]
    %v2357 = vld [vmem:[#allocation2 + $0x100] sm:$0xff]
    %v2358 = vld [vmem:[#allocation2 + $0x108] sm:$0xff]
    %v2359 = vld [vmem:[#allocation2 + $0x110] sm:$0xff]
    %v2360 = vld [vmem:[#allocation2 + $0x118] sm:$0xff]
    %v2361 = vld [vmem:[#allocation2 + $0x120] sm:$0xff]
    %v2362 = vld [vmem:[#allocation2 + $0x128] sm:$0xff]
    %v2363 = vld [vmem:[#allocation2 + $0x130] sm:$0xff]
    %v2364 = vld [vmem:[#allocation2 + $0x138] sm:$0xff]
    %v2365 = vld [vmem:[#allocation2 + $0x140] sm:$0xff]
    %v2366 = vld [vmem:[#allocation2 + $0x148] sm:$0xff]
    %v2367 = vld [vmem:[#allocation2 + $0x150] sm:$0xff]
    %v2368 = vld [vmem:[#allocation2 + $0x158] sm:$0xff]
    %v2369 = vld [vmem:[#allocation2 + $0x160] sm:$0xff]
    %v2370 = vld [vmem:[#allocation2 + $0x168] sm:$0xff]
    %v2371 = vld [vmem:[#allocation2 + $0x170] sm:$0xff]
    %v2372 = vld [vmem:[#allocation2 + $0x178] sm:$0xff]
    %v2373 = vld [vmem:[#allocation2 + $0x180] sm:$0xff]
    %v2374 = vld [vmem:[#allocation2 + $0x188] sm:$0xff]
    %v2375 = vld [vmem:[#allocation2 + $0x190] sm:$0xff]
    %v2376 = vld [vmem:[#allocation2 + $0x198] sm:$0xff]
    %v2377 = vld [vmem:[#allocation2 + $0x1a0] sm:$0xff]
    %v2378 = vld [vmem:[#allocation2 + $0x1a8] sm:$0xff]
    %v2379 = vld [vmem:[#allocation2 + $0x1b0] sm:$0xff]
    %v2380 = vld [vmem:[#allocation2 + $0x1b8] sm:$0xff]
    %v2381 = vld [vmem:[#allocation2 + $0x1c0] sm:$0xff]
    %v2382 = vld [vmem:[#allocation2 + $0x1c8] sm:$0xff]
    %v2383 = vld [vmem:[#allocation2 + $0x1d0] sm:$0xff]
    %v2384 = vld [vmem:[#allocation2 + $0x1d8] sm:$0xff]
    %v2385 = vld [vmem:[#allocation2 + $0x1e0] sm:$0xff]
    %v2386 = vld [vmem:[#allocation2 + $0x1e8] sm:$0xff]
    %v2387 = vld [vmem:[#allocation2 + $0x1f0] sm:$0xff]
    %v2388 = vld [vmem:[#allocation2 + $0x1f8] sm:$0xff]
    %v2389 = vld [vmem:[%s7] sm:$0xff]
    %v2391 = vlaneseq
    %v2392 = vshrl.u32 %v2391, 7
    %v2393 = vsub.s32 0, %v2392
    %v2394 = vrot.slane %v2389, %v2393
    %v2395 = vlaneseq
    %v2396 = vshrl.u32 %v2395, 7
    %v2397 = vsub.s32 1, %v2396
    %v2398 = vrot.slane %v2389, %v2397
    %v2399 = vlaneseq
    %v2400 = vshrl.u32 %v2399, 7
    %v2401 = vsub.s32 2, %v2400
    %v2402 = vrot.slane %v2389, %v2401
    %v2403 = vlaneseq
    %v2404 = vshrl.u32 %v2403, 7
    %v2405 = vsub.s32 3, %v2404
    %v2406 = vrot.slane %v2389, %v2405
    %v2407 = vlaneseq
    %v2408 = vshrl.u32 %v2407, 7
    %v2409 = vsub.s32 4, %v2408
    %v2410 = vrot.slane %v2389, %v2409
    %v2411 = vlaneseq
    %v2412 = vshrl.u32 %v2411, 7
    %v2413 = vsub.s32 5, %v2412
    %v2414 = vrot.slane %v2389, %v2413
    %v2415 = vlaneseq
    %v2416 = vshrl.u32 %v2415, 7
    %v2417 = vsub.s32 6, %v2416
    %v2418 = vrot.slane %v2389, %v2417
    %v2419 = vlaneseq
    %v2420 = vshrl.u32 %v2419, 7
    %v2421 = vsub.s32 7, %v2420
    %v2422 = vrot.slane %v2389, %v2421
    %v2432 = vsel %vm282, %v2314, 0
    %v2435 = vsel %vm282, %v2317, 0
    %2437 = vmatprep.subr.mxu0 %v2326
    %2438 = vmatpush1.msra.mxu0 %v2325
    %2439 = vmatprep.subr.mxu0 %v2334
    %2440 = vmatpush1.msra.mxu0 %v2333
    %2441 = vmatprep.subr.mxu0 %v2342
    %2442 = vmatpush1.msra.mxu0 %v2341
    %2443 = vmatprep.subr.mxu0 %v2350
    %2444 = vmatpush1.msra.mxu0 %v2349
    %2445 = vmatprep.subr.mxu0 %v2358
    %2446 = vmatpush1.msra.mxu0 %v2357
    %2447 = vmatprep.subr.mxu0 %v2366
    %2448 = vmatpush1.msra.mxu0 %v2365
    %2449 = vmatprep.subr.mxu0 %v2374
    %2450 = vmatpush1.msra.mxu0 %v2373
    %2451 = vmatprep.subr.mxu0 %v2382
    %2452 = vmatpush1.msra.mxu0 %v2381
    %2453 = vmatprep.subr.mxu0 0.0
    %2454 = vmatpush1.msra.mxu0 0.0
    %2455 = vmatprep.subr.mxu0 0.0
    %2456 = vmatpush1.msra.mxu0 0.0
    %2457 = vmatprep.subr.mxu0 0.0
    %2458 = vmatpush1.msra.mxu0 0.0
    %2459 = vmatprep.subr.mxu0 0.0
    %2460 = vmatpush1.msra.mxu0 0.0
    %2461 = vmatprep.subr.mxu0 0.0
    %2462 = vmatpush1.msra.mxu0 0.0
    %2463 = vmatprep.subr.mxu0 0.0
    %2464 = vmatpush1.msra.mxu0 0.0
    %2465 = vmatprep.subr.mxu0 0.0
    %2466 = vmatpush1.msra.mxu0 0.0
    %2467 = vmatprep.subr.mxu0 0.0
    %2468 = vmatpush1.msra.mxu0 0.0
    %2469 = vmatprep.subr.mxu0 0.0
    %2470 = vmatpush1.msra.mxu0 0.0
    %2471 = vmatprep.subr.mxu0 0.0
    %2472 = vmatpush1.msra.mxu0 0.0
    %2473 = vmatprep.subr.mxu0 0.0
    %2474 = vmatpush1.msra.mxu0 0.0
    %2475 = vmatprep.subr.mxu0 0.0
    %2476 = vmatpush1.msra.mxu0 0.0
    %2477 = vmatprep.subr.mxu0 0.0
    %2478 = vmatpush1.msra.mxu0 0.0
    %2479 = vmatprep.subr.mxu0 0.0
    %2480 = vmatpush1.msra.mxu0 0.0
    %2481 = vmatprep.subr.mxu0 0.0
    %2482 = vmatpush1.msra.mxu0 0.0
    %2483 = vmatprep.subr.mxu0 0.0
    %2484 = vmatpush1.msra.mxu0 0.0
    %2485 = vmatprep.subr.mxu0 0.0
    %2486 = vmatpush1.msra.mxu0 0.0
    %2487 = vmatprep.subr.mxu0 0.0
    %2488 = vmatpush1.msra.mxu0 0.0
    %2489 = vmatprep.subr.mxu0 0.0
    %2490 = vmatpush1.msra.mxu0 0.0
    %2491 = vmatprep.subr.mxu0 0.0
    %2492 = vmatpush1.msra.mxu0 0.0
    %2493 = vmatprep.subr.mxu0 0.0
    %2494 = vmatpush1.msra.mxu0 0.0
    %2495 = vmatprep.subr.mxu0 0.0
    %2496 = vmatpush1.msra.mxu0 0.0
    %2497 = vmatprep.subr.mxu0 0.0
    %2498 = vmatpush1.msra.mxu0 0.0
    %2499 = vmatprep.subr.mxu0 0.0
    %2500 = vmatpush1.msra.mxu0 0.0
    %2501 = vmatprep.mubr.f32.mxu0 0.0
    %2502 = vmatmul.mubr.f32.gmra.mrb[0].mxu0 %v2432
    %v2503 = vpop.f32.mrb[0].mxu0
    %v2504 = vadd.f32 %v2394, %v2503
    %v2505 = vpop.f32.mrb[0].mxu0
    %v2506 = vadd.f32 %v2398, %v2505
    %2507 = vmatprep.mubr.f32.mxu0 0.0
    %2508 = vmatmul.mubr.f32.gmra.mrb[0].mxu0 %v2435
    %v2509 = vpop.f32.mrb[0].mxu0
    %v2510 = vadd.f32 %v2394, %v2509
    %v2511 = vpop.f32.mrb[0].mxu0
    %v2512 = vadd.f32 %v2398, %v2511
    %2513 = vdwg.mxu0
    %2514 = vmatprep.subr.mxu0 %v2328
    %2515 = vmatpush1.msra.mxu0 %v2327
    %2516 = vmatprep.subr.mxu0 %v2336
    %2517 = vmatpush1.msra.mxu0 %v2335
    %2518 = vmatprep.subr.mxu0 %v2344
    %2519 = vmatpush1.msra.mxu0 %v2343
    %2520 = vmatprep.subr.mxu0 %v2352
    %2521 = vmatpush1.msra.mxu0 %v2351
    %2522 = vmatprep.subr.mxu0 %v2360
    %2523 = vmatpush1.msra.mxu0 %v2359
    %2524 = vmatprep.subr.mxu0 %v2368
    %2525 = vmatpush1.msra.mxu0 %v2367
    %2526 = vmatprep.subr.mxu0 %v2376
    %2527 = vmatpush1.msra.mxu0 %v2375
    %2528 = vmatprep.subr.mxu0 %v2384
    %2529 = vmatpush1.msra.mxu0 %v2383
    %2530 = vmatprep.subr.mxu0 0.0
    %2531 = vmatpush1.msra.mxu0 0.0
    %2532 = vmatprep.subr.mxu0 0.0
    %2533 = vmatpush1.msra.mxu0 0.0
    %2534 = vmatprep.subr.mxu0 0.0
    %2535 = vmatpush1.msra.mxu0 0.0
    %2536 = vmatprep.subr.mxu0 0.0
    %2537 = vmatpush1.msra.mxu0 0.0
    %2538 = vmatprep.subr.mxu0 0.0
    %2539 = vmatpush1.msra.mxu0 0.0
    %2540 = vmatprep.subr.mxu0 0.0
    %2541 = vmatpush1.msra.mxu0 0.0
    %2542 = vmatprep.subr.mxu0 0.0
    %2543 = vmatpush1.msra.mxu0 0.0
    %2544 = vmatprep.subr.mxu0 0.0
    %2545 = vmatpush1.msra.mxu0 0.0
    %2546 = vmatprep.subr.mxu0 0.0
    %2547 = vmatpush1.msra.mxu0 0.0
    %2548 = vmatprep.subr.mxu0 0.0
    %2549 = vmatpush1.msra.mxu0 0.0
    %2550 = vmatprep.subr.mxu0 0.0
    %2551 = vmatpush1.msra.mxu0 0.0
    %2552 = vmatprep.subr.mxu0 0.0
    %2553 = vmatpush1.msra.mxu0 0.0
    %2554 = vmatprep.subr.mxu0 0.0
    %2555 = vmatpush1.msra.mxu0 0.0
    %2556 = vmatprep.subr.mxu0 0.0
    %2557 = vmatpush1.msra.mxu0 0.0
    %2558 = vmatprep.subr.mxu0 0.0
    %2559 = vmatpush1.msra.mxu0 0.0
    %2560 = vmatprep.subr.mxu0 0.0
    %2561 = vmatpush1.msra.mxu0 0.0
    %2562 = vmatprep.subr.mxu0 0.0
    %2563 = vmatpush1.msra.mxu0 0.0
    %2564 = vmatprep.subr.mxu0 0.0
    %2565 = vmatpush1.msra.mxu0 0.0
    %2566 = vmatprep.subr.mxu0 0.0
    %2567 = vmatpush1.msra.mxu0 0.0
    %2568 = vmatprep.subr.mxu0 0.0
    %2569 = vmatpush1.msra.mxu0 0.0
    %2570 = vmatprep.subr.mxu0 0.0
    %2571 = vmatpush1.msra.mxu0 0.0
    %2572 = vmatprep.subr.mxu0 0.0
    %2573 = vmatpush1.msra.mxu0 0.0
    %2574 = vmatprep.subr.mxu0 0.0
    %2575 = vmatpush1.msra.mxu0 0.0
    %2576 = vmatprep.subr.mxu0 0.0
    %2577 = vmatpush1.msra.mxu0 0.0
    %2578 = vmatprep.mubr.f32.mxu0 0.0
    %2579 = vmatmul.mubr.f32.gmra.mrb[0].mxu0 %v2432
    %v2580 = vpop.f32.mrb[0].mxu0
    %v2581 = vadd.f32 %v2402, %v2580
    %v2582 = vpop.f32.mrb[0].mxu0
    %v2583 = vadd.f32 %v2406, %v2582
    %2584 = vmatprep.mubr.f32.mxu0 0.0
    %2585 = vmatmul.mubr.f32.gmra.mrb[0].mxu0 %v2435
    %v2586 = vpop.f32.mrb[0].mxu0
    %v2587 = vadd.f32 %v2402, %v2586
    %v2588 = vpop.f32.mrb[0].mxu0
    %v2589 = vadd.f32 %v2406, %v2588
    %2590 = vdwg.mxu0
    %2591 = vmatprep.subr.mxu0 %v2330
    %2592 = vmatpush1.msra.mxu0 %v2329
    %2593 = vmatprep.subr.mxu0 %v2338
    %2594 = vmatpush1.msra.mxu0 %v2337
    %2595 = vmatprep.subr.mxu0 %v2346
    %2596 = vmatpush1.msra.mxu0 %v2345
    %2597 = vmatprep.subr.mxu0 %v2354
    %2598 = vmatpush1.msra.mxu0 %v2353
    %2599 = vmatprep.subr.mxu0 %v2362
    %2600 = vmatpush1.msra.mxu0 %v2361
    %2601 = vmatprep.subr.mxu0 %v2370
    %2602 = vmatpush1.msra.mxu0 %v2369
    %2603 = vmatprep.subr.mxu0 %v2378
    %2604 = vmatpush1.msra.mxu0 %v2377
    %2605 = vmatprep.subr.mxu0 %v2386
    %2606 = vmatpush1.msra.mxu0 %v2385
    %2607 = vmatprep.subr.mxu0 0.0
    %2608 = vmatpush1.msra.mxu0 0.0
    %2609 = vmatprep.subr.mxu0 0.0
    %2610 = vmatpush1.msra.mxu0 0.0
    %2611 = vmatprep.subr.mxu0 0.0
    %2612 = vmatpush1.msra.mxu0 0.0
    %2613 = vmatprep.subr.mxu0 0.0
    %2614 = vmatpush1.msra.mxu0 0.0
    %2615 = vmatprep.subr.mxu0 0.0
    %2616 = vmatpush1.msra.mxu0 0.0
    %2617 = vmatprep.subr.mxu0 0.0
    %2618 = vmatpush1.msra.mxu0 0.0
    %2619 = vmatprep.subr.mxu0 0.0
    %2620 = vmatpush1.msra.mxu0 0.0
    %2621 = vmatprep.subr.mxu0 0.0
    %2622 = vmatpush1.msra.mxu0 0.0
    %2623 = vmatprep.subr.mxu0 0.0
    %2624 = vmatpush1.msra.mxu0 0.0
    %2625 = vmatprep.subr.mxu0 0.0
    %2626 = vmatpush1.msra.mxu0 0.0
    %2627 = vmatprep.subr.mxu0 0.0
    %2628 = vmatpush1.msra.mxu0 0.0
    %2629 = vmatprep.subr.mxu0 0.0
    %2630 = vmatpush1.msra.mxu0 0.0
    %2631 = vmatprep.subr.mxu0 0.0
    %2632 = vmatpush1.msra.mxu0 0.0
    %2633 = vmatprep.subr.mxu0 0.0
    %2634 = vmatpush1.msra.mxu0 0.0
    %2635 = vmatprep.subr.mxu0 0.0
    %2636 = vmatpush1.msra.mxu0 0.0
    %2637 = vmatprep.subr.mxu0 0.0
    %2638 = vmatpush1.msra.mxu0 0.0
    %2639 = vmatprep.subr.mxu0 0.0
    %2640 = vmatpush1.msra.mxu0 0.0
    %2641 = vmatprep.subr.mxu0 0.0
    %2642 = vmatpush1.msra.mxu0 0.0
    %2643 = vmatprep.subr.mxu0 0.0
    %2644 = vmatpush1.msra.mxu0 0.0
    %2645 = vmatprep.subr.mxu0 0.0
    %2646 = vmatpush1.msra.mxu0 0.0
    %2647 = vmatprep.subr.mxu0 0.0
    %2648 = vmatpush1.msra.mxu0 0.0
    %2649 = vmatprep.subr.mxu0 0.0
    %2650 = vmatpush1.msra.mxu0 0.0
    %2651 = vmatprep.subr.mxu0 0.0
    %2652 = vmatpush1.msra.mxu0 0.0
    %2653 = vmatprep.subr.mxu0 0.0
    %2654 = vmatpush1.msra.mxu0 0.0
    %2655 = vmatprep.mubr.f32.mxu0 0.0
    %2656 = vmatmul.mubr.f32.gmra.mrb[0].mxu0 %v2432
    %v2657 = vpop.f32.mrb[0].mxu0
    %v2658 = vadd.f32 %v2410, %v2657
    %v2659 = vpop.f32.mrb[0].mxu0
    %v2660 = vadd.f32 %v2414, %v2659
    %2661 = vmatprep.mubr.f32.mxu0 0.0
    %2662 = vmatmul.mubr.f32.gmra.mrb[0].mxu0 %v2435
    %v2663 = vpop.f32.mrb[0].mxu0
    %v2664 = vadd.f32 %v2410, %v2663
    %v2665 = vpop.f32.mrb[0].mxu0
    %v2666 = vadd.f32 %v2414, %v2665
    %2667 = vdwg.mxu0
    %2668 = vmatprep.subr.mxu0 %v2332
    %2669 = vmatpush1.msra.mxu0 %v2331
    %2670 = vmatprep.subr.mxu0 %v2340
    %2671 = vmatpush1.msra.mxu0 %v2339
    %2672 = vmatprep.subr.mxu0 %v2348
    %2673 = vmatpush1.msra.mxu0 %v2347
    %2674 = vmatprep.subr.mxu0 %v2356
    %2675 = vmatpush1.msra.mxu0 %v2355
    %2676 = vmatprep.subr.mxu0 %v2364
    %2677 = vmatpush1.msra.mxu0 %v2363
    %2678 = vmatprep.subr.mxu0 %v2372
    %2679 = vmatpush1.msra.mxu0 %v2371
    %2680 = vmatprep.subr.mxu0 %v2380
    %2681 = vmatpush1.msra.mxu0 %v2379
    %2682 = vmatprep.subr.mxu0 %v2388
    %2683 = vmatpush1.msra.mxu0 %v2387
    %2684 = vmatprep.subr.mxu0 0.0
    %2685 = vmatpush1.msra.mxu0 0.0
    %2686 = vmatprep.subr.mxu0 0.0
    %2687 = vmatpush1.msra.mxu0 0.0
    %2688 = vmatprep.subr.mxu0 0.0
    %2689 = vmatpush1.msra.mxu0 0.0
    %2690 = vmatprep.subr.mxu0 0.0
    %2691 = vmatpush1.msra.mxu0 0.0
    %2692 = vmatprep.subr.mxu0 0.0
    %2693 = vmatpush1.msra.mxu0 0.0
    %2694 = vmatprep.subr.mxu0 0.0
    %2695 = vmatpush1.msra.mxu0 0.0
    %2696 = vmatprep.subr.mxu0 0.0
    %2697 = vmatpush1.msra.mxu0 0.0
    %2698 = vmatprep.subr.mxu0 0.0
    %2699 = vmatpush1.msra.mxu0 0.0
    %2700 = vmatprep.subr.mxu0 0.0
    %2701 = vmatpush1.msra.mxu0 0.0
    %2702 = vmatprep.subr.mxu0 0.0
    %2703 = vmatpush1.msra.mxu0 0.0
    %2704 = vmatprep.subr.mxu0 0.0
    %2705 = vmatpush1.msra.mxu0 0.0
    %2706 = vmatprep.subr.mxu0 0.0
    %2707 = vmatpush1.msra.mxu0 0.0
    %2708 = vmatprep.subr.mxu0 0.0
    %2709 = vmatpush1.msra.mxu0 0.0
    %2710 = vmatprep.subr.mxu0 0.0
    %2711 = vmatpush1.msra.mxu0 0.0
    %2712 = vmatprep.subr.mxu0 0.0
    %2713 = vmatpush1.msra.mxu0 0.0
    %2714 = vmatprep.subr.mxu0 0.0
    %2715 = vmatpush1.msra.mxu0 0.0
    %2716 = vmatprep.subr.mxu0 0.0
    %2717 = vmatpush1.msra.mxu0 0.0
    %2718 = vmatprep.subr.mxu0 0.0
    %2719 = vmatpush1.msra.mxu0 0.0
    %2720 = vmatprep.subr.mxu0 0.0
    %2721 = vmatpush1.msra.mxu0 0.0
    %2722 = vmatprep.subr.mxu0 0.0
    %2723 = vmatpush1.msra.mxu0 0.0
    %2724 = vmatprep.subr.mxu0 0.0
    %2725 = vmatpush1.msra.mxu0 0.0
    %2726 = vmatprep.subr.mxu0 0.0
    %2727 = vmatpush1.msra.mxu0 0.0
    %2728 = vmatprep.subr.mxu0 0.0
    %2729 = vmatpush1.msra.mxu0 0.0
    %2730 = vmatprep.subr.mxu0 0.0
    %2731 = vmatpush1.msra.mxu0 0.0
    %2732 = vmatprep.mubr.f32.mxu0 0.0
    %2733 = vmatmul.mubr.f32.gmra.mrb[0].mxu0 %v2432
    %v2734 = vpop.f32.mrb[0].mxu0
    %v2735 = vadd.f32 %v2418, %v2734
    %v2736 = vpop.f32.mrb[0].mxu0
    %v2737 = vadd.f32 %v2422, %v2736
    %2738 = vmatprep.mubr.f32.mxu0 0.0
    %2739 = vmatmul.mubr.f32.gmra.mrb[0].mxu0 %v2435
    %v2740 = vpop.f32.mrb[0].mxu0
    %v2741 = vadd.f32 %v2418, %v2740
    %v2742 = vpop.f32.mrb[0].mxu0
    %v2743 = vadd.f32 %v2422, %v2742
    %2744 = vdwg.mxu0
    %v2745 = vld [vmem:[#allocation3] sm:$0xff]
    %v2746 = vld [vmem:[#allocation3 + $0x8] sm:$0xff]
    %v2747 = vld [vmem:[#allocation3 + $0x10] sm:$0xff]
    %v2748 = vld [vmem:[#allocation3 + $0x18] sm:$0xff]
    %v2749 = vld [vmem:[#allocation3 + $0x20] sm:$0xff]
    %v2750 = vld [vmem:[#allocation3 + $0x28] sm:$0xff]
    %v2751 = vld [vmem:[#allocation3 + $0x30] sm:$0xff]
    %v2752 = vld [vmem:[#allocation3 + $0x38] sm:$0xff]
    %v2753 = vld [vmem:[#allocation3 + $0x40] sm:$0xff]
    %v2754 = vld [vmem:[#allocation3 + $0x48] sm:$0xff]
    %v2755 = vld [vmem:[#allocation3 + $0x50] sm:$0xff]
    %v2756 = vld [vmem:[#allocation3 + $0x58] sm:$0xff]
    %v2757 = vld [vmem:[#allocation3 + $0x60] sm:$0xff]
    %v2758 = vld [vmem:[#allocation3 + $0x68] sm:$0xff]
    %v2759 = vld [vmem:[#allocation3 + $0x70] sm:$0xff]
    %v2760 = vld [vmem:[#allocation3 + $0x78] sm:$0xff]
    %v2761 = vld [vmem:[#allocation3 + $0x80] sm:$0xff]
    %v2762 = vld [vmem:[#allocation3 + $0x88] sm:$0xff]
    %v2763 = vld [vmem:[#allocation3 + $0x90] sm:$0xff]
    %v2764 = vld [vmem:[#allocation3 + $0x98] sm:$0xff]
    %v2765 = vld [vmem:[#allocation3 + $0xa0] sm:$0xff]
    %v2766 = vld [vmem:[#allocation3 + $0xa8] sm:$0xff]
    %v2767 = vld [vmem:[#allocation3 + $0xb0] sm:$0xff]
    %v2768 = vld [vmem:[#allocation3 + $0xb8] sm:$0xff]
    %v2769 = vld [vmem:[#allocation3 + $0xc0] sm:$0xff]
    %v2770 = vld [vmem:[#allocation3 + $0xc8] sm:$0xff]
    %v2771 = vld [vmem:[#allocation3 + $0xd0] sm:$0xff]
    %v2772 = vld [vmem:[#allocation3 + $0xd8] sm:$0xff]
    %v2773 = vld [vmem:[#allocation3 + $0xe0] sm:$0xff]
    %v2774 = vld [vmem:[#allocation3 + $0xe8] sm:$0xff]
    %v2775 = vld [vmem:[#allocation3 + $0xf0] sm:$0xff]
    %v2776 = vld [vmem:[#allocation3 + $0xf8] sm:$0xff]
    %v2777 = vld [vmem:[#allocation3 + $0x100] sm:$0xff]
    %v2778 = vld [vmem:[#allocation3 + $0x108] sm:$0xff]
    %v2779 = vld [vmem:[#allocation3 + $0x110] sm:$0xff]
    %v2780 = vld [vmem:[#allocation3 + $0x118] sm:$0xff]
    %v2781 = vld [vmem:[#allocation3 + $0x120] sm:$0xff]
    %v2782 = vld [vmem:[#allocation3 + $0x128] sm:$0xff]
    %v2783 = vld [vmem:[#allocation3 + $0x130] sm:$0xff]
    %v2784 = vld [vmem:[#allocation3 + $0x138] sm:$0xff]
    %v2785 = vld [vmem:[#allocation3 + $0x140] sm:$0xff]
    %v2786 = vld [vmem:[#allocation3 + $0x148] sm:$0xff]
    %v2787 = vld [vmem:[#allocation3 + $0x150] sm:$0xff]
    %v2788 = vld [vmem:[#allocation3 + $0x158] sm:$0xff]
    %v2789 = vld [vmem:[#allocation3 + $0x160] sm:$0xff]
    %v2790 = vld [vmem:[#allocation3 + $0x168] sm:$0xff]
    %v2791 = vld [vmem:[#allocation3 + $0x170] sm:$0xff]
    %v2792 = vld [vmem:[#allocation3 + $0x178] sm:$0xff]
    %v2793 = vld [vmem:[#allocation3 + $0x180] sm:$0xff]
    %v2794 = vld [vmem:[#allocation3 + $0x188] sm:$0xff]
    %v2795 = vld [vmem:[#allocation3 + $0x190] sm:$0xff]
    %v2796 = vld [vmem:[#allocation3 + $0x198] sm:$0xff]
    %v2797 = vld [vmem:[#allocation3 + $0x1a0] sm:$0xff]
    %v2798 = vld [vmem:[#allocation3 + $0x1a8] sm:$0xff]
    %v2799 = vld [vmem:[#allocation3 + $0x1b0] sm:$0xff]
    %v2800 = vld [vmem:[#allocation3 + $0x1b8] sm:$0xff]
    %v2801 = vld [vmem:[#allocation3 + $0x1c0] sm:$0xff]
    %v2802 = vld [vmem:[#allocation3 + $0x1c8] sm:$0xff]
    %v2803 = vld [vmem:[#allocation3 + $0x1d0] sm:$0xff]
    %v2804 = vld [vmem:[#allocation3 + $0x1d8] sm:$0xff]
    %v2805 = vld [vmem:[#allocation3 + $0x1e0] sm:$0xff]
    %v2806 = vld [vmem:[#allocation3 + $0x1e8] sm:$0xff]
    %v2807 = vld [vmem:[#allocation3 + $0x1f0] sm:$0xff]
    %v2808 = vld [vmem:[#allocation3 + $0x1f8] sm:$0xff]
    %v2809 = vld [vmem:[#allocation3 + $0x200] sm:$0xff]
    %v2810 = vld [vmem:[#allocation3 + $0x208] sm:$0xff]
    %v2811 = vld [vmem:[#allocation3 + $0x210] sm:$0xff]
    %v2812 = vld [vmem:[#allocation3 + $0x218] sm:$0xff]
    %v2813 = vld [vmem:[#allocation3 + $0x220] sm:$0xff]
    %v2814 = vld [vmem:[#allocation3 + $0x228] sm:$0xff]
    %v2815 = vld [vmem:[#allocation3 + $0x230] sm:$0xff]
    %v2816 = vld [vmem:[#allocation3 + $0x238] sm:$0xff]
    %v2817 = vld [vmem:[#allocation3 + $0x240] sm:$0xff]
    %v2818 = vld [vmem:[#allocation3 + $0x248] sm:$0xff]
    %v2819 = vld [vmem:[#allocation3 + $0x250] sm:$0xff]
    %v2820 = vld [vmem:[#allocation3 + $0x258] sm:$0xff]
    %v2821 = vld [vmem:[#allocation3 + $0x260] sm:$0xff]
    %v2822 = vld [vmem:[#allocation3 + $0x268] sm:$0xff]
    %v2823 = vld [vmem:[#allocation3 + $0x270] sm:$0xff]
    %v2824 = vld [vmem:[#allocation3 + $0x278] sm:$0xff]
    %v2825 = vld [vmem:[#allocation3 + $0x280] sm:$0xff]
    %v2826 = vld [vmem:[#allocation3 + $0x288] sm:$0xff]
    %v2827 = vld [vmem:[#allocation3 + $0x290] sm:$0xff]
    %v2828 = vld [vmem:[#allocation3 + $0x298] sm:$0xff]
    %v2829 = vld [vmem:[#allocation3 + $0x2a0] sm:$0xff]
    %v2830 = vld [vmem:[#allocation3 + $0x2a8] sm:$0xff]
    %v2831 = vld [vmem:[#allocation3 + $0x2b0] sm:$0xff]
    %v2832 = vld [vmem:[#allocation3 + $0x2b8] sm:$0xff]
    %v2833 = vld [vmem:[#allocation3 + $0x2c0] sm:$0xff]
    %v2834 = vld [vmem:[#allocation3 + $0x2c8] sm:$0xff]
    %v2835 = vld [vmem:[#allocation3 + $0x2d0] sm:$0xff]
    %v2836 = vld [vmem:[#allocation3 + $0x2d8] sm:$0xff]
    %v2837 = vld [vmem:[#allocation3 + $0x2e0] sm:$0xff]
    %v2838 = vld [vmem:[#allocation3 + $0x2e8] sm:$0xff]
    %v2839 = vld [vmem:[#allocation3 + $0x2f0] sm:$0xff]
    %v2840 = vld [vmem:[#allocation3 + $0x2f8] sm:$0xff]
    %v2841 = vld [vmem:[#allocation3 + $0x300] sm:$0xff]
    %v2842 = vld [vmem:[#allocation3 + $0x308] sm:$0xff]
    %v2843 = vld [vmem:[#allocation3 + $0x310] sm:$0xff]
    %v2844 = vld [vmem:[#allocation3 + $0x318] sm:$0xff]
    %v2845 = vld [vmem:[#allocation3 + $0x320] sm:$0xff]
    %v2846 = vld [vmem:[#allocation3 + $0x328] sm:$0xff]
    %v2847 = vld [vmem:[#allocation3 + $0x330] sm:$0xff]
    %v2848 = vld [vmem:[#allocation3 + $0x338] sm:$0xff]
    %v2849 = vld [vmem:[#allocation3 + $0x340] sm:$0xff]
    %v2850 = vld [vmem:[#allocation3 + $0x348] sm:$0xff]
    %v2851 = vld [vmem:[#allocation3 + $0x350] sm:$0xff]
    %v2852 = vld [vmem:[#allocation3 + $0x358] sm:$0xff]
    %v2853 = vld [vmem:[#allocation3 + $0x360] sm:$0xff]
    %v2854 = vld [vmem:[#allocation3 + $0x368] sm:$0xff]
    %v2855 = vld [vmem:[#allocation3 + $0x370] sm:$0xff]
    %v2856 = vld [vmem:[#allocation3 + $0x378] sm:$0xff]
    %v2857 = vld [vmem:[#allocation3 + $0x380] sm:$0xff]
    %v2858 = vld [vmem:[#allocation3 + $0x388] sm:$0xff]
    %v2859 = vld [vmem:[#allocation3 + $0x390] sm:$0xff]
    %v2860 = vld [vmem:[#allocation3 + $0x398] sm:$0xff]
    %v2861 = vld [vmem:[#allocation3 + $0x3a0] sm:$0xff]
    %v2862 = vld [vmem:[#allocation3 + $0x3a8] sm:$0xff]
    %v2863 = vld [vmem:[#allocation3 + $0x3b0] sm:$0xff]
    %v2864 = vld [vmem:[#allocation3 + $0x3b8] sm:$0xff]
    %v2865 = vld [vmem:[#allocation3 + $0x3c0] sm:$0xff]
    %v2866 = vld [vmem:[#allocation3 + $0x3c8] sm:$0xff]
    %v2867 = vld [vmem:[#allocation3 + $0x3d0] sm:$0xff]
    %v2868 = vld [vmem:[#allocation3 + $0x3d8] sm:$0xff]
    %v2869 = vld [vmem:[#allocation3 + $0x3e0] sm:$0xff]
    %v2870 = vld [vmem:[#allocation3 + $0x3e8] sm:$0xff]
    %v2871 = vld [vmem:[#allocation3 + $0x3f0] sm:$0xff]
    %v2872 = vld [vmem:[#allocation3 + $0x3f8] sm:$0xff]
    %v2873 = vld [vmem:[%s8] sm:$0x1]
    %v2875 = vlaneseq
    %v2876 = vshrl.u32 %v2875, 7
    %v2877 = vsub.s32 0, %v2876
    %v2878 = vrot.slane %v2873, %v2877
    %2880 = vmatprep.subr.mxu0 0.0
    %2881 = vmatpush1.msra.mxu0 %v2745
    %2882 = vmatprep.subr.mxu0 0.0
    %2883 = vmatpush1.msra.mxu0 %v2746
    %2884 = vmatprep.subr.mxu0 0.0
    %2885 = vmatpush1.msra.mxu0 %v2747
    %2886 = vmatprep.subr.mxu0 0.0
    %2887 = vmatpush1.msra.mxu0 %v2748
    %2888 = vmatprep.subr.mxu0 0.0
    %2889 = vmatpush1.msra.mxu0 %v2749
    %2890 = vmatprep.subr.mxu0 0.0
    %2891 = vmatpush1.msra.mxu0 %v2750
    %2892 = vmatprep.subr.mxu0 0.0
    %2893 = vmatpush1.msra.mxu0 %v2751
    %2894 = vmatprep.subr.mxu0 0.0
    %2895 = vmatpush1.msra.mxu0 %v2752
    %2896 = vmatprep.subr.mxu0 0.0
    %2897 = vmatpush1.msra.mxu0 %v2753
    %2898 = vmatprep.subr.mxu0 0.0
    %2899 = vmatpush1.msra.mxu0 %v2754
    %2900 = vmatprep.subr.mxu0 0.0
    %2901 = vmatpush1.msra.mxu0 %v2755
    %2902 = vmatprep.subr.mxu0 0.0
    %2903 = vmatpush1.msra.mxu0 %v2756
    %2904 = vmatprep.subr.mxu0 0.0
    %2905 = vmatpush1.msra.mxu0 %v2757
    %2906 = vmatprep.subr.mxu0 0.0
    %2907 = vmatpush1.msra.mxu0 %v2758
    %2908 = vmatprep.subr.mxu0 0.0
    %2909 = vmatpush1.msra.mxu0 %v2759
    %2910 = vmatprep.subr.mxu0 0.0
    %2911 = vmatpush1.msra.mxu0 %v2760
    %2912 = vmatprep.subr.mxu0 0.0
    %2913 = vmatpush1.msra.mxu0 %v2761
    %2914 = vmatprep.subr.mxu0 0.0
    %2915 = vmatpush1.msra.mxu0 %v2762
    %2916 = vmatprep.subr.mxu0 0.0
    %2917 = vmatpush1.msra.mxu0 %v2763
    %2918 = vmatprep.subr.mxu0 0.0
    %2919 = vmatpush1.msra.mxu0 %v2764
    %2920 = vmatprep.subr.mxu0 0.0
    %2921 = vmatpush1.msra.mxu0 %v2765
    %2922 = vmatprep.subr.mxu0 0.0
    %2923 = vmatpush1.msra.mxu0 %v2766
    %2924 = vmatprep.subr.mxu0 0.0
    %2925 = vmatpush1.msra.mxu0 %v2767
    %2926 = vmatprep.subr.mxu0 0.0
    %2927 = vmatpush1.msra.mxu0 %v2768
    %2928 = vmatprep.subr.mxu0 0.0
    %2929 = vmatpush1.msra.mxu0 %v2769
    %2930 = vmatprep.subr.mxu0 0.0
    %2931 = vmatpush1.msra.mxu0 %v2770
    %2932 = vmatprep.subr.mxu0 0.0
    %2933 = vmatpush1.msra.mxu0 %v2771
    %2934 = vmatprep.subr.mxu0 0.0
    %2935 = vmatpush1.msra.mxu0 %v2772
    %2936 = vmatprep.subr.mxu0 0.0
    %2937 = vmatpush1.msra.mxu0 %v2773
    %2938 = vmatprep.subr.mxu0 0.0
    %2939 = vmatpush1.msra.mxu0 %v2774
    %2940 = vmatprep.subr.mxu0 0.0
    %2941 = vmatpush1.msra.mxu0 %v2775
    %2942 = vmatprep.subr.mxu0 0.0
    %2943 = vmatpush1.msra.mxu0 %v2776
    %2944 = vmatprep.mubr.f32.mxu0 %v2506
    %2945 = vmatmul.mubr.f32.gmra.mrb[0].mxu0 %v2504
    %v2946 = vpop.f32.mrb[0].mxu0
    %v2947 = vadd.f32 %v2878, %v2946
    %v2948 = vpop.f32.mrb[0].mxu0
    %2949 = vmatprep.mubr.f32.mxu0 %v2512
    %2950 = vmatmul.mubr.f32.gmra.mrb[0].mxu0 %v2510
    %v2951 = vpop.f32.mrb[0].mxu0
    %v2952 = vadd.f32 %v2878, %v2951
    %v2953 = vpop.f32.mrb[0].mxu0
    %2954 = vdwg.mxu0
    %2955 = vmatprep.subr.mxu0 0.0
    %2956 = vmatpush1.msra.mxu0 %v2777
    %2957 = vmatprep.subr.mxu0 0.0
    %2958 = vmatpush1.msra.mxu0 %v2778
    %2959 = vmatprep.subr.mxu0 0.0
    %2960 = vmatpush1.msra.mxu0 %v2779
    %2961 = vmatprep.subr.mxu0 0.0
    %2962 = vmatpush1.msra.mxu0 %v2780
    %2963 = vmatprep.subr.mxu0 0.0
    %2964 = vmatpush1.msra.mxu0 %v2781
    %2965 = vmatprep.subr.mxu0 0.0
    %2966 = vmatpush1.msra.mxu0 %v2782
    %2967 = vmatprep.subr.mxu0 0.0
    %2968 = vmatpush1.msra.mxu0 %v2783
    %2969 = vmatprep.subr.mxu0 0.0
    %2970 = vmatpush1.msra.mxu0 %v2784
    %2971 = vmatprep.subr.mxu0 0.0
    %2972 = vmatpush1.msra.mxu0 %v2785
    %2973 = vmatprep.subr.mxu0 0.0
    %2974 = vmatpush1.msra.mxu0 %v2786
    %2975 = vmatprep.subr.mxu0 0.0
    %2976 = vmatpush1.msra.mxu0 %v2787
    %2977 = vmatprep.subr.mxu0 0.0
    %2978 = vmatpush1.msra.mxu0 %v2788
    %2979 = vmatprep.subr.mxu0 0.0
    %2980 = vmatpush1.msra.mxu0 %v2789
    %2981 = vmatprep.subr.mxu0 0.0
    %2982 = vmatpush1.msra.mxu0 %v2790
    %2983 = vmatprep.subr.mxu0 0.0
    %2984 = vmatpush1.msra.mxu0 %v2791
    %2985 = vmatprep.subr.mxu0 0.0
    %2986 = vmatpush1.msra.mxu0 %v2792
    %2987 = vmatprep.subr.mxu0 0.0
    %2988 = vmatpush1.msra.mxu0 %v2793
    %2989 = vmatprep.subr.mxu0 0.0
    %2990 = vmatpush1.msra.mxu0 %v2794
    %2991 = vmatprep.subr.mxu0 0.0
    %2992 = vmatpush1.msra.mxu0 %v2795
    %2993 = vmatprep.subr.mxu0 0.0
    %2994 = vmatpush1.msra.mxu0 %v2796
    %2995 = vmatprep.subr.mxu0 0.0
    %2996 = vmatpush1.msra.mxu0 %v2797
    %2997 = vmatprep.subr.mxu0 0.0
    %2998 = vmatpush1.msra.mxu0 %v2798
    %2999 = vmatprep.subr.mxu0 0.0
    %3000 = vmatpush1.msra.mxu0 %v2799
    %3001 = vmatprep.subr.mxu0 0.0
    %3002 = vmatpush1.msra.mxu0 %v2800
    %3003 = vmatprep.subr.mxu0 0.0
    %3004 = vmatpush1.msra.mxu0 %v2801
    %3005 = vmatprep.subr.mxu0 0.0
    %3006 = vmatpush1.msra.mxu0 %v2802
    %3007 = vmatprep.subr.mxu0 0.0
    %3008 = vmatpush1.msra.mxu0 %v2803
    %3009 = vmatprep.subr.mxu0 0.0
    %3010 = vmatpush1.msra.mxu0 %v2804
    %3011 = vmatprep.subr.mxu0 0.0
    %3012 = vmatpush1.msra.mxu0 %v2805
    %3013 = vmatprep.subr.mxu0 0.0
    %3014 = vmatpush1.msra.mxu0 %v2806
    %3015 = vmatprep.subr.mxu0 0.0
    %3016 = vmatpush1.msra.mxu0 %v2807
    %3017 = vmatprep.subr.mxu0 0.0
    %3018 = vmatpush1.msra.mxu0 %v2808
    %3019 = vmatprep.mubr.f32.mxu0 %v2583
    %3020 = vmatmul.mubr.f32.gmra.mrb[0].mxu0 %v2581
    %v3021 = vpop.f32.mrb[0].mxu0
    %v3022 = vadd.f32 %v2947, %v3021
    %v3023 = vpop.f32.mrb[0].mxu0
    %3024 = vmatprep.mubr.f32.mxu0 %v2589
    %3025 = vmatmul.mubr.f32.gmra.mrb[0].mxu0 %v2587
    %v3026 = vpop.f32.mrb[0].mxu0
    %v3027 = vadd.f32 %v2952, %v3026
    %v3028 = vpop.f32.mrb[0].mxu0
    %3029 = vdwg.mxu0
    %3030 = vmatprep.subr.mxu0 0.0
    %3031 = vmatpush1.msra.mxu0 %v2809
    %3032 = vmatprep.subr.mxu0 0.0
    %3033 = vmatpush1.msra.mxu0 %v2810
    %3034 = vmatprep.subr.mxu0 0.0
    %3035 = vmatpush1.msra.mxu0 %v2811
    %3036 = vmatprep.subr.mxu0 0.0
    %3037 = vmatpush1.msra.mxu0 %v2812
    %3038 = vmatprep.subr.mxu0 0.0
    %3039 = vmatpush1.msra.mxu0 %v2813
    %3040 = vmatprep.subr.mxu0 0.0
    %3041 = vmatpush1.msra.mxu0 %v2814
    %3042 = vmatprep.subr.mxu0 0.0
    %3043 = vmatpush1.msra.mxu0 %v2815
    %3044 = vmatprep.subr.mxu0 0.0
    %3045 = vmatpush1.msra.mxu0 %v2816
    %3046 = vmatprep.subr.mxu0 0.0
    %3047 = vmatpush1.msra.mxu0 %v2817
    %3048 = vmatprep.subr.mxu0 0.0
    %3049 = vmatpush1.msra.mxu0 %v2818
    %3050 = vmatprep.subr.mxu0 0.0
    %3051 = vmatpush1.msra.mxu0 %v2819
    %3052 = vmatprep.subr.mxu0 0.0
    %3053 = vmatpush1.msra.mxu0 %v2820
    %3054 = vmatprep.subr.mxu0 0.0
    %3055 = vmatpush1.msra.mxu0 %v2821
    %3056 = vmatprep.subr.mxu0 0.0
    %3057 = vmatpush1.msra.mxu0 %v2822
    %3058 = vmatprep.subr.mxu0 0.0
    %3059 = vmatpush1.msra.mxu0 %v2823
    %3060 = vmatprep.subr.mxu0 0.0
    %3061 = vmatpush1.msra.mxu0 %v2824
    %3062 = vmatprep.subr.mxu0 0.0
    %3063 = vmatpush1.msra.mxu0 %v2825
    %3064 = vmatprep.subr.mxu0 0.0
    %3065 = vmatpush1.msra.mxu0 %v2826
    %3066 = vmatprep.subr.mxu0 0.0
    %3067 = vmatpush1.msra.mxu0 %v2827
    %3068 = vmatprep.subr.mxu0 0.0
    %3069 = vmatpush1.msra.mxu0 %v2828
    %3070 = vmatprep.subr.mxu0 0.0
    %3071 = vmatpush1.msra.mxu0 %v2829
    %3072 = vmatprep.subr.mxu0 0.0
    %3073 = vmatpush1.msra.mxu0 %v2830
    %3074 = vmatprep.subr.mxu0 0.0
    %3075 = vmatpush1.msra.mxu0 %v2831
    %3076 = vmatprep.subr.mxu0 0.0
    %3077 = vmatpush1.msra.mxu0 %v2832
    %3078 = vmatprep.subr.mxu0 0.0
    %3079 = vmatpush1.msra.mxu0 %v2833
    %3080 = vmatprep.subr.mxu0 0.0
    %3081 = vmatpush1.msra.mxu0 %v2834
    %3082 = vmatprep.subr.mxu0 0.0
    %3083 = vmatpush1.msra.mxu0 %v2835
    %3084 = vmatprep.subr.mxu0 0.0
    %3085 = vmatpush1.msra.mxu0 %v2836
    %3086 = vmatprep.subr.mxu0 0.0
    %3087 = vmatpush1.msra.mxu0 %v2837
    %3088 = vmatprep.subr.mxu0 0.0
    %3089 = vmatpush1.msra.mxu0 %v2838
    %3090 = vmatprep.subr.mxu0 0.0
    %3091 = vmatpush1.msra.mxu0 %v2839
    %3092 = vmatprep.subr.mxu0 0.0
    %3093 = vmatpush1.msra.mxu0 %v2840
    %3094 = vmatprep.mubr.f32.mxu0 %v2660
    %3095 = vmatmul.mubr.f32.gmra.mrb[0].mxu0 %v2658
    %v3096 = vpop.f32.mrb[0].mxu0
    %v3097 = vadd.f32 %v3022, %v3096
    %v3098 = vpop.f32.mrb[0].mxu0
    %3099 = vmatprep.mubr.f32.mxu0 %v2666
    %3100 = vmatmul.mubr.f32.gmra.mrb[0].mxu0 %v2664
    %v3101 = vpop.f32.mrb[0].mxu0
    %v3102 = vadd.f32 %v3027, %v3101
    %v3103 = vpop.f32.mrb[0].mxu0
    %3104 = vdwg.mxu0
    %3105 = vmatprep.subr.mxu0 0.0
    %3106 = vmatpush1.msra.mxu0 %v2841
    %3107 = vmatprep.subr.mxu0 0.0
    %3108 = vmatpush1.msra.mxu0 %v2842
    %3109 = vmatprep.subr.mxu0 0.0
    %3110 = vmatpush1.msra.mxu0 %v2843
    %3111 = vmatprep.subr.mxu0 0.0
    %3112 = vmatpush1.msra.mxu0 %v2844
    %3113 = vmatprep.subr.mxu0 0.0
    %3114 = vmatpush1.msra.mxu0 %v2845
    %3115 = vmatprep.subr.mxu0 0.0
    %3116 = vmatpush1.msra.mxu0 %v2846
    %3117 = vmatprep.subr.mxu0 0.0
    %3118 = vmatpush1.msra.mxu0 %v2847
    %3119 = vmatprep.subr.mxu0 0.0
    %3120 = vmatpush1.msra.mxu0 %v2848
    %3121 = vmatprep.subr.mxu0 0.0
    %3122 = vmatpush1.msra.mxu0 %v2849
    %3123 = vmatprep.subr.mxu0 0.0
    %3124 = vmatpush1.msra.mxu0 %v2850
    %3125 = vmatprep.subr.mxu0 0.0
    %3126 = vmatpush1.msra.mxu0 %v2851
    %3127 = vmatprep.subr.mxu0 0.0
    %3128 = vmatpush1.msra.mxu0 %v2852
    %3129 = vmatprep.subr.mxu0 0.0
    %3130 = vmatpush1.msra.mxu0 %v2853
    %3131 = vmatprep.subr.mxu0 0.0
    %3132 = vmatpush1.msra.mxu0 %v2854
    %3133 = vmatprep.subr.mxu0 0.0
    %3134 = vmatpush1.msra.mxu0 %v2855
    %3135 = vmatprep.subr.mxu0 0.0
    %3136 = vmatpush1.msra.mxu0 %v2856
    %3137 = vmatprep.subr.mxu0 0.0
    %3138 = vmatpush1.msra.mxu0 %v2857
    %3139 = vmatprep.subr.mxu0 0.0
    %3140 = vmatpush1.msra.mxu0 %v2858
    %3141 = vmatprep.subr.mxu0 0.0
    %3142 = vmatpush1.msra.mxu0 %v2859
    %3143 = vmatprep.subr.mxu0 0.0
    %3144 = vmatpush1.msra.mxu0 %v2860
    %3145 = vmatprep.subr.mxu0 0.0
    %3146 = vmatpush1.msra.mxu0 %v2861
    %3147 = vmatprep.subr.mxu0 0.0
    %3148 = vmatpush1.msra.mxu0 %v2862
    %3149 = vmatprep.subr.mxu0 0.0
    %3150 = vmatpush1.msra.mxu0 %v2863
    %3151 = vmatprep.subr.mxu0 0.0
    %3152 = vmatpush1.msra.mxu0 %v2864
    %3153 = vmatprep.subr.mxu0 0.0
    %3154 = vmatpush1.msra.mxu0 %v2865
    %3155 = vmatprep.subr.mxu0 0.0
    %3156 = vmatpush1.msra.mxu0 %v2866
    %3157 = vmatprep.subr.mxu0 0.0
    %3158 = vmatpush1.msra.mxu0 %v2867
    %3159 = vmatprep.subr.mxu0 0.0
    %3160 = vmatpush1.msra.mxu0 %v2868
    %3161 = vmatprep.subr.mxu0 0.0
    %3162 = vmatpush1.msra.mxu0 %v2869
    %3163 = vmatprep.subr.mxu0 0.0
    %3164 = vmatpush1.msra.mxu0 %v2870
    %3165 = vmatprep.subr.mxu0 0.0
    %3166 = vmatpush1.msra.mxu0 %v2871
    %3167 = vmatprep.subr.mxu0 0.0
    %3168 = vmatpush1.msra.mxu0 %v2872
    %3169 = vmatprep.mubr.f32.mxu0 %v2737
    %3170 = vmatmul.mubr.f32.gmra.mrb[0].mxu0 %v2735
    %v3171 = vpop.f32.mrb[0].mxu0
    %v3172 = vadd.f32 %v3097, %v3171
    %v3173 = vpop.f32.mrb[0].mxu0
    %3174 = vmatprep.mubr.f32.mxu0 %v2743
    %3175 = vmatmul.mubr.f32.gmra.mrb[0].mxu0 %v2741
    %v3176 = vpop.f32.mrb[0].mxu0
    %v3177 = vadd.f32 %v3102, %v3176
    %v3178 = vpop.f32.mrb[0].mxu0
    %3179 = vdwg.mxu0
    %3180 = vst [vmem:[%s11] sm:$0xff] %v3172
    %3181 = vst [vmem:[%s11 + $0x8] sm:$0xff] %v3177
    // Predicated region
    $region62: #{bi_lstm_c_forward.1} parent=1 // pred_check
      _
    $region63: #{bi_lstm_c_forward.1} parent=1 // pred_check_branch
      %3183 = sbr.rel (0) target = $region65
    $region64: #{bi_lstm_c_forward.1} parent=1 // pred_region
      _
    $region65: #{bi_lstm_c_forward.1} parent=1 // pred_fallthru
      _
    // Predicated region
    $region66: #{bi_lstm_c_forward.1} parent=1 // pred_check
      _
    $region67: #{bi_lstm_c_forward.1} parent=1 // pred_check_branch
      %3185 = sbr.rel (0) target = $region69
    $region68: #{bi_lstm_c_forward.1} parent=1 // pred_region
      _
    $region69: #{bi_lstm_c_forward.1} parent=1 // pred_fallthru
      _
    %3186 = vsyncpa [#allocation6], 1
    %3187 = vsyncpa [#allocation8], 1
    %3188 = vsyncpa [#allocation11], 1
  %3189 = vsyncmov [#allocation4]
  %s3190 = vpop.sfrf %3189
  %p3191 = scmp.eq.s32.totalorder %s3190, 0
  %p3192 = pneg %p3191
  %3194 = shalt.err (%p3192)
  %s3195 = scalar_lea.sflag [#allocation4], 1
  %3196 = vsyncmov %s3195
  %s3197 = vpop.sfrf %3196
  %p3198 = scmp.eq.s32.totalorder %s3197, 0
  %p3199 = pneg %p3198
  %3201 = shalt.err (%p3199)

</llo_original>
